<compile_context>
chip_gen: v6e
topology: v6e:2x2x1
jax: 0.10.0
libtpu: 0.0.40
codegen_flags: <defaults>
</compile_context>

<pallas_src>
import math
import functools

import jax
import jax.numpy as jnp
from jax import lax
from jax.experimental import pallas as pl
from jax.experimental.pallas import tpu as pltpu


def _pick_vmem_limit_bytes():
    """Generation-aware VMEM limit: ~3/4 of physical capacity, capped at 100 MiB."""
    cap = 128 * 1024 * 1024
    try:
        cap = int(getattr(pltpu.get_tpu_info(), "vmem_capacity_bytes", cap))
    except Exception:
        pass
    return min((3 * cap) // 4, 100 * 1024 * 1024)


def _choose_tiles(S):
    """Returns (TQ, S_pad). Keeps tiles (8,128)-friendly; pads (and masks) instead of TQ=S."""
    if S <= 128:
        tq = ((S + 7) // 8) * 8          # sublane-align short sequences, single q tile
        return tq, tq
    tq = 256 if S % 256 == 0 else 128    # 256-row q tiles fill the v6e/v7x 256-wide MXU
    s_pad = ((S + tq - 1) // tq) * tq
    return tq, s_pad


def _mha_kernel(x_ref, wq_ref, wk_ref, wv_ref, bq_ref, bk_ref, bv_ref,
                wo_ref, bo_ref, o_ref, kT_scr, v_scr, *, num_heads, s_valid):
    # Block shapes:
    #   x_ref    : (1, S_pad, E)   bf16  full (padded) sequence for this batch row
    #   w{q,k,v} : (H, E, D)       bf16  head-major; Wq/bq already carry 1/sqrt(D)
    #   b{q,k,v} : (H, 1, D)       f32
    #   wo_ref   : (H, D, E_out)   bf16
    #   bo_ref   : (1, E_out)      f32
    #   o_ref    : (1, TQ, E_out)
    #   kT_scr   : (H, D, S_pad)   bf16  VMEM scratch -- cached K^T per head (per batch row)
    #   v_scr    : (H, S_pad, D)   bf16  VMEM scratch -- cached V  per head (per batch row)
    qi = pl.program_id(1)
    tq = o_ref.shape[1]
    e_out = o_ref.shape[2]
    s_pad = v_scr.shape[1]

    # ---- K/V projections: once per batch row, cached head-major in VMEM scratch ----
    @pl.when(qi == 0)
    def _():
        xkv = x_ref[0]                                                     # (S_pad, E) bf16
        for h in range(num_heads):
            kh = jnp.dot(xkv, wk_ref[h],
                         preferred_element_type=jnp.float32) + bk_ref[h]  # (S_pad, D) f32
            vh = jnp.dot(xkv, wv_ref[h],
                         preferred_element_type=jnp.float32) + bv_ref[h]  # (S_pad, D) f32
            kT_scr[h] = kh.T.astype(jnp.bfloat16)                         # (D, S_pad)
            v_scr[h] = vh.astype(jnp.bfloat16)                            # (S_pad, D)

    # ---- Per query tile ----
    q_start = pl.multiple_of(qi * tq, tq)
    xq = x_ref[0, pl.ds(q_start, tq), :]                                   # (TQ, E) bf16

    need_mask = s_valid < s_pad
    if need_mask:
        key_idx = lax.broadcasted_iota(jnp.int32, (tq, s_pad), 1)
        key_valid = key_idx < s_valid

    # Fold each head straight into the output projection:
    #   concat_h(o_h) @ Wo  ==  sum_h  o_h @ Wo[hD:(h+1)D, :]
    acc = jnp.zeros((tq, e_out), jnp.float32)
    for h in range(num_heads):
        qh = (jnp.dot(xq, wq_ref[h], preferred_element_type=jnp.float32)
              + bq_ref[h]).astype(jnp.bfloat16)                            # (TQ, D)
        s = jnp.dot(qh, kT_scr[h], preferred_element_type=jnp.float32)     # (TQ, S_pad)
        if need_mask:
            s = jnp.where(key_valid, s, jnp.float32(-1e30))
        s = s - jnp.max(s, axis=-1, keepdims=True)
        p = jnp.exp(s)                                                     # unnormalized
        inv = pl.reciprocal(jnp.sum(p, axis=-1, keepdims=True), approx=True)
        oh = jnp.dot(p.astype(jnp.bfloat16), v_scr[h],
                     preferred_element_type=jnp.float32)                   # (TQ, D)
        oh = oh * inv                                                      # deferred softmax norm
        acc = acc + jnp.dot(oh.astype(jnp.bfloat16), wo_ref[h],
                            preferred_element_type=jnp.float32)            # (TQ, E_out)

    o_ref[0] = (acc + bo_ref[...]).astype(o_ref.dtype)


def custom_multihead_attention(x, params, *, num_heads):
    """x: (B, S, E) float32. params: dict of pre-transposed f32 weights/biases."""
    B, S, E = x.shape
    D = E // num_heads
    assert D * num_heads == E
    H = num_heads

    TQ, S_pad = _choose_tiles(S)
    num_q = S_pad // TQ
    E_out = ((E + 127) // 128) * 128          # lane-dense output stores

    # --- operand preparation (done once, outside the kernel) ---
    scale = 1.0 / math.sqrt(D)
    bf16 = jnp.bfloat16
    # Head-major weight stacks: per-head operands are leading-axis indexed in the kernel.
    wq_hm = (params["wq_t"] * scale).reshape(E, H, D).transpose(1, 0, 2).astype(bf16)  # (H,E,D)
    wk_hm = params["wk_t"].reshape(E, H, D).transpose(1, 0, 2).astype(bf16)            # (H,E,D)
    wv_hm = params["wv_t"].reshape(E, H, D).transpose(1, 0, 2).astype(bf16)            # (H,E,D)
    bq_hm = (params["bq"] * scale).reshape(H, 1, D).astype(jnp.float32)                # (H,1,D)
    bk_hm = params["bk"].reshape(H, 1, D).astype(jnp.float32)
    bv_hm = params["bv"].reshape(H, 1, D).astype(jnp.float32)
    wo_hm = params["wo_t"].reshape(H, D, E)                                            # (H,D,E)
    bo = params["bo"]
    if E_out != E:
        wo_hm = jnp.pad(wo_hm, ((0, 0), (0, 0), (0, E_out - E)))
        bo = jnp.pad(bo, ((0, 0), (0, E_out - E)))
    wo_hm = wo_hm.astype(bf16)
    bo = bo.astype(jnp.float32)

    # bf16 x (halves HBM->VMEM bytes of the dominant input), padded to S_pad.
    xb = x.astype(bf16)
    if S_pad != S:
        xb = jnp.pad(xb, ((0, 0), (0, S_pad - S), (0, 0)))

    kernel = functools.partial(_mha_kernel, num_heads=H, s_valid=S)

    flops = int(2 * B * S_pad * E * (3 * E + E_out)            # q/k/v + output projections
                + 4 * B * H * S_pad * S_pad * D)               # QK^T and P@V
    transcendentals = int(B * H * S_pad * S_pad)               # exp
    bytes_accessed = int(B * S_pad * E * 2                     # x (bf16, one pass per row)
                         + B * S_pad * E_out * 4               # output (f32)
                         + (3 * H * E * D + H * D * E_out) * 2  # bf16 weights
                         + (3 * H * D + E_out) * 4)            # f32 biases

    const3 = lambda b, qi: (0, 0, 0)
    const2 = lambda b, qi: (0, 0)

    def _build_and_run(single_buffer_weights):
        def wspec(shape, imap):
            if single_buffer_weights:
                # Grid-invariant operands: single-buffer to free VMEM (matters on v7x).
                return pl.BlockSpec(shape, imap, pipeline_mode=pl.Buffered(1))
            return pl.BlockSpec(shape, imap)

        return pl.pallas_call(
            kernel,
            out_shape=jax.ShapeDtypeStruct((B, S_pad, E_out), jnp.float32),
            grid_spec=pltpu.PrefetchScalarGridSpec(
                num_scalar_prefetch=0,
                grid=(B, num_q),
                in_specs=[
                    pl.BlockSpec((1, S_pad, E), lambda b, qi: (b, 0, 0)),  # x (bf16)
                    wspec((H, E, D), const3),                              # Wq (scaled)
                    wspec((H, E, D), const3),                              # Wk
                    wspec((H, E, D), const3),                              # Wv
                    wspec((H, 1, D), const3),                              # bq (scaled)
                    wspec((H, 1, D), const3),                              # bk
                    wspec((H, 1, D), const3),                              # bv
                    wspec((H, D, E_out), const3),                          # Wo (padded)
                    wspec((1, E_out), const2),                             # bo (padded)
                ],
                out_specs=pl.BlockSpec((1, TQ, E_out), lambda b, qi: (b, qi, 0)),
                scratch_shapes=[
                    pltpu.VMEM((H, D, S_pad), bf16),   # cached K^T
                    pltpu.VMEM((H, S_pad, D), bf16),   # cached V
                ],
            ),
            compiler_params=pltpu.CompilerParams(
                # qi axis carries the cached K/V scratch -> "arbitrary"; batch is parallel.
                dimension_semantics=("parallel", "arbitrary"),
                vmem_limit_bytes=_pick_vmem_limit_bytes(),
            ),
            cost_estimate=pl.CostEstimate(
                flops=flops,
                transcendentals=transcendentals,
                bytes_accessed=bytes_accessed,
            ),
        )(xb, wq_hm, wk_hm, wv_hm, bq_hm, bk_hm, bv_hm, wo_hm, bo)

    try:
        out = _build_and_run(True)
    except Exception:
        # TODO(synk): pipeline_mode=pl.Buffered(1) not supported by this jax version;
        # fall back to default double-buffered weights (correctness identical).
        out = _build_and_run(False)

    if S_pad != S or E_out != E:
        out = out[:, :S, :E]
    return out


def make_params(key, embed_dim):
    """Deterministic synthetic parameters matching nn.MultiheadAttention shapes:
       in_proj_weight (3E, E), in_proj_bias (3E,), out_proj (E, E) + (E,)."""
    k1, k2, k3 = jax.random.split(key, 3)
    in_proj_weight = 0.1 * jax.random.normal(k1, (3 * embed_dim, embed_dim), jnp.float32)
    in_proj_bias = 0.1 * jax.random.normal(k2, (3 * embed_dim,), jnp.float32)
    out_proj_weight = 0.1 * jax.random.normal(k3, (embed_dim, embed_dim), jnp.float32)
    out_proj_bias = jnp.zeros((embed_dim,), jnp.float32)

    E = embed_dim
    return {
        "wq_t": in_proj_weight[:E].T,          # (E, E)
        "wk_t": in_proj_weight[E:2 * E].T,     # (E, E)
        "wv_t": in_proj_weight[2 * E:].T,      # (E, E)
        "bq": in_proj_bias[:E].reshape(1, E),
        "bk": in_proj_bias[E:2 * E].reshape(1, E),
        "bv": in_proj_bias[2 * E:].reshape(1, E),
        "wo_t": out_proj_weight.T,             # (E, E)
        "bo": out_proj_bias.reshape(1, E),
    }


def reference_mha(x, params, *, num_heads):
    """Pure-JAX f32 reference reproducing nn.MultiheadAttention forward."""
    B, S, E = x.shape
    D = E // num_heads
    q = x @ params["wq_t"] + params["bq"]
    k = x @ params["wk_t"] + params["bk"]
    v = x @ params["wv_t"] + params["bv"]

    def split(t):  # (B, S, E) -> (B, H, S, D)
        return t.reshape(B, S, num_heads, D).transpose(0, 2, 1, 3)

    qh, kh, vh = split(q), split(k), split(v)
    s = jnp.einsum("bhqd,bhkd->bhqk", qh, kh) / math.sqrt(D)
    p = jax.nn.softmax(s, axis=-1)
    o = jnp.einsum("bhqk,bhkd->bhqd", p, vh)
    o = o.transpose(0, 2, 1, 3).reshape(B, S, E)
    return o @ params["wo_t"] + params["bo"]


if __name__ == "__main__":
    B, S, E, H = 2, 8, 32, 4   # batch, seq, embed_dim, num_heads

    key = jax.random.PRNGKey(0)
    kx, kp = jax.random.split(key)
    x = jax.random.normal(kx, (B, S, E), jnp.float32)
    params = make_params(kp, E)

    out = custom_multihead_attention(x, params, num_heads=H)
    out = jax.block_until_ready(out)

    ref = reference_mha(x, params, num_heads=H)
    assert out.shape == (B, S, E)
    # bf16 matmul inputs (f32 accumulation) + approx reciprocal -> relaxed tolerance.
    err = float(jnp.max(jnp.abs(out - ref)))
    assert err < 2e-2, f"max abs err {err}"

    print("KERNEL_OK")
</pallas_src>

<mosaic_0001>
module attributes {stable_mosaic.version = 11 : i64} {
  func.func @_mha_kernel(%arg0: i32, %arg1: i32, %arg2: memref<1x8x32xbf16, #tpu.memory_space<vmem>>, %arg3: memref<4x32x8xbf16, #tpu.memory_space<vmem>>, %arg4: memref<4x32x8xbf16, #tpu.memory_space<vmem>>, %arg5: memref<4x32x8xbf16, #tpu.memory_space<vmem>>, %arg6: memref<4x1x8xf32, #tpu.memory_space<vmem>>, %arg7: memref<4x1x8xf32, #tpu.memory_space<vmem>>, %arg8: memref<4x1x8xf32, #tpu.memory_space<vmem>>, %arg9: memref<4x8x128xbf16, #tpu.memory_space<vmem>>, %arg10: memref<1x128xf32, #tpu.memory_space<vmem>>, %arg11: memref<1x8x128xf32, #tpu.memory_space<vmem>>, %arg12: memref<4x8x8xbf16, #tpu.memory_space<vmem>>, %arg13: memref<4x8x8xbf16, #tpu.memory_space<vmem>>) attributes {dimension_semantics = [#tpu.dimension_semantics<parallel>, #tpu.dimension_semantics<arbitrary>], iteration_bounds = array<i64: 2, 1>, scalar_prefetch = 0 : i64, scratch_operands = 2 : i64, tpu.core_type = #tpu.core_type<tc>, window_params = [{transform_indices = @transform_0, window_bounds = array<i64: 1, 8, 32>}, {pipeline_mode = #tpu.pipeline_mode<synchronous>, transform_indices = @transform_1, window_bounds = array<i64: 4, 32, 8>}, {pipeline_mode = #tpu.pipeline_mode<synchronous>, transform_indices = @transform_2, window_bounds = array<i64: 4, 32, 8>}, {pipeline_mode = #tpu.pipeline_mode<synchronous>, transform_indices = @transform_3, window_bounds = array<i64: 4, 32, 8>}, {pipeline_mode = #tpu.pipeline_mode<synchronous>, transform_indices = @transform_4, window_bounds = array<i64: 4, 1, 8>}, {pipeline_mode = #tpu.pipeline_mode<synchronous>, transform_indices = @transform_5, window_bounds = array<i64: 4, 1, 8>}, {pipeline_mode = #tpu.pipeline_mode<synchronous>, transform_indices = @transform_6, window_bounds = array<i64: 4, 1, 8>}, {pipeline_mode = #tpu.pipeline_mode<synchronous>, transform_indices = @transform_7, window_bounds = array<i64: 4, 8, 128>}, {pipeline_mode = #tpu.pipeline_mode<synchronous>, transform_indices = @transform_8, window_bounds = array<i64: 1, 128>}, {transform_indices = @transform_9, window_bounds = array<i64: 1, 8, 128>}]} {
    %c0_i32 = arith.constant 0 : i32
    %0 = arith.cmpi eq, %arg1, %c0_i32 : i32
    %1 = arith.extui %0 : i1 to i32
    %c0_i32_0 = arith.constant 0 : i32
    %2 = arith.cmpi ne, %1, %c0_i32_0 : i32
    scf.if %2 {
      %c0_88 = arith.constant 0 : index
      %c0_89 = arith.constant 0 : index
      %c0_90 = arith.constant 0 : index
      %135 = vector.load %arg2[%c0_88, %c0_89, %c0_90] : memref<1x8x32xbf16, #tpu.memory_space<vmem>>, vector<1x8x32xbf16>
      %136 = vector.shape_cast %135 : vector<1x8x32xbf16> to vector<8x32xbf16>
      %c0_91 = arith.constant 0 : index
      %c0_92 = arith.constant 0 : index
      %c0_93 = arith.constant 0 : index
      %137 = vector.load %arg4[%c0_91, %c0_92, %c0_93] : memref<4x32x8xbf16, #tpu.memory_space<vmem>>, vector<1x32x8xbf16>
      %138 = vector.shape_cast %137 : vector<1x32x8xbf16> to vector<32x8xbf16>
      %cst_94 = arith.constant dense<0.000000e+00> : vector<8x8xf32>
      %139 = tpu.matmul %136, %138, %cst_94 {dimension_numbers = #tpu.dot_dimension_numbers<[1], [0], [0], [1], [0, 0, 1, 1], [], []>} : vector<8x32xbf16>, vector<32x8xbf16>, vector<8x8xf32> -> vector<8x8xf32>
      %c0_95 = arith.constant 0 : index
      %c0_96 = arith.constant 0 : index
      %c0_97 = arith.constant 0 : index
      %140 = vector.load %arg7[%c0_95, %c0_96, %c0_97] : memref<4x1x8xf32, #tpu.memory_space<vmem>>, vector<1x1x8xf32>
      %141 = vector.shape_cast %140 : vector<1x1x8xf32> to vector<1x8xf32>
      %142 = vector.broadcast %141 : vector<1x8xf32> to vector<8x8xf32>
      %143 = arith.addf %139, %142 : vector<8x8xf32>
      %c0_98 = arith.constant 0 : index
      %c0_99 = arith.constant 0 : index
      %c0_100 = arith.constant 0 : index
      %144 = vector.load %arg5[%c0_98, %c0_99, %c0_100] : memref<4x32x8xbf16, #tpu.memory_space<vmem>>, vector<1x32x8xbf16>
      %145 = vector.shape_cast %144 : vector<1x32x8xbf16> to vector<32x8xbf16>
      %cst_101 = arith.constant dense<0.000000e+00> : vector<8x8xf32>
      %146 = tpu.matmul %136, %145, %cst_101 {dimension_numbers = #tpu.dot_dimension_numbers<[1], [0], [0], [1], [0, 0, 1, 1], [], []>} : vector<8x32xbf16>, vector<32x8xbf16>, vector<8x8xf32> -> vector<8x8xf32>
      %c0_102 = arith.constant 0 : index
      %c0_103 = arith.constant 0 : index
      %c0_104 = arith.constant 0 : index
      %147 = vector.load %arg8[%c0_102, %c0_103, %c0_104] : memref<4x1x8xf32, #tpu.memory_space<vmem>>, vector<1x1x8xf32>
      %148 = vector.shape_cast %147 : vector<1x1x8xf32> to vector<1x8xf32>
      %149 = vector.broadcast %148 : vector<1x8xf32> to vector<8x8xf32>
      %150 = arith.addf %146, %149 : vector<8x8xf32>
      %151 = tpu.transpose %143, [1, 0] : vector<8x8xf32> -> vector<8x8xf32>
      %152 = arith.truncf %151 : vector<8x8xf32> to vector<8x8xbf16>
      %c0_105 = arith.constant 0 : index
      %c0_106 = arith.constant 0 : index
      %c0_107 = arith.constant 0 : index
      %153 = vector.load %arg12[%c0_105, %c0_106, %c0_107] : memref<4x8x8xbf16, #tpu.memory_space<vmem>>, vector<1x8x8xbf16>
      %154 = vector.shape_cast %153 : vector<1x8x8xbf16> to vector<8x8xbf16>
      %155 = vector.shape_cast %152 : vector<8x8xbf16> to vector<1x8x8xbf16>
      tpu.vector_store %arg12[%c0_105, %c0_106, %c0_107], %155 {strides = array<i32>} : memref<4x8x8xbf16, #tpu.memory_space<vmem>>, vector<1x8x8xbf16>,
      %156 = arith.truncf %150 : vector<8x8xf32> to vector<8x8xbf16>
      %c0_108 = arith.constant 0 : index
      %c0_109 = arith.constant 0 : index
      %c0_110 = arith.constant 0 : index
      %157 = vector.load %arg13[%c0_108, %c0_109, %c0_110] : memref<4x8x8xbf16, #tpu.memory_space<vmem>>, vector<1x8x8xbf16>
      %158 = vector.shape_cast %157 : vector<1x8x8xbf16> to vector<8x8xbf16>
      %159 = vector.shape_cast %156 : vector<8x8xbf16> to vector<1x8x8xbf16>
      tpu.vector_store %arg13[%c0_108, %c0_109, %c0_110], %159 {strides = array<i32>} : memref<4x8x8xbf16, #tpu.memory_space<vmem>>, vector<1x8x8xbf16>,
      %c1_111 = arith.constant 1 : index
      %c0_112 = arith.constant 0 : index
      %c0_113 = arith.constant 0 : index
      %160 = vector.load %arg4[%c1_111, %c0_112, %c0_113] : memref<4x32x8xbf16, #tpu.memory_space<vmem>>, vector<1x32x8xbf16>
      %161 = vector.shape_cast %160 : vector<1x32x8xbf16> to vector<32x8xbf16>
      %cst_114 = arith.constant dense<0.000000e+00> : vector<8x8xf32>
      %162 = tpu.matmul %136, %161, %cst_114 {dimension_numbers = #tpu.dot_dimension_numbers<[1], [0], [0], [1], [0, 0, 1, 1], [], []>} : vector<8x32xbf16>, vector<32x8xbf16>, vector<8x8xf32> -> vector<8x8xf32>
      %c1_115 = arith.constant 1 : index
      %c0_116 = arith.constant 0 : index
      %c0_117 = arith.constant 0 : index
      %163 = vector.load %arg7[%c1_115, %c0_116, %c0_117] : memref<4x1x8xf32, #tpu.memory_space<vmem>>, vector<1x1x8xf32>
      %164 = vector.shape_cast %163 : vector<1x1x8xf32> to vector<1x8xf32>
      %165 = vector.broadcast %164 : vector<1x8xf32> to vector<8x8xf32>
      %166 = arith.addf %162, %165 : vector<8x8xf32>
      %c1_118 = arith.constant 1 : index
      %c0_119 = arith.constant 0 : index
      %c0_120 = arith.constant 0 : index
      %167 = vector.load %arg5[%c1_118, %c0_119, %c0_120] : memref<4x32x8xbf16, #tpu.memory_space<vmem>>, vector<1x32x8xbf16>
      %168 = vector.shape_cast %167 : vector<1x32x8xbf16> to vector<32x8xbf16>
      %cst_121 = arith.constant dense<0.000000e+00> : vector<8x8xf32>
      %169 = tpu.matmul %136, %168, %cst_121 {dimension_numbers = #tpu.dot_dimension_numbers<[1], [0], [0], [1], [0, 0, 1, 1], [], []>} : vector<8x32xbf16>, vector<32x8xbf16>, vector<8x8xf32> -> vector<8x8xf32>
      %c1_122 = arith.constant 1 : index
      %c0_123 = arith.constant 0 : index
      %c0_124 = arith.constant 0 : index
      %170 = vector.load %arg8[%c1_122, %c0_123, %c0_124] : memref<4x1x8xf32, #tpu.memory_space<vmem>>, vector<1x1x8xf32>
      %171 = vector.shape_cast %170 : vector<1x1x8xf32> to vector<1x8xf32>
      %172 = vector.broadcast %171 : vector<1x8xf32> to vector<8x8xf32>
      %173 = arith.addf %169, %172 : vector<8x8xf32>
      %174 = tpu.transpose %166, [1, 0] : vector<8x8xf32> -> vector<8x8xf32>
      %175 = arith.truncf %174 : vector<8x8xf32> to vector<8x8xbf16>
      %c1_125 = arith.constant 1 : index
      %c0_126 = arith.constant 0 : index
      %c0_127 = arith.constant 0 : index
      %176 = vector.load %arg12[%c1_125, %c0_126, %c0_127] : memref<4x8x8xbf16, #tpu.memory_space<vmem>>, vector<1x8x8xbf16>
      %177 = vector.shape_cast %176 : vector<1x8x8xbf16> to vector<8x8xbf16>
      %178 = vector.shape_cast %175 : vector<8x8xbf16> to vector<1x8x8xbf16>
      tpu.vector_store %arg12[%c1_125, %c0_126, %c0_127], %178 {strides = array<i32>} : memref<4x8x8xbf16, #tpu.memory_space<vmem>>, vector<1x8x8xbf16>,
      %179 = arith.truncf %173 : vector<8x8xf32> to vector<8x8xbf16>
      %c1_128 = arith.constant 1 : index
      %c0_129 = arith.constant 0 : index
      %c0_130 = arith.constant 0 : index
      %180 = vector.load %arg13[%c1_128, %c0_129, %c0_130] : memref<4x8x8xbf16, #tpu.memory_space<vmem>>, vector<1x8x8xbf16>
      %181 = vector.shape_cast %180 : vector<1x8x8xbf16> to vector<8x8xbf16>
      %182 = vector.shape_cast %179 : vector<8x8xbf16> to vector<1x8x8xbf16>
      tpu.vector_store %arg13[%c1_128, %c0_129, %c0_130], %182 {strides = array<i32>} : memref<4x8x8xbf16, #tpu.memory_space<vmem>>, vector<1x8x8xbf16>,
      %c2_131 = arith.constant 2 : index
      %c0_132 = arith.constant 0 : index
      %c0_133 = arith.constant 0 : index
      %183 = vector.load %arg4[%c2_131, %c0_132, %c0_133] : memref<4x32x8xbf16, #tpu.memory_space<vmem>>, vector<1x32x8xbf16>
      %184 = vector.shape_cast %183 : vector<1x32x8xbf16> to vector<32x8xbf16>
      %cst_134 = arith.constant dense<0.000000e+00> : vector<8x8xf32>
      %185 = tpu.matmul %136, %184, %cst_134 {dimension_numbers = #tpu.dot_dimension_numbers<[1], [0], [0], [1], [0, 0, 1, 1], [], []>} : vector<8x32xbf16>, vector<32x8xbf16>, vector<8x8xf32> -> vector<8x8xf32>
      %c2_135 = arith.constant 2 : index
      %c0_136 = arith.constant 0 : index
      %c0_137 = arith.constant 0 : index
      %186 = vector.load %arg7[%c2_135, %c0_136, %c0_137] : memref<4x1x8xf32, #tpu.memory_space<vmem>>, vector<1x1x8xf32>
      %187 = vector.shape_cast %186 : vector<1x1x8xf32> to vector<1x8xf32>
      %188 = vector.broadcast %187 : vector<1x8xf32> to vector<8x8xf32>
      %189 = arith.addf %185, %188 : vector<8x8xf32>
      %c2_138 = arith.constant 2 : index
      %c0_139 = arith.constant 0 : index
      %c0_140 = arith.constant 0 : index
      %190 = vector.load %arg5[%c2_138, %c0_139, %c0_140] : memref<4x32x8xbf16, #tpu.memory_space<vmem>>, vector<1x32x8xbf16>
      %191 = vector.shape_cast %190 : vector<1x32x8xbf16> to vector<32x8xbf16>
      %cst_141 = arith.constant dense<0.000000e+00> : vector<8x8xf32>
      %192 = tpu.matmul %136, %191, %cst_141 {dimension_numbers = #tpu.dot_dimension_numbers<[1], [0], [0], [1], [0, 0, 1, 1], [], []>} : vector<8x32xbf16>, vector<32x8xbf16>, vector<8x8xf32> -> vector<8x8xf32>
      %c2_142 = arith.constant 2 : index
      %c0_143 = arith.constant 0 : index
      %c0_144 = arith.constant 0 : index
      %193 = vector.load %arg8[%c2_142, %c0_143, %c0_144] : memref<4x1x8xf32, #tpu.memory_space<vmem>>, vector<1x1x8xf32>
      %194 = vector.shape_cast %193 : vector<1x1x8xf32> to vector<1x8xf32>
      %195 = vector.broadcast %194 : vector<1x8xf32> to vector<8x8xf32>
      %196 = arith.addf %192, %195 : vector<8x8xf32>
      %197 = tpu.transpose %189, [1, 0] : vector<8x8xf32> -> vector<8x8xf32>
      %198 = arith.truncf %197 : vector<8x8xf32> to vector<8x8xbf16>
      %c2_145 = arith.constant 2 : index
      %c0_146 = arith.constant 0 : index
      %c0_147 = arith.constant 0 : index
      %199 = vector.load %arg12[%c2_145, %c0_146, %c0_147] : memref<4x8x8xbf16, #tpu.memory_space<vmem>>, vector<1x8x8xbf16>
      %200 = vector.shape_cast %199 : vector<1x8x8xbf16> to vector<8x8xbf16>
      %201 = vector.shape_cast %198 : vector<8x8xbf16> to vector<1x8x8xbf16>
      tpu.vector_store %arg12[%c2_145, %c0_146, %c0_147], %201 {strides = array<i32>} : memref<4x8x8xbf16, #tpu.memory_space<vmem>>, vector<1x8x8xbf16>,
      %202 = arith.truncf %196 : vector<8x8xf32> to vector<8x8xbf16>
      %c2_148 = arith.constant 2 : index
      %c0_149 = arith.constant 0 : index
      %c0_150 = arith.constant 0 : index
      %203 = vector.load %arg13[%c2_148, %c0_149, %c0_150] : memref<4x8x8xbf16, #tpu.memory_space<vmem>>, vector<1x8x8xbf16>
      %204 = vector.shape_cast %203 : vector<1x8x8xbf16> to vector<8x8xbf16>
      %205 = vector.shape_cast %202 : vector<8x8xbf16> to vector<1x8x8xbf16>
      tpu.vector_store %arg13[%c2_148, %c0_149, %c0_150], %205 {strides = array<i32>} : memref<4x8x8xbf16, #tpu.memory_space<vmem>>, vector<1x8x8xbf16>,
      %c3_151 = arith.constant 3 : index
      %c0_152 = arith.constant 0 : index
      %c0_153 = arith.constant 0 : index
      %206 = vector.load %arg4[%c3_151, %c0_152, %c0_153] : memref<4x32x8xbf16, #tpu.memory_space<vmem>>, vector<1x32x8xbf16>
      %207 = vector.shape_cast %206 : vector<1x32x8xbf16> to vector<32x8xbf16>
      %cst_154 = arith.constant dense<0.000000e+00> : vector<8x8xf32>
      %208 = tpu.matmul %136, %207, %cst_154 {dimension_numbers = #tpu.dot_dimension_numbers<[1], [0], [0], [1], [0, 0, 1, 1], [], []>} : vector<8x32xbf16>, vector<32x8xbf16>, vector<8x8xf32> -> vector<8x8xf32>
      %c3_155 = arith.constant 3 : index
      %c0_156 = arith.constant 0 : index
      %c0_157 = arith.constant 0 : index
      %209 = vector.load %arg7[%c3_155, %c0_156, %c0_157] : memref<4x1x8xf32, #tpu.memory_space<vmem>>, vector<1x1x8xf32>
      %210 = vector.shape_cast %209 : vector<1x1x8xf32> to vector<1x8xf32>
      %211 = vector.broadcast %210 : vector<1x8xf32> to vector<8x8xf32>
      %212 = arith.addf %208, %211 : vector<8x8xf32>
      %c3_158 = arith.constant 3 : index
      %c0_159 = arith.constant 0 : index
      %c0_160 = arith.constant 0 : index
      %213 = vector.load %arg5[%c3_158, %c0_159, %c0_160] : memref<4x32x8xbf16, #tpu.memory_space<vmem>>, vector<1x32x8xbf16>
      %214 = vector.shape_cast %213 : vector<1x32x8xbf16> to vector<32x8xbf16>
      %cst_161 = arith.constant dense<0.000000e+00> : vector<8x8xf32>
      %215 = tpu.matmul %136, %214, %cst_161 {dimension_numbers = #tpu.dot_dimension_numbers<[1], [0], [0], [1], [0, 0, 1, 1], [], []>} : vector<8x32xbf16>, vector<32x8xbf16>, vector<8x8xf32> -> vector<8x8xf32>
      %c3_162 = arith.constant 3 : index
      %c0_163 = arith.constant 0 : index
      %c0_164 = arith.constant 0 : index
      %216 = vector.load %arg8[%c3_162, %c0_163, %c0_164] : memref<4x1x8xf32, #tpu.memory_space<vmem>>, vector<1x1x8xf32>
      %217 = vector.shape_cast %216 : vector<1x1x8xf32> to vector<1x8xf32>
      %218 = vector.broadcast %217 : vector<1x8xf32> to vector<8x8xf32>
      %219 = arith.addf %215, %218 : vector<8x8xf32>
      %220 = tpu.transpose %212, [1, 0] : vector<8x8xf32> -> vector<8x8xf32>
      %221 = arith.truncf %220 : vector<8x8xf32> to vector<8x8xbf16>
      %c3_165 = arith.constant 3 : index
      %c0_166 = arith.constant 0 : index
      %c0_167 = arith.constant 0 : index
      %222 = vector.load %arg12[%c3_165, %c0_166, %c0_167] : memref<4x8x8xbf16, #tpu.memory_space<vmem>>, vector<1x8x8xbf16>
      %223 = vector.shape_cast %222 : vector<1x8x8xbf16> to vector<8x8xbf16>
      %224 = vector.shape_cast %221 : vector<8x8xbf16> to vector<1x8x8xbf16>
      tpu.vector_store %arg12[%c3_165, %c0_166, %c0_167], %224 {strides = array<i32>} : memref<4x8x8xbf16, #tpu.memory_space<vmem>>, vector<1x8x8xbf16>,
      %225 = arith.truncf %219 : vector<8x8xf32> to vector<8x8xbf16>
      %c3_168 = arith.constant 3 : index
      %c0_169 = arith.constant 0 : index
      %c0_170 = arith.constant 0 : index
      %226 = vector.load %arg13[%c3_168, %c0_169, %c0_170] : memref<4x8x8xbf16, #tpu.memory_space<vmem>>, vector<1x8x8xbf16>
      %227 = vector.shape_cast %226 : vector<1x8x8xbf16> to vector<8x8xbf16>
      %228 = vector.shape_cast %225 : vector<8x8xbf16> to vector<1x8x8xbf16>
      tpu.vector_store %arg13[%c3_168, %c0_169, %c0_170], %228 {strides = array<i32>} : memref<4x8x8xbf16, #tpu.memory_space<vmem>>, vector<1x8x8xbf16>,
    } else {
    }
    %c8_i32 = arith.constant 8 : i32
    %3 = arith.muli %arg1, %c8_i32 : i32
    %4 = tpu.assume_multiple %3, 8 : i32
    %c0 = arith.constant 0 : index
    %5 = arith.index_cast %4 : i32 to index
    %c0_1 = arith.constant 0 : index
    %6 = vector.load %arg2[%c0, %5, %c0_1] : memref<1x8x32xbf16, #tpu.memory_space<vmem>>, vector<1x8x32xbf16>
    %7 = vector.shape_cast %6 : vector<1x8x32xbf16> to vector<8x32xbf16>
    %cst = arith.constant 0.000000e+00 : f32
    %8 = vector.broadcast %cst : f32 to vector<8x128xf32>
    %c0_2 = arith.constant 0 : index
    %c0_3 = arith.constant 0 : index
    %c0_4 = arith.constant 0 : index
    %9 = vector.load %arg3[%c0_2, %c0_3, %c0_4] : memref<4x32x8xbf16, #tpu.memory_space<vmem>>, vector<1x32x8xbf16>
    %10 = vector.shape_cast %9 : vector<1x32x8xbf16> to vector<32x8xbf16>
    %cst_5 = arith.constant dense<0.000000e+00> : vector<8x8xf32>
    %11 = tpu.matmul %7, %10, %cst_5 {dimension_numbers = #tpu.dot_dimension_numbers<[1], [0], [0], [1], [0, 0, 1, 1], [], []>} : vector<8x32xbf16>, vector<32x8xbf16>, vector<8x8xf32> -> vector<8x8xf32>
    %c0_6 = arith.constant 0 : index
    %c0_7 = arith.constant 0 : index
    %c0_8 = arith.constant 0 : index
    %12 = vector.load %arg6[%c0_6, %c0_7, %c0_8] : memref<4x1x8xf32, #tpu.memory_space<vmem>>, vector<1x1x8xf32>
    %13 = vector.shape_cast %12 : vector<1x1x8xf32> to vector<1x8xf32>
    %14 = vector.broadcast %13 : vector<1x8xf32> to vector<8x8xf32>
    %15 = arith.addf %11, %14 : vector<8x8xf32>
    %16 = arith.truncf %15 : vector<8x8xf32> to vector<8x8xbf16>
    %c0_9 = arith.constant 0 : index
    %c0_10 = arith.constant 0 : index
    %c0_11 = arith.constant 0 : index
    %17 = vector.load %arg12[%c0_9, %c0_10, %c0_11] : memref<4x8x8xbf16, #tpu.memory_space<vmem>>, vector<1x8x8xbf16>
    %18 = vector.shape_cast %17 : vector<1x8x8xbf16> to vector<8x8xbf16>
    %cst_12 = arith.constant dense<0.000000e+00> : vector<8x8xf32>
    %19 = tpu.matmul %16, %18, %cst_12 {dimension_numbers = #tpu.dot_dimension_numbers<[1], [0], [0], [1], [0, 0, 1, 1], [], []>} : vector<8x8xbf16>, vector<8x8xbf16>, vector<8x8xf32> -> vector<8x8xf32>
    %cst_13 = arith.constant dense<0xFF800000> : vector<8xf32>
    %20 = vector.multi_reduction <maximumf>, %19, %cst_13 [1] : vector<8x8xf32> to vector<8xf32>
    %21 = vector.shape_cast %20 : vector<8xf32> to vector<8x1xf32>
    %22 = vector.broadcast %21 : vector<8x1xf32> to vector<8x8xf32>
    %23 = arith.subf %19, %22 : vector<8x8xf32>
    %24 = math.exp %23 : vector<8x8xf32>
    %cst_14 = arith.constant dense<0.000000e+00> : vector<8xf32>
    %25 = vector.multi_reduction <add>, %24, %cst_14 [1] : vector<8x8xf32> to vector<8xf32>
    %26 = vector.shape_cast %25 : vector<8xf32> to vector<8x1xf32>
    %27 = tpu.reciprocal %26 {approx = true} : vector<8x1xf32> -> vector<8x1xf32>
    %28 = arith.truncf %24 : vector<8x8xf32> to vector<8x8xbf16>
    %c0_15 = arith.constant 0 : index
    %c0_16 = arith.constant 0 : index
    %c0_17 = arith.constant 0 : index
    %29 = vector.load %arg13[%c0_15, %c0_16, %c0_17] : memref<4x8x8xbf16, #tpu.memory_space<vmem>>, vector<1x8x8xbf16>
    %30 = vector.shape_cast %29 : vector<1x8x8xbf16> to vector<8x8xbf16>
    %cst_18 = arith.constant dense<0.000000e+00> : vector<8x8xf32>
    %31 = tpu.matmul %28, %30, %cst_18 {dimension_numbers = #tpu.dot_dimension_numbers<[1], [0], [0], [1], [0, 0, 1, 1], [], []>} : vector<8x8xbf16>, vector<8x8xbf16>, vector<8x8xf32> -> vector<8x8xf32>
    %32 = vector.broadcast %27 : vector<8x1xf32> to vector<8x8xf32>
    %33 = arith.mulf %31, %32 : vector<8x8xf32>
    %34 = arith.truncf %33 : vector<8x8xf32> to vector<8x8xbf16>
    %c0_19 = arith.constant 0 : index
    %c0_20 = arith.constant 0 : index
    %c0_21 = arith.constant 0 : index
    %35 = vector.load %arg9[%c0_19, %c0_20, %c0_21] : memref<4x8x128xbf16, #tpu.memory_space<vmem>>, vector<1x8x128xbf16>
    %36 = vector.shape_cast %35 : vector<1x8x128xbf16> to vector<8x128xbf16>
    %cst_22 = arith.constant dense<0.000000e+00> : vector<8x128xf32>
    %37 = tpu.matmul %34, %36, %cst_22 {dimension_numbers = #tpu.dot_dimension_numbers<[1], [0], [0], [1], [0, 0, 1, 1], [], []>} : vector<8x8xbf16>, vector<8x128xbf16>, vector<8x128xf32> -> vector<8x128xf32>
    %38 = arith.addf %8, %37 : vector<8x128xf32>
    %c1 = arith.constant 1 : index
    %c0_23 = arith.constant 0 : index
    %c0_24 = arith.constant 0 : index
    %39 = vector.load %arg3[%c1, %c0_23, %c0_24] : memref<4x32x8xbf16, #tpu.memory_space<vmem>>, vector<1x32x8xbf16>
    %40 = vector.shape_cast %39 : vector<1x32x8xbf16> to vector<32x8xbf16>
    %cst_25 = arith.constant dense<0.000000e+00> : vector<8x8xf32>
    %41 = tpu.matmul %7, %40, %cst_25 {dimension_numbers = #tpu.dot_dimension_numbers<[1], [0], [0], [1], [0, 0, 1, 1], [], []>} : vector<8x32xbf16>, vector<32x8xbf16>, vector<8x8xf32> -> vector<8x8xf32>
    %c1_26 = arith.constant 1 : index
    %c0_27 = arith.constant 0 : index
    %c0_28 = arith.constant 0 : index
    %42 = vector.load %arg6[%c1_26, %c0_27, %c0_28] : memref<4x1x8xf32, #tpu.memory_space<vmem>>, vector<1x1x8xf32>
    %43 = vector.shape_cast %42 : vector<1x1x8xf32> to vector<1x8xf32>
    %44 = vector.broadcast %43 : vector<1x8xf32> to vector<8x8xf32>
    %45 = arith.addf %41, %44 : vector<8x8xf32>
    %46 = arith.truncf %45 : vector<8x8xf32> to vector<8x8xbf16>
    %c1_29 = arith.constant 1 : index
    %c0_30 = arith.constant 0 : index
    %c0_31 = arith.constant 0 : index
    %47 = vector.load %arg12[%c1_29, %c0_30, %c0_31] : memref<4x8x8xbf16, #tpu.memory_space<vmem>>, vector<1x8x8xbf16>
    %48 = vector.shape_cast %47 : vector<1x8x8xbf16> to vector<8x8xbf16>
    %cst_32 = arith.constant dense<0.000000e+00> : vector<8x8xf32>
    %49 = tpu.matmul %46, %48, %cst_32 {dimension_numbers = #tpu.dot_dimension_numbers<[1], [0], [0], [1], [0, 0, 1, 1], [], []>} : vector<8x8xbf16>, vector<8x8xbf16>, vector<8x8xf32> -> vector<8x8xf32>
    %cst_33 = arith.constant dense<0xFF800000> : vector<8xf32>
    %50 = vector.multi_reduction <maximumf>, %49, %cst_33 [1] : vector<8x8xf32> to vector<8xf32>
    %51 = vector.shape_cast %50 : vector<8xf32> to vector<8x1xf32>
    %52 = vector.broadcast %51 : vector<8x1xf32> to vector<8x8xf32>
    %53 = arith.subf %49, %52 : vector<8x8xf32>
    %54 = math.exp %53 : vector<8x8xf32>
    %cst_34 = arith.constant dense<0.000000e+00> : vector<8xf32>
    %55 = vector.multi_reduction <add>, %54, %cst_34 [1] : vector<8x8xf32> to vector<8xf32>
    %56 = vector.shape_cast %55 : vector<8xf32> to vector<8x1xf32>
    %57 = tpu.reciprocal %56 {approx = true} : vector<8x1xf32> -> vector<8x1xf32>
    %58 = arith.truncf %54 : vector<8x8xf32> to vector<8x8xbf16>
    %c1_35 = arith.constant 1 : index
    %c0_36 = arith.constant 0 : index
    %c0_37 = arith.constant 0 : index
    %59 = vector.load %arg13[%c1_35, %c0_36, %c0_37] : memref<4x8x8xbf16, #tpu.memory_space<vmem>>, vector<1x8x8xbf16>
    %60 = vector.shape_cast %59 : vector<1x8x8xbf16> to vector<8x8xbf16>
    %cst_38 = arith.constant dense<0.000000e+00> : vector<8x8xf32>
    %61 = tpu.matmul %58, %60, %cst_38 {dimension_numbers = #tpu.dot_dimension_numbers<[1], [0], [0], [1], [0, 0, 1, 1], [], []>} : vector<8x8xbf16>, vector<8x8xbf16>, vector<8x8xf32> -> vector<8x8xf32>
    %62 = vector.broadcast %57 : vector<8x1xf32> to vector<8x8xf32>
    %63 = arith.mulf %61, %62 : vector<8x8xf32>
    %64 = arith.truncf %63 : vector<8x8xf32> to vector<8x8xbf16>
    %c1_39 = arith.constant 1 : index
    %c0_40 = arith.constant 0 : index
    %c0_41 = arith.constant 0 : index
    %65 = vector.load %arg9[%c1_39, %c0_40, %c0_41] : memref<4x8x128xbf16, #tpu.memory_space<vmem>>, vector<1x8x128xbf16>
    %66 = vector.shape_cast %65 : vector<1x8x128xbf16> to vector<8x128xbf16>
    %cst_42 = arith.constant dense<0.000000e+00> : vector<8x128xf32>
    %67 = tpu.matmul %64, %66, %cst_42 {dimension_numbers = #tpu.dot_dimension_numbers<[1], [0], [0], [1], [0, 0, 1, 1], [], []>} : vector<8x8xbf16>, vector<8x128xbf16>, vector<8x128xf32> -> vector<8x128xf32>
    %68 = arith.addf %38, %67 : vector<8x128xf32>
    %c2 = arith.constant 2 : index
    %c0_43 = arith.constant 0 : index
    %c0_44 = arith.constant 0 : index
    %69 = vector.load %arg3[%c2, %c0_43, %c0_44] : memref<4x32x8xbf16, #tpu.memory_space<vmem>>, vector<1x32x8xbf16>
    %70 = vector.shape_cast %69 : vector<1x32x8xbf16> to vector<32x8xbf16>
    %cst_45 = arith.constant dense<0.000000e+00> : vector<8x8xf32>
    %71 = tpu.matmul %7, %70, %cst_45 {dimension_numbers = #tpu.dot_dimension_numbers<[1], [0], [0], [1], [0, 0, 1, 1], [], []>} : vector<8x32xbf16>, vector<32x8xbf16>, vector<8x8xf32> -> vector<8x8xf32>
    %c2_46 = arith.constant 2 : index
    %c0_47 = arith.constant 0 : index
    %c0_48 = arith.constant 0 : index
    %72 = vector.load %arg6[%c2_46, %c0_47, %c0_48] : memref<4x1x8xf32, #tpu.memory_space<vmem>>, vector<1x1x8xf32>
    %73 = vector.shape_cast %72 : vector<1x1x8xf32> to vector<1x8xf32>
    %74 = vector.broadcast %73 : vector<1x8xf32> to vector<8x8xf32>
    %75 = arith.addf %71, %74 : vector<8x8xf32>
    %76 = arith.truncf %75 : vector<8x8xf32> to vector<8x8xbf16>
    %c2_49 = arith.constant 2 : index
    %c0_50 = arith.constant 0 : index
    %c0_51 = arith.constant 0 : index
    %77 = vector.load %arg12[%c2_49, %c0_50, %c0_51] : memref<4x8x8xbf16, #tpu.memory_space<vmem>>, vector<1x8x8xbf16>
    %78 = vector.shape_cast %77 : vector<1x8x8xbf16> to vector<8x8xbf16>
    %cst_52 = arith.constant dense<0.000000e+00> : vector<8x8xf32>
    %79 = tpu.matmul %76, %78, %cst_52 {dimension_numbers = #tpu.dot_dimension_numbers<[1], [0], [0], [1], [0, 0, 1, 1], [], []>} : vector<8x8xbf16>, vector<8x8xbf16>, vector<8x8xf32> -> vector<8x8xf32>
    %cst_53 = arith.constant dense<0xFF800000> : vector<8xf32>
    %80 = vector.multi_reduction <maximumf>, %79, %cst_53 [1] : vector<8x8xf32> to vector<8xf32>
    %81 = vector.shape_cast %80 : vector<8xf32> to vector<8x1xf32>
    %82 = vector.broadcast %81 : vector<8x1xf32> to vector<8x8xf32>
    %83 = arith.subf %79, %82 : vector<8x8xf32>
    %84 = math.exp %83 : vector<8x8xf32>
    %cst_54 = arith.constant dense<0.000000e+00> : vector<8xf32>
    %85 = vector.multi_reduction <add>, %84, %cst_54 [1] : vector<8x8xf32> to vector<8xf32>
    %86 = vector.shape_cast %85 : vector<8xf32> to vector<8x1xf32>
    %87 = tpu.reciprocal %86 {approx = true} : vector<8x1xf32> -> vector<8x1xf32>
    %88 = arith.truncf %84 : vector<8x8xf32> to vector<8x8xbf16>
    %c2_55 = arith.constant 2 : index
    %c0_56 = arith.constant 0 : index
    %c0_57 = arith.constant 0 : index
    %89 = vector.load %arg13[%c2_55, %c0_56, %c0_57] : memref<4x8x8xbf16, #tpu.memory_space<vmem>>, vector<1x8x8xbf16>
    %90 = vector.shape_cast %89 : vector<1x8x8xbf16> to vector<8x8xbf16>
    %cst_58 = arith.constant dense<0.000000e+00> : vector<8x8xf32>
    %91 = tpu.matmul %88, %90, %cst_58 {dimension_numbers = #tpu.dot_dimension_numbers<[1], [0], [0], [1], [0, 0, 1, 1], [], []>} : vector<8x8xbf16>, vector<8x8xbf16>, vector<8x8xf32> -> vector<8x8xf32>
    %92 = vector.broadcast %87 : vector<8x1xf32> to vector<8x8xf32>
    %93 = arith.mulf %91, %92 : vector<8x8xf32>
    %94 = arith.truncf %93 : vector<8x8xf32> to vector<8x8xbf16>
    %c2_59 = arith.constant 2 : index
    %c0_60 = arith.constant 0 : index
    %c0_61 = arith.constant 0 : index
    %95 = vector.load %arg9[%c2_59, %c0_60, %c0_61] : memref<4x8x128xbf16, #tpu.memory_space<vmem>>, vector<1x8x128xbf16>
    %96 = vector.shape_cast %95 : vector<1x8x128xbf16> to vector<8x128xbf16>
    %cst_62 = arith.constant dense<0.000000e+00> : vector<8x128xf32>
    %97 = tpu.matmul %94, %96, %cst_62 {dimension_numbers = #tpu.dot_dimension_numbers<[1], [0], [0], [1], [0, 0, 1, 1], [], []>} : vector<8x8xbf16>, vector<8x128xbf16>, vector<8x128xf32> -> vector<8x128xf32>
    %98 = arith.addf %68, %97 : vector<8x128xf32>
    %c3 = arith.constant 3 : index
    %c0_63 = arith.constant 0 : index
    %c0_64 = arith.constant 0 : index
    %99 = vector.load %arg3[%c3, %c0_63, %c0_64] : memref<4x32x8xbf16, #tpu.memory_space<vmem>>, vector<1x32x8xbf16>
    %100 = vector.shape_cast %99 : vector<1x32x8xbf16> to vector<32x8xbf16>
    %cst_65 = arith.constant dense<0.000000e+00> : vector<8x8xf32>
    %101 = tpu.matmul %7, %100, %cst_65 {dimension_numbers = #tpu.dot_dimension_numbers<[1], [0], [0], [1], [0, 0, 1, 1], [], []>} : vector<8x32xbf16>, vector<32x8xbf16>, vector<8x8xf32> -> vector<8x8xf32>
    %c3_66 = arith.constant 3 : index
    %c0_67 = arith.constant 0 : index
    %c0_68 = arith.constant 0 : index
    %102 = vector.load %arg6[%c3_66, %c0_67, %c0_68] : memref<4x1x8xf32, #tpu.memory_space<vmem>>, vector<1x1x8xf32>
    %103 = vector.shape_cast %102 : vector<1x1x8xf32> to vector<1x8xf32>
    %104 = vector.broadcast %103 : vector<1x8xf32> to vector<8x8xf32>
    %105 = arith.addf %101, %104 : vector<8x8xf32>
    %106 = arith.truncf %105 : vector<8x8xf32> to vector<8x8xbf16>
    %c3_69 = arith.constant 3 : index
    %c0_70 = arith.constant 0 : index
    %c0_71 = arith.constant 0 : index
    %107 = vector.load %arg12[%c3_69, %c0_70, %c0_71] : memref<4x8x8xbf16, #tpu.memory_space<vmem>>, vector<1x8x8xbf16>
    %108 = vector.shape_cast %107 : vector<1x8x8xbf16> to vector<8x8xbf16>
    %cst_72 = arith.constant dense<0.000000e+00> : vector<8x8xf32>
    %109 = tpu.matmul %106, %108, %cst_72 {dimension_numbers = #tpu.dot_dimension_numbers<[1], [0], [0], [1], [0, 0, 1, 1], [], []>} : vector<8x8xbf16>, vector<8x8xbf16>, vector<8x8xf32> -> vector<8x8xf32>
    %cst_73 = arith.constant dense<0xFF800000> : vector<8xf32>
    %110 = vector.multi_reduction <maximumf>, %109, %cst_73 [1] : vector<8x8xf32> to vector<8xf32>
    %111 = vector.shape_cast %110 : vector<8xf32> to vector<8x1xf32>
    %112 = vector.broadcast %111 : vector<8x1xf32> to vector<8x8xf32>
    %113 = arith.subf %109, %112 : vector<8x8xf32>
    %114 = math.exp %113 : vector<8x8xf32>
    %cst_74 = arith.constant dense<0.000000e+00> : vector<8xf32>
    %115 = vector.multi_reduction <add>, %114, %cst_74 [1] : vector<8x8xf32> to vector<8xf32>
    %116 = vector.shape_cast %115 : vector<8xf32> to vector<8x1xf32>
    %117 = tpu.reciprocal %116 {approx = true} : vector<8x1xf32> -> vector<8x1xf32>
    %118 = arith.truncf %114 : vector<8x8xf32> to vector<8x8xbf16>
    %c3_75 = arith.constant 3 : index
    %c0_76 = arith.constant 0 : index
    %c0_77 = arith.constant 0 : index
    %119 = vector.load %arg13[%c3_75, %c0_76, %c0_77] : memref<4x8x8xbf16, #tpu.memory_space<vmem>>, vector<1x8x8xbf16>
    %120 = vector.shape_cast %119 : vector<1x8x8xbf16> to vector<8x8xbf16>
    %cst_78 = arith.constant dense<0.000000e+00> : vector<8x8xf32>
    %121 = tpu.matmul %118, %120, %cst_78 {dimension_numbers = #tpu.dot_dimension_numbers<[1], [0], [0], [1], [0, 0, 1, 1], [], []>} : vector<8x8xbf16>, vector<8x8xbf16>, vector<8x8xf32> -> vector<8x8xf32>
    %122 = vector.broadcast %117 : vector<8x1xf32> to vector<8x8xf32>
    %123 = arith.mulf %121, %122 : vector<8x8xf32>
    %124 = arith.truncf %123 : vector<8x8xf32> to vector<8x8xbf16>
    %c3_79 = arith.constant 3 : index
    %c0_80 = arith.constant 0 : index
    %c0_81 = arith.constant 0 : index
    %125 = vector.load %arg9[%c3_79, %c0_80, %c0_81] : memref<4x8x128xbf16, #tpu.memory_space<vmem>>, vector<1x8x128xbf16>
    %126 = vector.shape_cast %125 : vector<1x8x128xbf16> to vector<8x128xbf16>
    %cst_82 = arith.constant dense<0.000000e+00> : vector<8x128xf32>
    %127 = tpu.matmul %124, %126, %cst_82 {dimension_numbers = #tpu.dot_dimension_numbers<[1], [0], [0], [1], [0, 0, 1, 1], [], []>} : vector<8x8xbf16>, vector<8x128xbf16>, vector<8x128xf32> -> vector<8x128xf32>
    %128 = arith.addf %98, %127 : vector<8x128xf32>
    %c0_83 = arith.constant 0 : index
    %c0_84 = arith.constant 0 : index
    %129 = vector.load %arg10[%c0_83, %c0_84] : memref<1x128xf32, #tpu.memory_space<vmem>>, vector<1x128xf32>
    %130 = vector.broadcast %129 : vector<1x128xf32> to vector<8x128xf32>
    %131 = arith.addf %128, %130 : vector<8x128xf32>
    %c0_85 = arith.constant 0 : index
    %c0_86 = arith.constant 0 : index
    %c0_87 = arith.constant 0 : index
    %132 = vector.load %arg11[%c0_85, %c0_86, %c0_87] : memref<1x8x128xf32, #tpu.memory_space<vmem>>, vector<1x8x128xf32>
    %133 = vector.shape_cast %132 : vector<1x8x128xf32> to vector<8x128xf32>
    %134 = vector.shape_cast %131 : vector<8x128xf32> to vector<1x8x128xf32>
    tpu.vector_store %arg11[%c0_85, %c0_86, %c0_87], %134 {strides = array<i32>} : memref<1x8x128xf32, #tpu.memory_space<vmem>>, vector<1x8x128xf32>,
    return
  }
  func.func @transform_0(%arg0: i32, %arg1: i32) -> (i32, i32, i32) {
    %c0_i32 = arith.constant 0 : i32
    %c0_i32_0 = arith.constant 0 : i32
    %c0_i32_1 = arith.constant 0 : i32
    return %arg0, %c0_i32, %c0_i32_0 : i32, i32, i32
  }
  func.func @transform_1(%arg0: i32, %arg1: i32) -> (i32, i32, i32) {
    %c0_i32 = arith.constant 0 : i32
    %c0_i32_0 = arith.constant 0 : i32
    %c0_i32_1 = arith.constant 0 : i32
    %c0_i32_2 = arith.constant 0 : i32
    return %c0_i32, %c0_i32_0, %c0_i32_1 : i32, i32, i32
  }
  func.func @transform_2(%arg0: i32, %arg1: i32) -> (i32, i32, i32) {
    %c0_i32 = arith.constant 0 : i32
    %c0_i32_0 = arith.constant 0 : i32
    %c0_i32_1 = arith.constant 0 : i32
    %c0_i32_2 = arith.constant 0 : i32
    return %c0_i32, %c0_i32_0, %c0_i32_1 : i32, i32, i32
  }
  func.func @transform_3(%arg0: i32, %arg1: i32) -> (i32, i32, i32) {
    %c0_i32 = arith.constant 0 : i32
    %c0_i32_0 = arith.constant 0 : i32
    %c0_i32_1 = arith.constant 0 : i32
    %c0_i32_2 = arith.constant 0 : i32
    return %c0_i32, %c0_i32_0, %c0_i32_1 : i32, i32, i32
  }
  func.func @transform_4(%arg0: i32, %arg1: i32) -> (i32, i32, i32) {
    %c0_i32 = arith.constant 0 : i32
    %c0_i32_0 = arith.constant 0 : i32
    %c0_i32_1 = arith.constant 0 : i32
    %c0_i32_2 = arith.constant 0 : i32
    return %c0_i32, %c0_i32_0, %c0_i32_1 : i32, i32, i32
  }
  func.func @transform_5(%arg0: i32, %arg1: i32) -> (i32, i32, i32) {
    %c0_i32 = arith.constant 0 : i32
    %c0_i32_0 = arith.constant 0 : i32
    %c0_i32_1 = arith.constant 0 : i32
    %c0_i32_2 = arith.constant 0 : i32
    return %c0_i32, %c0_i32_0, %c0_i32_1 : i32, i32, i32
  }
  func.func @transform_6(%arg0: i32, %arg1: i32) -> (i32, i32, i32) {
    %c0_i32 = arith.constant 0 : i32
    %c0_i32_0 = arith.constant 0 : i32
    %c0_i32_1 = arith.constant 0 : i32
    %c0_i32_2 = arith.constant 0 : i32
    return %c0_i32, %c0_i32_0, %c0_i32_1 : i32, i32, i32
  }
  func.func @transform_7(%arg0: i32, %arg1: i32) -> (i32, i32, i32) {
    %c0_i32 = arith.constant 0 : i32
    %c0_i32_0 = arith.constant 0 : i32
    %c0_i32_1 = arith.constant 0 : i32
    %c0_i32_2 = arith.constant 0 : i32
    return %c0_i32, %c0_i32_0, %c0_i32_1 : i32, i32, i32
  }
  func.func @transform_8(%arg0: i32, %arg1: i32) -> (i32, i32) {
    %c0_i32 = arith.constant 0 : i32
    %c0_i32_0 = arith.constant 0 : i32
    %c0_i32_1 = arith.constant 0 : i32
    return %c0_i32, %c0_i32_0 : i32, i32
  }
  func.func @transform_9(%arg0: i32, %arg1: i32) -> (i32, i32, i32) {
    %c0_i32 = arith.constant 0 : i32
    %c0_i32_0 = arith.constant 0 : i32
    return %arg0, %arg1, %c0_i32 : i32, i32, i32
  }
}

module attributes {stable_mosaic.version = 11 : i64} {
  func.func @_mha_kernel(%arg0: i32, %arg1: i32, %arg2: memref<1x8x32xbf16, #tpu.memory_space<vmem>>, %arg3: memref<4x32x8xbf16, #tpu.memory_space<vmem>>, %arg4: memref<4x32x8xbf16, #tpu.memory_space<vmem>>, %arg5: memref<4x32x8xbf16, #tpu.memory_space<vmem>>, %arg6: memref<4x1x8xf32, #tpu.memory_space<vmem>>, %arg7: memref<4x1x8xf32, #tpu.memory_space<vmem>>, %arg8: memref<4x1x8xf32, #tpu.memory_space<vmem>>, %arg9: memref<4x8x128xbf16, #tpu.memory_space<vmem>>, %arg10: memref<1x128xf32, #tpu.memory_space<vmem>>, %arg11: memref<1x8x128xf32, #tpu.memory_space<vmem>>, %arg12: memref<4x8x8xbf16, #tpu.memory_space<vmem>>, %arg13: memref<4x8x8xbf16, #tpu.memory_space<vmem>>) attributes {dimension_semantics = [#tpu.dimension_semantics<parallel>, #tpu.dimension_semantics<arbitrary>], iteration_bounds = array<i64: 2, 1>, scalar_prefetch = 0 : i64, scratch_operands = 2 : i64, tpu.core_type = #tpu.core_type<tc>, window_params = [{transform_indices = @transform_0, window_bounds = array<i64: 1, 8, 32>}, {pipeline_mode = #tpu.pipeline_mode<synchronous>, transform_indices = @transform_1, window_bounds = array<i64: 4, 32, 8>}, {pipeline_mode = #tpu.pipeline_mode<synchronous>, transform_indices = @transform_2, window_bounds = array<i64: 4, 32, 8>}, {pipeline_mode = #tpu.pipeline_mode<synchronous>, transform_indices = @transform_3, window_bounds = array<i64: 4, 32, 8>}, {pipeline_mode = #tpu.pipeline_mode<synchronous>, transform_indices = @transform_4, window_bounds = array<i64: 4, 1, 8>}, {pipeline_mode = #tpu.pipeline_mode<synchronous>, transform_indices = @transform_5, window_bounds = array<i64: 4, 1, 8>}, {pipeline_mode = #tpu.pipeline_mode<synchronous>, transform_indices = @transform_6, window_bounds = array<i64: 4, 1, 8>}, {pipeline_mode = #tpu.pipeline_mode<synchronous>, transform_indices = @transform_7, window_bounds = array<i64: 4, 8, 128>}, {pipeline_mode = #tpu.pipeline_mode<synchronous>, transform_indices = @transform_8, window_bounds = array<i64: 1, 128>}, {transform_indices = @transform_9, window_bounds = array<i64: 1, 8, 128>}]} {
    %c0_i32 = arith.constant 0 : i32
    %0 = arith.cmpi eq, %arg1, %c0_i32 : i32
    %1 = arith.extui %0 : i1 to i32
    %c0_i32_0 = arith.constant 0 : i32
    %2 = arith.cmpi ne, %1, %c0_i32_0 : i32
    scf.if %2 {
      %c0_88 = arith.constant 0 : index
      %c0_89 = arith.constant 0 : index
      %c0_90 = arith.constant 0 : index
      %135 = vector.load %arg2[%c0_88, %c0_89, %c0_90] : memref<1x8x32xbf16, #tpu.memory_space<vmem>>, vector<1x8x32xbf16>
      %136 = vector.shape_cast %135 : vector<1x8x32xbf16> to vector<8x32xbf16>
      %c0_91 = arith.constant 0 : index
      %c0_92 = arith.constant 0 : index
      %c0_93 = arith.constant 0 : index
      %137 = vector.load %arg4[%c0_91, %c0_92, %c0_93] : memref<4x32x8xbf16, #tpu.memory_space<vmem>>, vector<1x32x8xbf16>
      %138 = vector.shape_cast %137 : vector<1x32x8xbf16> to vector<32x8xbf16>
      %cst_94 = arith.constant dense<0.000000e+00> : vector<8x8xf32>
      %139 = tpu.matmul %136, %138, %cst_94 {dimension_numbers = #tpu.dot_dimension_numbers<[1], [0], [0], [1], [0, 0, 1, 1], [], []>} : vector<8x32xbf16>, vector<32x8xbf16>, vector<8x8xf32> -> vector<8x8xf32>
      %c0_95 = arith.constant 0 : index
      %c0_96 = arith.constant 0 : index
      %c0_97 = arith.constant 0 : index
      %140 = vector.load %arg7[%c0_95, %c0_96, %c0_97] : memref<4x1x8xf32, #tpu.memory_space<vmem>>, vector<1x1x8xf32>
      %141 = vector.shape_cast %140 : vector<1x1x8xf32> to vector<1x8xf32>
      %142 = vector.broadcast %141 : vector<1x8xf32> to vector<8x8xf32>
      %143 = arith.addf %139, %142 : vector<8x8xf32>
      %c0_98 = arith.constant 0 : index
      %c0_99 = arith.constant 0 : index
      %c0_100 = arith.constant 0 : index
      %144 = vector.load %arg5[%c0_98, %c0_99, %c0_100] : memref<4x32x8xbf16, #tpu.memory_space<vmem>>, vector<1x32x8xbf16>
      %145 = vector.shape_cast %144 : vector<1x32x8xbf16> to vector<32x8xbf16>
      %cst_101 = arith.constant dense<0.000000e+00> : vector<8x8xf32>
      %146 = tpu.matmul %136, %145, %cst_101 {dimension_numbers = #tpu.dot_dimension_numbers<[1], [0], [0], [1], [0, 0, 1, 1], [], []>} : vector<8x32xbf16>, vector<32x8xbf16>, vector<8x8xf32> -> vector<8x8xf32>
      %c0_102 = arith.constant 0 : index
      %c0_103 = arith.constant 0 : index
      %c0_104 = arith.constant 0 : index
      %147 = vector.load %arg8[%c0_102, %c0_103, %c0_104] : memref<4x1x8xf32, #tpu.memory_space<vmem>>, vector<1x1x8xf32>
      %148 = vector.shape_cast %147 : vector<1x1x8xf32> to vector<1x8xf32>
      %149 = vector.broadcast %148 : vector<1x8xf32> to vector<8x8xf32>
      %150 = arith.addf %146, %149 : vector<8x8xf32>
      %151 = tpu.transpose %143, [1, 0] : vector<8x8xf32> -> vector<8x8xf32>
      %152 = arith.truncf %151 : vector<8x8xf32> to vector<8x8xbf16>
      %c0_105 = arith.constant 0 : index
      %c0_106 = arith.constant 0 : index
      %c0_107 = arith.constant 0 : index
      %153 = vector.load %arg12[%c0_105, %c0_106, %c0_107] : memref<4x8x8xbf16, #tpu.memory_space<vmem>>, vector<1x8x8xbf16>
      %154 = vector.shape_cast %153 : vector<1x8x8xbf16> to vector<8x8xbf16>
      %155 = vector.shape_cast %152 : vector<8x8xbf16> to vector<1x8x8xbf16>
      tpu.vector_store %arg12[%c0_105, %c0_106, %c0_107], %155 {strides = array<i32>} : memref<4x8x8xbf16, #tpu.memory_space<vmem>>, vector<1x8x8xbf16>,
      %156 = arith.truncf %150 : vector<8x8xf32> to vector<8x8xbf16>
      %c0_108 = arith.constant 0 : index
      %c0_109 = arith.constant 0 : index
      %c0_110 = arith.constant 0 : index
      %157 = vector.load %arg13[%c0_108, %c0_109, %c0_110] : memref<4x8x8xbf16, #tpu.memory_space<vmem>>, vector<1x8x8xbf16>
      %158 = vector.shape_cast %157 : vector<1x8x8xbf16> to vector<8x8xbf16>
      %159 = vector.shape_cast %156 : vector<8x8xbf16> to vector<1x8x8xbf16>
      tpu.vector_store %arg13[%c0_108, %c0_109, %c0_110], %159 {strides = array<i32>} : memref<4x8x8xbf16, #tpu.memory_space<vmem>>, vector<1x8x8xbf16>,
      %c1_111 = arith.constant 1 : index
      %c0_112 = arith.constant 0 : index
      %c0_113 = arith.constant 0 : index
      %160 = vector.load %arg4[%c1_111, %c0_112, %c0_113] : memref<4x32x8xbf16, #tpu.memory_space<vmem>>, vector<1x32x8xbf16>
      %161 = vector.shape_cast %160 : vector<1x32x8xbf16> to vector<32x8xbf16>
      %cst_114 = arith.constant dense<0.000000e+00> : vector<8x8xf32>
      %162 = tpu.matmul %136, %161, %cst_114 {dimension_numbers = #tpu.dot_dimension_numbers<[1], [0], [0], [1], [0, 0, 1, 1], [], []>} : vector<8x32xbf16>, vector<32x8xbf16>, vector<8x8xf32> -> vector<8x8xf32>
      %c1_115 = arith.constant 1 : index
      %c0_116 = arith.constant 0 : index
      %c0_117 = arith.constant 0 : index
      %163 = vector.load %arg7[%c1_115, %c0_116, %c0_117] : memref<4x1x8xf32, #tpu.memory_space<vmem>>, vector<1x1x8xf32>
      %164 = vector.shape_cast %163 : vector<1x1x8xf32> to vector<1x8xf32>
      %165 = vector.broadcast %164 : vector<1x8xf32> to vector<8x8xf32>
      %166 = arith.addf %162, %165 : vector<8x8xf32>
      %c1_118 = arith.constant 1 : index
      %c0_119 = arith.constant 0 : index
      %c0_120 = arith.constant 0 : index
      %167 = vector.load %arg5[%c1_118, %c0_119, %c0_120] : memref<4x32x8xbf16, #tpu.memory_space<vmem>>, vector<1x32x8xbf16>
      %168 = vector.shape_cast %167 : vector<1x32x8xbf16> to vector<32x8xbf16>
      %cst_121 = arith.constant dense<0.000000e+00> : vector<8x8xf32>
      %169 = tpu.matmul %136, %168, %cst_121 {dimension_numbers = #tpu.dot_dimension_numbers<[1], [0], [0], [1], [0, 0, 1, 1], [], []>} : vector<8x32xbf16>, vector<32x8xbf16>, vector<8x8xf32> -> vector<8x8xf32>
      %c1_122 = arith.constant 1 : index
      %c0_123 = arith.constant 0 : index
      %c0_124 = arith.constant 0 : index
      %170 = vector.load %arg8[%c1_122, %c0_123, %c0_124] : memref<4x1x8xf32, #tpu.memory_space<vmem>>, vector<1x1x8xf32>
      %171 = vector.shape_cast %170 : vector<1x1x8xf32> to vector<1x8xf32>
      %172 = vector.broadcast %171 : vector<1x8xf32> to vector<8x8xf32>
      %173 = arith.addf %169, %172 : vector<8x8xf32>
      %174 = tpu.transpose %166, [1, 0] : vector<8x8xf32> -> vector<8x8xf32>
      %175 = arith.truncf %174 : vector<8x8xf32> to vector<8x8xbf16>
      %c1_125 = arith.constant 1 : index
      %c0_126 = arith.constant 0 : index
      %c0_127 = arith.constant 0 : index
      %176 = vector.load %arg12[%c1_125, %c0_126, %c0_127] : memref<4x8x8xbf16, #tpu.memory_space<vmem>>, vector<1x8x8xbf16>
      %177 = vector.shape_cast %176 : vector<1x8x8xbf16> to vector<8x8xbf16>
      %178 = vector.shape_cast %175 : vector<8x8xbf16> to vector<1x8x8xbf16>
      tpu.vector_store %arg12[%c1_125, %c0_126, %c0_127], %178 {strides = array<i32>} : memref<4x8x8xbf16, #tpu.memory_space<vmem>>, vector<1x8x8xbf16>,
      %179 = arith.truncf %173 : vector<8x8xf32> to vector<8x8xbf16>
      %c1_128 = arith.constant 1 : index
      %c0_129 = arith.constant 0 : index
      %c0_130 = arith.constant 0 : index
      %180 = vector.load %arg13[%c1_128, %c0_129, %c0_130] : memref<4x8x8xbf16, #tpu.memory_space<vmem>>, vector<1x8x8xbf16>
      %181 = vector.shape_cast %180 : vector<1x8x8xbf16> to vector<8x8xbf16>
      %182 = vector.shape_cast %179 : vector<8x8xbf16> to vector<1x8x8xbf16>
      tpu.vector_store %arg13[%c1_128, %c0_129, %c0_130], %182 {strides = array<i32>} : memref<4x8x8xbf16, #tpu.memory_space<vmem>>, vector<1x8x8xbf16>,
      %c2_131 = arith.constant 2 : index
      %c0_132 = arith.constant 0 : index
      %c0_133 = arith.constant 0 : index
      %183 = vector.load %arg4[%c2_131, %c0_132, %c0_133] : memref<4x32x8xbf16, #tpu.memory_space<vmem>>, vector<1x32x8xbf16>
      %184 = vector.shape_cast %183 : vector<1x32x8xbf16> to vector<32x8xbf16>
      %cst_134 = arith.constant dense<0.000000e+00> : vector<8x8xf32>
      %185 = tpu.matmul %136, %184, %cst_134 {dimension_numbers = #tpu.dot_dimension_numbers<[1], [0], [0], [1], [0, 0, 1, 1], [], []>} : vector<8x32xbf16>, vector<32x8xbf16>, vector<8x8xf32> -> vector<8x8xf32>
      %c2_135 = arith.constant 2 : index
      %c0_136 = arith.constant 0 : index
      %c0_137 = arith.constant 0 : index
      %186 = vector.load %arg7[%c2_135, %c0_136, %c0_137] : memref<4x1x8xf32, #tpu.memory_space<vmem>>, vector<1x1x8xf32>
      %187 = vector.shape_cast %186 : vector<1x1x8xf32> to vector<1x8xf32>
      %188 = vector.broadcast %187 : vector<1x8xf32> to vector<8x8xf32>
      %189 = arith.addf %185, %188 : vector<8x8xf32>
      %c2_138 = arith.constant 2 : index
      %c0_139 = arith.constant 0 : index
      %c0_140 = arith.constant 0 : index
      %190 = vector.load %arg5[%c2_138, %c0_139, %c0_140] : memref<4x32x8xbf16, #tpu.memory_space<vmem>>, vector<1x32x8xbf16>
      %191 = vector.shape_cast %190 : vector<1x32x8xbf16> to vector<32x8xbf16>
      %cst_141 = arith.constant dense<0.000000e+00> : vector<8x8xf32>
      %192 = tpu.matmul %136, %191, %cst_141 {dimension_numbers = #tpu.dot_dimension_numbers<[1], [0], [0], [1], [0, 0, 1, 1], [], []>} : vector<8x32xbf16>, vector<32x8xbf16>, vector<8x8xf32> -> vector<8x8xf32>
      %c2_142 = arith.constant 2 : index
      %c0_143 = arith.constant 0 : index
      %c0_144 = arith.constant 0 : index
      %193 = vector.load %arg8[%c2_142, %c0_143, %c0_144] : memref<4x1x8xf32, #tpu.memory_space<vmem>>, vector<1x1x8xf32>
      %194 = vector.shape_cast %193 : vector<1x1x8xf32> to vector<1x8xf32>
      %195 = vector.broadcast %194 : vector<1x8xf32> to vector<8x8xf32>
      %196 = arith.addf %192, %195 : vector<8x8xf32>
      %197 = tpu.transpose %189, [1, 0] : vector<8x8xf32> -> vector<8x8xf32>
      %198 = arith.truncf %197 : vector<8x8xf32> to vector<8x8xbf16>
      %c2_145 = arith.constant 2 : index
      %c0_146 = arith.constant 0 : index
      %c0_147 = arith.constant 0 : index
      %199 = vector.load %arg12[%c2_145, %c0_146, %c0_147] : memref<4x8x8xbf16, #tpu.memory_space<vmem>>, vector<1x8x8xbf16>
      %200 = vector.shape_cast %199 : vector<1x8x8xbf16> to vector<8x8xbf16>
      %201 = vector.shape_cast %198 : vector<8x8xbf16> to vector<1x8x8xbf16>
      tpu.vector_store %arg12[%c2_145, %c0_146, %c0_147], %201 {strides = array<i32>} : memref<4x8x8xbf16, #tpu.memory_space<vmem>>, vector<1x8x8xbf16>,
      %202 = arith.truncf %196 : vector<8x8xf32> to vector<8x8xbf16>
      %c2_148 = arith.constant 2 : index
      %c0_149 = arith.constant 0 : index
      %c0_150 = arith.constant 0 : index
      %203 = vector.load %arg13[%c2_148, %c0_149, %c0_150] : memref<4x8x8xbf16, #tpu.memory_space<vmem>>, vector<1x8x8xbf16>
      %204 = vector.shape_cast %203 : vector<1x8x8xbf16> to vector<8x8xbf16>
      %205 = vector.shape_cast %202 : vector<8x8xbf16> to vector<1x8x8xbf16>
      tpu.vector_store %arg13[%c2_148, %c0_149, %c0_150], %205 {strides = array<i32>} : memref<4x8x8xbf16, #tpu.memory_space<vmem>>, vector<1x8x8xbf16>,
      %c3_151 = arith.constant 3 : index
      %c0_152 = arith.constant 0 : index
      %c0_153 = arith.constant 0 : index
      %206 = vector.load %arg4[%c3_151, %c0_152, %c0_153] : memref<4x32x8xbf16, #tpu.memory_space<vmem>>, vector<1x32x8xbf16>
      %207 = vector.shape_cast %206 : vector<1x32x8xbf16> to vector<32x8xbf16>
      %cst_154 = arith.constant dense<0.000000e+00> : vector<8x8xf32>
      %208 = tpu.matmul %136, %207, %cst_154 {dimension_numbers = #tpu.dot_dimension_numbers<[1], [0], [0], [1], [0, 0, 1, 1], [], []>} : vector<8x32xbf16>, vector<32x8xbf16>, vector<8x8xf32> -> vector<8x8xf32>
      %c3_155 = arith.constant 3 : index
      %c0_156 = arith.constant 0 : index
      %c0_157 = arith.constant 0 : index
      %209 = vector.load %arg7[%c3_155, %c0_156, %c0_157] : memref<4x1x8xf32, #tpu.memory_space<vmem>>, vector<1x1x8xf32>
      %210 = vector.shape_cast %209 : vector<1x1x8xf32> to vector<1x8xf32>
      %211 = vector.broadcast %210 : vector<1x8xf32> to vector<8x8xf32>
      %212 = arith.addf %208, %211 : vector<8x8xf32>
      %c3_158 = arith.constant 3 : index
      %c0_159 = arith.constant 0 : index
      %c0_160 = arith.constant 0 : index
      %213 = vector.load %arg5[%c3_158, %c0_159, %c0_160] : memref<4x32x8xbf16, #tpu.memory_space<vmem>>, vector<1x32x8xbf16>
      %214 = vector.shape_cast %213 : vector<1x32x8xbf16> to vector<32x8xbf16>
      %cst_161 = arith.constant dense<0.000000e+00> : vector<8x8xf32>
      %215 = tpu.matmul %136, %214, %cst_161 {dimension_numbers = #tpu.dot_dimension_numbers<[1], [0], [0], [1], [0, 0, 1, 1], [], []>} : vector<8x32xbf16>, vector<32x8xbf16>, vector<8x8xf32> -> vector<8x8xf32>
      %c3_162 = arith.constant 3 : index
      %c0_163 = arith.constant 0 : index
      %c0_164 = arith.constant 0 : index
      %216 = vector.load %arg8[%c3_162, %c0_163, %c0_164] : memref<4x1x8xf32, #tpu.memory_space<vmem>>, vector<1x1x8xf32>
      %217 = vector.shape_cast %216 : vector<1x1x8xf32> to vector<1x8xf32>
      %218 = vector.broadcast %217 : vector<1x8xf32> to vector<8x8xf32>
      %219 = arith.addf %215, %218 : vector<8x8xf32>
      %220 = tpu.transpose %212, [1, 0] : vector<8x8xf32> -> vector<8x8xf32>
      %221 = arith.truncf %220 : vector<8x8xf32> to vector<8x8xbf16>
      %c3_165 = arith.constant 3 : index
      %c0_166 = arith.constant 0 : index
      %c0_167 = arith.constant 0 : index
      %222 = vector.load %arg12[%c3_165, %c0_166, %c0_167] : memref<4x8x8xbf16, #tpu.memory_space<vmem>>, vector<1x8x8xbf16>
      %223 = vector.shape_cast %222 : vector<1x8x8xbf16> to vector<8x8xbf16>
      %224 = vector.shape_cast %221 : vector<8x8xbf16> to vector<1x8x8xbf16>
      tpu.vector_store %arg12[%c3_165, %c0_166, %c0_167], %224 {strides = array<i32>} : memref<4x8x8xbf16, #tpu.memory_space<vmem>>, vector<1x8x8xbf16>,
      %225 = arith.truncf %219 : vector<8x8xf32> to vector<8x8xbf16>
      %c3_168 = arith.constant 3 : index
      %c0_169 = arith.constant 0 : index
      %c0_170 = arith.constant 0 : index
      %226 = vector.load %arg13[%c3_168, %c0_169, %c0_170] : memref<4x8x8xbf16, #tpu.memory_space<vmem>>, vector<1x8x8xbf16>
      %227 = vector.shape_cast %226 : vector<1x8x8xbf16> to vector<8x8xbf16>
      %228 = vector.shape_cast %225 : vector<8x8xbf16> to vector<1x8x8xbf16>
      tpu.vector_store %arg13[%c3_168, %c0_169, %c0_170], %228 {strides = array<i32>} : memref<4x8x8xbf16, #tpu.memory_space<vmem>>, vector<1x8x8xbf16>,
    } else {
    }
    %c8_i32 = arith.constant 8 : i32
    %3 = arith.muli %arg1, %c8_i32 : i32
    %4 = tpu.assume_multiple %3, 8 : i32
    %c0 = arith.constant 0 : index
    %5 = arith.index_cast %4 : i32 to index
    %c0_1 = arith.constant 0 : index
    %6 = vector.load %arg2[%c0, %5, %c0_1] : memref<1x8x32xbf16, #tpu.memory_space<vmem>>, vector<1x8x32xbf16>
    %7 = vector.shape_cast %6 : vector<1x8x32xbf16> to vector<8x32xbf16>
    %cst = arith.constant 0.000000e+00 : f32
    %8 = vector.broadcast %cst : f32 to vector<8x128xf32>
    %c0_2 = arith.constant 0 : index
    %c0_3 = arith.constant 0 : index
    %c0_4 = arith.constant 0 : index
    %9 = vector.load %arg3[%c0_2, %c0_3, %c0_4] : memref<4x32x8xbf16, #tpu.memory_space<vmem>>, vector<1x32x8xbf16>
    %10 = vector.shape_cast %9 : vector<1x32x8xbf16> to vector<32x8xbf16>
    %cst_5 = arith.constant dense<0.000000e+00> : vector<8x8xf32>
    %11 = tpu.matmul %7, %10, %cst_5 {dimension_numbers = #tpu.dot_dimension_numbers<[1], [0], [0], [1], [0, 0, 1, 1], [], []>} : vector<8x32xbf16>, vector<32x8xbf16>, vector<8x8xf32> -> vector<8x8xf32>
    %c0_6 = arith.constant 0 : index
    %c0_7 = arith.constant 0 : index
    %c0_8 = arith.constant 0 : index
    %12 = vector.load %arg6[%c0_6, %c0_7, %c0_8] : memref<4x1x8xf32, #tpu.memory_space<vmem>>, vector<1x1x8xf32>
    %13 = vector.shape_cast %12 : vector<1x1x8xf32> to vector<1x8xf32>
    %14 = vector.broadcast %13 : vector<1x8xf32> to vector<8x8xf32>
    %15 = arith.addf %11, %14 : vector<8x8xf32>
    %16 = arith.truncf %15 : vector<8x8xf32> to vector<8x8xbf16>
    %c0_9 = arith.constant 0 : index
    %c0_10 = arith.constant 0 : index
    %c0_11 = arith.constant 0 : index
    %17 = vector.load %arg12[%c0_9, %c0_10, %c0_11] : memref<4x8x8xbf16, #tpu.memory_space<vmem>>, vector<1x8x8xbf16>
    %18 = vector.shape_cast %17 : vector<1x8x8xbf16> to vector<8x8xbf16>
    %cst_12 = arith.constant dense<0.000000e+00> : vector<8x8xf32>
    %19 = tpu.matmul %16, %18, %cst_12 {dimension_numbers = #tpu.dot_dimension_numbers<[1], [0], [0], [1], [0, 0, 1, 1], [], []>} : vector<8x8xbf16>, vector<8x8xbf16>, vector<8x8xf32> -> vector<8x8xf32>
    %cst_13 = arith.constant dense<0xFF800000> : vector<8xf32>
    %20 = vector.multi_reduction <maximumf>, %19, %cst_13 [1] : vector<8x8xf32> to vector<8xf32>
    %21 = vector.shape_cast %20 : vector<8xf32> to vector<8x1xf32>
    %22 = vector.broadcast %21 : vector<8x1xf32> to vector<8x8xf32>
    %23 = arith.subf %19, %22 : vector<8x8xf32>
    %24 = math.exp %23 : vector<8x8xf32>
    %cst_14 = arith.constant dense<0.000000e+00> : vector<8xf32>
    %25 = vector.multi_reduction <add>, %24, %cst_14 [1] : vector<8x8xf32> to vector<8xf32>
    %26 = vector.shape_cast %25 : vector<8xf32> to vector<8x1xf32>
    %27 = tpu.reciprocal %26 {approx = true} : vector<8x1xf32> -> vector<8x1xf32>
    %28 = arith.truncf %24 : vector<8x8xf32> to vector<8x8xbf16>
    %c0_15 = arith.constant 0 : index
    %c0_16 = arith.constant 0 : index
    %c0_17 = arith.constant 0 : index
    %29 = vector.load %arg13[%c0_15, %c0_16, %c0_17] : memref<4x8x8xbf16, #tpu.memory_space<vmem>>, vector<1x8x8xbf16>
    %30 = vector.shape_cast %29 : vector<1x8x8xbf16> to vector<8x8xbf16>
    %cst_18 = arith.constant dense<0.000000e+00> : vector<8x8xf32>
    %31 = tpu.matmul %28, %30, %cst_18 {dimension_numbers = #tpu.dot_dimension_numbers<[1], [0], [0], [1], [0, 0, 1, 1], [], []>} : vector<8x8xbf16>, vector<8x8xbf16>, vector<8x8xf32> -> vector<8x8xf32>
    %32 = vector.broadcast %27 : vector<8x1xf32> to vector<8x8xf32>
    %33 = arith.mulf %31, %32 : vector<8x8xf32>
    %34 = arith.truncf %33 : vector<8x8xf32> to vector<8x8xbf16>
    %c0_19 = arith.constant 0 : index
    %c0_20 = arith.constant 0 : index
    %c0_21 = arith.constant 0 : index
    %35 = vector.load %arg9[%c0_19, %c0_20, %c0_21] : memref<4x8x128xbf16, #tpu.memory_space<vmem>>, vector<1x8x128xbf16>
    %36 = vector.shape_cast %35 : vector<1x8x128xbf16> to vector<8x128xbf16>
    %cst_22 = arith.constant dense<0.000000e+00> : vector<8x128xf32>
    %37 = tpu.matmul %34, %36, %cst_22 {dimension_numbers = #tpu.dot_dimension_numbers<[1], [0], [0], [1], [0, 0, 1, 1], [], []>} : vector<8x8xbf16>, vector<8x128xbf16>, vector<8x128xf32> -> vector<8x128xf32>
    %38 = arith.addf %8, %37 : vector<8x128xf32>
    %c1 = arith.constant 1 : index
    %c0_23 = arith.constant 0 : index
    %c0_24 = arith.constant 0 : index
    %39 = vector.load %arg3[%c1, %c0_23, %c0_24] : memref<4x32x8xbf16, #tpu.memory_space<vmem>>, vector<1x32x8xbf16>
    %40 = vector.shape_cast %39 : vector<1x32x8xbf16> to vector<32x8xbf16>
    %cst_25 = arith.constant dense<0.000000e+00> : vector<8x8xf32>
    %41 = tpu.matmul %7, %40, %cst_25 {dimension_numbers = #tpu.dot_dimension_numbers<[1], [0], [0], [1], [0, 0, 1, 1], [], []>} : vector<8x32xbf16>, vector<32x8xbf16>, vector<8x8xf32> -> vector<8x8xf32>
    %c1_26 = arith.constant 1 : index
    %c0_27 = arith.constant 0 : index
    %c0_28 = arith.constant 0 : index
    %42 = vector.load %arg6[%c1_26, %c0_27, %c0_28] : memref<4x1x8xf32, #tpu.memory_space<vmem>>, vector<1x1x8xf32>
    %43 = vector.shape_cast %42 : vector<1x1x8xf32> to vector<1x8xf32>
    %44 = vector.broadcast %43 : vector<1x8xf32> to vector<8x8xf32>
    %45 = arith.addf %41, %44 : vector<8x8xf32>
    %46 = arith.truncf %45 : vector<8x8xf32> to vector<8x8xbf16>
    %c1_29 = arith.constant 1 : index
    %c0_30 = arith.constant 0 : index
    %c0_31 = arith.constant 0 : index
    %47 = vector.load %arg12[%c1_29, %c0_30, %c0_31] : memref<4x8x8xbf16, #tpu.memory_space<vmem>>, vector<1x8x8xbf16>
    %48 = vector.shape_cast %47 : vector<1x8x8xbf16> to vector<8x8xbf16>
    %cst_32 = arith.constant dense<0.000000e+00> : vector<8x8xf32>
    %49 = tpu.matmul %46, %48, %cst_32 {dimension_numbers = #tpu.dot_dimension_numbers<[1], [0], [0], [1], [0, 0, 1, 1], [], []>} : vector<8x8xbf16>, vector<8x8xbf16>, vector<8x8xf32> -> vector<8x8xf32>
    %cst_33 = arith.constant dense<0xFF800000> : vector<8xf32>
    %50 = vector.multi_reduction <maximumf>, %49, %cst_33 [1] : vector<8x8xf32> to vector<8xf32>
    %51 = vector.shape_cast %50 : vector<8xf32> to vector<8x1xf32>
    %52 = vector.broadcast %51 : vector<8x1xf32> to vector<8x8xf32>
    %53 = arith.subf %49, %52 : vector<8x8xf32>
    %54 = math.exp %53 : vector<8x8xf32>
    %cst_34 = arith.constant dense<0.000000e+00> : vector<8xf32>
    %55 = vector.multi_reduction <add>, %54, %cst_34 [1] : vector<8x8xf32> to vector<8xf32>
    %56 = vector.shape_cast %55 : vector<8xf32> to vector<8x1xf32>
    %57 = tpu.reciprocal %56 {approx = true} : vector<8x1xf32> -> vector<8x1xf32>
    %58 = arith.truncf %54 : vector<8x8xf32> to vector<8x8xbf16>
    %c1_35 = arith.constant 1 : index
    %c0_36 = arith.constant 0 : index
    %c0_37 = arith.constant 0 : index
    %59 = vector.load %arg13[%c1_35, %c0_36, %c0_37] : memref<4x8x8xbf16, #tpu.memory_space<vmem>>, vector<1x8x8xbf16>
    %60 = vector.shape_cast %59 : vector<1x8x8xbf16> to vector<8x8xbf16>
    %cst_38 = arith.constant dense<0.000000e+00> : vector<8x8xf32>
    %61 = tpu.matmul %58, %60, %cst_38 {dimension_numbers = #tpu.dot_dimension_numbers<[1], [0], [0], [1], [0, 0, 1, 1], [], []>} : vector<8x8xbf16>, vector<8x8xbf16>, vector<8x8xf32> -> vector<8x8xf32>
    %62 = vector.broadcast %57 : vector<8x1xf32> to vector<8x8xf32>
    %63 = arith.mulf %61, %62 : vector<8x8xf32>
    %64 = arith.truncf %63 : vector<8x8xf32> to vector<8x8xbf16>
    %c1_39 = arith.constant 1 : index
    %c0_40 = arith.constant 0 : index
    %c0_41 = arith.constant 0 : index
    %65 = vector.load %arg9[%c1_39, %c0_40, %c0_41] : memref<4x8x128xbf16, #tpu.memory_space<vmem>>, vector<1x8x128xbf16>
    %66 = vector.shape_cast %65 : vector<1x8x128xbf16> to vector<8x128xbf16>
    %cst_42 = arith.constant dense<0.000000e+00> : vector<8x128xf32>
    %67 = tpu.matmul %64, %66, %cst_42 {dimension_numbers = #tpu.dot_dimension_numbers<[1], [0], [0], [1], [0, 0, 1, 1], [], []>} : vector<8x8xbf16>, vector<8x128xbf16>, vector<8x128xf32> -> vector<8x128xf32>
    %68 = arith.addf %38, %67 : vector<8x128xf32>
    %c2 = arith.constant 2 : index
    %c0_43 = arith.constant 0 : index
    %c0_44 = arith.constant 0 : index
    %69 = vector.load %arg3[%c2, %c0_43, %c0_44] : memref<4x32x8xbf16, #tpu.memory_space<vmem>>, vector<1x32x8xbf16>
    %70 = vector.shape_cast %69 : vector<1x32x8xbf16> to vector<32x8xbf16>
    %cst_45 = arith.constant dense<0.000000e+00> : vector<8x8xf32>
    %71 = tpu.matmul %7, %70, %cst_45 {dimension_numbers = #tpu.dot_dimension_numbers<[1], [0], [0], [1], [0, 0, 1, 1], [], []>} : vector<8x32xbf16>, vector<32x8xbf16>, vector<8x8xf32> -> vector<8x8xf32>
    %c2_46 = arith.constant 2 : index
    %c0_47 = arith.constant 0 : index
    %c0_48 = arith.constant 0 : index
    %72 = vector.load %arg6[%c2_46, %c0_47, %c0_48] : memref<4x1x8xf32, #tpu.memory_space<vmem>>, vector<1x1x8xf32>
    %73 = vector.shape_cast %72 : vector<1x1x8xf32> to vector<1x8xf32>
    %74 = vector.broadcast %73 : vector<1x8xf32> to vector<8x8xf32>
    %75 = arith.addf %71, %74 : vector<8x8xf32>
    %76 = arith.truncf %75 : vector<8x8xf32> to vector<8x8xbf16>
    %c2_49 = arith.constant 2 : index
    %c0_50 = arith.constant 0 : index
    %c0_51 = arith.constant 0 : index
    %77 = vector.load %arg12[%c2_49, %c0_50, %c0_51] : memref<4x8x8xbf16, #tpu.memory_space<vmem>>, vector<1x8x8xbf16>
    %78 = vector.shape_cast %77 : vector<1x8x8xbf16> to vector<8x8xbf16>
    %cst_52 = arith.constant dense<0.000000e+00> : vector<8x8xf32>
    %79 = tpu.matmul %76, %78, %cst_52 {dimension_numbers = #tpu.dot_dimension_numbers<[1], [0], [0], [1], [0, 0, 1, 1], [], []>} : vector<8x8xbf16>, vector<8x8xbf16>, vector<8x8xf32> -> vector<8x8xf32>
    %cst_53 = arith.constant dense<0xFF800000> : vector<8xf32>
    %80 = vector.multi_reduction <maximumf>, %79, %cst_53 [1] : vector<8x8xf32> to vector<8xf32>
    %81 = vector.shape_cast %80 : vector<8xf32> to vector<8x1xf32>
    %82 = vector.broadcast %81 : vector<8x1xf32> to vector<8x8xf32>
    %83 = arith.subf %79, %82 : vector<8x8xf32>
    %84 = math.exp %83 : vector<8x8xf32>
    %cst_54 = arith.constant dense<0.000000e+00> : vector<8xf32>
    %85 = vector.multi_reduction <add>, %84, %cst_54 [1] : vector<8x8xf32> to vector<8xf32>
    %86 = vector.shape_cast %85 : vector<8xf32> to vector<8x1xf32>
    %87 = tpu.reciprocal %86 {approx = true} : vector<8x1xf32> -> vector<8x1xf32>
    %88 = arith.truncf %84 : vector<8x8xf32> to vector<8x8xbf16>
    %c2_55 = arith.constant 2 : index
    %c0_56 = arith.constant 0 : index
    %c0_57 = arith.constant 0 : index
    %89 = vector.load %arg13[%c2_55, %c0_56, %c0_57] : memref<4x8x8xbf16, #tpu.memory_space<vmem>>, vector<1x8x8xbf16>
    %90 = vector.shape_cast %89 : vector<1x8x8xbf16> to vector<8x8xbf16>
    %cst_58 = arith.constant dense<0.000000e+00> : vector<8x8xf32>
    %91 = tpu.matmul %88, %90, %cst_58 {dimension_numbers = #tpu.dot_dimension_numbers<[1], [0], [0], [1], [0, 0, 1, 1], [], []>} : vector<8x8xbf16>, vector<8x8xbf16>, vector<8x8xf32> -> vector<8x8xf32>
    %92 = vector.broadcast %87 : vector<8x1xf32> to vector<8x8xf32>
    %93 = arith.mulf %91, %92 : vector<8x8xf32>
    %94 = arith.truncf %93 : vector<8x8xf32> to vector<8x8xbf16>
    %c2_59 = arith.constant 2 : index
    %c0_60 = arith.constant 0 : index
    %c0_61 = arith.constant 0 : index
    %95 = vector.load %arg9[%c2_59, %c0_60, %c0_61] : memref<4x8x128xbf16, #tpu.memory_space<vmem>>, vector<1x8x128xbf16>
    %96 = vector.shape_cast %95 : vector<1x8x128xbf16> to vector<8x128xbf16>
    %cst_62 = arith.constant dense<0.000000e+00> : vector<8x128xf32>
    %97 = tpu.matmul %94, %96, %cst_62 {dimension_numbers = #tpu.dot_dimension_numbers<[1], [0], [0], [1], [0, 0, 1, 1], [], []>} : vector<8x8xbf16>, vector<8x128xbf16>, vector<8x128xf32> -> vector<8x128xf32>
    %98 = arith.addf %68, %97 : vector<8x128xf32>
    %c3 = arith.constant 3 : index
    %c0_63 = arith.constant 0 : index
    %c0_64 = arith.constant 0 : index
    %99 = vector.load %arg3[%c3, %c0_63, %c0_64] : memref<4x32x8xbf16, #tpu.memory_space<vmem>>, vector<1x32x8xbf16>
    %100 = vector.shape_cast %99 : vector<1x32x8xbf16> to vector<32x8xbf16>
    %cst_65 = arith.constant dense<0.000000e+00> : vector<8x8xf32>
    %101 = tpu.matmul %7, %100, %cst_65 {dimension_numbers = #tpu.dot_dimension_numbers<[1], [0], [0], [1], [0, 0, 1, 1], [], []>} : vector<8x32xbf16>, vector<32x8xbf16>, vector<8x8xf32> -> vector<8x8xf32>
    %c3_66 = arith.constant 3 : index
    %c0_67 = arith.constant 0 : index
    %c0_68 = arith.constant 0 : index
    %102 = vector.load %arg6[%c3_66, %c0_67, %c0_68] : memref<4x1x8xf32, #tpu.memory_space<vmem>>, vector<1x1x8xf32>
    %103 = vector.shape_cast %102 : vector<1x1x8xf32> to vector<1x8xf32>
    %104 = vector.broadcast %103 : vector<1x8xf32> to vector<8x8xf32>
    %105 = arith.addf %101, %104 : vector<8x8xf32>
    %106 = arith.truncf %105 : vector<8x8xf32> to vector<8x8xbf16>
    %c3_69 = arith.constant 3 : index
    %c0_70 = arith.constant 0 : index
    %c0_71 = arith.constant 0 : index
    %107 = vector.load %arg12[%c3_69, %c0_70, %c0_71] : memref<4x8x8xbf16, #tpu.memory_space<vmem>>, vector<1x8x8xbf16>
    %108 = vector.shape_cast %107 : vector<1x8x8xbf16> to vector<8x8xbf16>
    %cst_72 = arith.constant dense<0.000000e+00> : vector<8x8xf32>
    %109 = tpu.matmul %106, %108, %cst_72 {dimension_numbers = #tpu.dot_dimension_numbers<[1], [0], [0], [1], [0, 0, 1, 1], [], []>} : vector<8x8xbf16>, vector<8x8xbf16>, vector<8x8xf32> -> vector<8x8xf32>
    %cst_73 = arith.constant dense<0xFF800000> : vector<8xf32>
    %110 = vector.multi_reduction <maximumf>, %109, %cst_73 [1] : vector<8x8xf32> to vector<8xf32>
    %111 = vector.shape_cast %110 : vector<8xf32> to vector<8x1xf32>
    %112 = vector.broadcast %111 : vector<8x1xf32> to vector<8x8xf32>
    %113 = arith.subf %109, %112 : vector<8x8xf32>
    %114 = math.exp %113 : vector<8x8xf32>
    %cst_74 = arith.constant dense<0.000000e+00> : vector<8xf32>
    %115 = vector.multi_reduction <add>, %114, %cst_74 [1] : vector<8x8xf32> to vector<8xf32>
    %116 = vector.shape_cast %115 : vector<8xf32> to vector<8x1xf32>
    %117 = tpu.reciprocal %116 {approx = true} : vector<8x1xf32> -> vector<8x1xf32>
    %118 = arith.truncf %114 : vector<8x8xf32> to vector<8x8xbf16>
    %c3_75 = arith.constant 3 : index
    %c0_76 = arith.constant 0 : index
    %c0_77 = arith.constant 0 : index
    %119 = vector.load %arg13[%c3_75, %c0_76, %c0_77] : memref<4x8x8xbf16, #tpu.memory_space<vmem>>, vector<1x8x8xbf16>
    %120 = vector.shape_cast %119 : vector<1x8x8xbf16> to vector<8x8xbf16>
    %cst_78 = arith.constant dense<0.000000e+00> : vector<8x8xf32>
    %121 = tpu.matmul %118, %120, %cst_78 {dimension_numbers = #tpu.dot_dimension_numbers<[1], [0], [0], [1], [0, 0, 1, 1], [], []>} : vector<8x8xbf16>, vector<8x8xbf16>, vector<8x8xf32> -> vector<8x8xf32>
    %122 = vector.broadcast %117 : vector<8x1xf32> to vector<8x8xf32>
    %123 = arith.mulf %121, %122 : vector<8x8xf32>
    %124 = arith.truncf %123 : vector<8x8xf32> to vector<8x8xbf16>
    %c3_79 = arith.constant 3 : index
    %c0_80 = arith.constant 0 : index
    %c0_81 = arith.constant 0 : index
    %125 = vector.load %arg9[%c3_79, %c0_80, %c0_81] : memref<4x8x128xbf16, #tpu.memory_space<vmem>>, vector<1x8x128xbf16>
    %126 = vector.shape_cast %125 : vector<1x8x128xbf16> to vector<8x128xbf16>
    %cst_82 = arith.constant dense<0.000000e+00> : vector<8x128xf32>
    %127 = tpu.matmul %124, %126, %cst_82 {dimension_numbers = #tpu.dot_dimension_numbers<[1], [0], [0], [1], [0, 0, 1, 1], [], []>} : vector<8x8xbf16>, vector<8x128xbf16>, vector<8x128xf32> -> vector<8x128xf32>
    %128 = arith.addf %98, %127 : vector<8x128xf32>
    %c0_83 = arith.constant 0 : index
    %c0_84 = arith.constant 0 : index
    %129 = vector.load %arg10[%c0_83, %c0_84] : memref<1x128xf32, #tpu.memory_space<vmem>>, vector<1x128xf32>
    %130 = vector.broadcast %129 : vector<1x128xf32> to vector<8x128xf32>
    %131 = arith.addf %128, %130 : vector<8x128xf32>
    %c0_85 = arith.constant 0 : index
    %c0_86 = arith.constant 0 : index
    %c0_87 = arith.constant 0 : index
    %132 = vector.load %arg11[%c0_85, %c0_86, %c0_87] : memref<1x8x128xf32, #tpu.memory_space<vmem>>, vector<1x8x128xf32>
    %133 = vector.shape_cast %132 : vector<1x8x128xf32> to vector<8x128xf32>
    %134 = vector.shape_cast %131 : vector<8x128xf32> to vector<1x8x128xf32>
    tpu.vector_store %arg11[%c0_85, %c0_86, %c0_87], %134 {strides = array<i32>} : memref<1x8x128xf32, #tpu.memory_space<vmem>>, vector<1x8x128xf32>,
    return
  }
  func.func @transform_0(%arg0: i32, %arg1: i32) -> (i32, i32, i32) {
    %c0_i32 = arith.constant 0 : i32
    %c0_i32_0 = arith.constant 0 : i32
    %c0_i32_1 = arith.constant 0 : i32
    return %arg0, %c0_i32, %c0_i32_0 : i32, i32, i32
  }
  func.func @transform_1(%arg0: i32, %arg1: i32) -> (i32, i32, i32) {
    %c0_i32 = arith.constant 0 : i32
    %c0_i32_0 = arith.constant 0 : i32
    %c0_i32_1 = arith.constant 0 : i32
    %c0_i32_2 = arith.constant 0 : i32
    return %c0_i32, %c0_i32_0, %c0_i32_1 : i32, i32, i32
  }
  func.func @transform_2(%arg0: i32, %arg1: i32) -> (i32, i32, i32) {
    %c0_i32 = arith.constant 0 : i32
    %c0_i32_0 = arith.constant 0 : i32
    %c0_i32_1 = arith.constant 0 : i32
    %c0_i32_2 = arith.constant 0 : i32
    return %c0_i32, %c0_i32_0, %c0_i32_1 : i32, i32, i32
  }
  func.func @transform_3(%arg0: i32, %arg1: i32) -> (i32, i32, i32) {
    %c0_i32 = arith.constant 0 : i32
    %c0_i32_0 = arith.constant 0 : i32
    %c0_i32_1 = arith.constant 0 : i32
    %c0_i32_2 = arith.constant 0 : i32
    return %c0_i32, %c0_i32_0, %c0_i32_1 : i32, i32, i32
  }
  func.func @transform_4(%arg0: i32, %arg1: i32) -> (i32, i32, i32) {
    %c0_i32 = arith.constant 0 : i32
    %c0_i32_0 = arith.constant 0 : i32
    %c0_i32_1 = arith.constant 0 : i32
    %c0_i32_2 = arith.constant 0 : i32
    return %c0_i32, %c0_i32_0, %c0_i32_1 : i32, i32, i32
  }
  func.func @transform_5(%arg0: i32, %arg1: i32) -> (i32, i32, i32) {
    %c0_i32 = arith.constant 0 : i32
    %c0_i32_0 = arith.constant 0 : i32
    %c0_i32_1 = arith.constant 0 : i32
    %c0_i32_2 = arith.constant 0 : i32
    return %c0_i32, %c0_i32_0, %c0_i32_1 : i32, i32, i32
  }
  func.func @transform_6(%arg0: i32, %arg1: i32) -> (i32, i32, i32) {
    %c0_i32 = arith.constant 0 : i32
    %c0_i32_0 = arith.constant 0 : i32
    %c0_i32_1 = arith.constant 0 : i32
    %c0_i32_2 = arith.constant 0 : i32
    return %c0_i32, %c0_i32_0, %c0_i32_1 : i32, i32, i32
  }
  func.func @transform_7(%arg0: i32, %arg1: i32) -> (i32, i32, i32) {
    %c0_i32 = arith.constant 0 : i32
    %c0_i32_0 = arith.constant 0 : i32
    %c0_i32_1 = arith.constant 0 : i32
    %c0_i32_2 = arith.constant 0 : i32
    return %c0_i32, %c0_i32_0, %c0_i32_1 : i32, i32, i32
  }
  func.func @transform_8(%arg0: i32, %arg1: i32) -> (i32, i32) {
    %c0_i32 = arith.constant 0 : i32
    %c0_i32_0 = arith.constant 0 : i32
    %c0_i32_1 = arith.constant 0 : i32
    return %c0_i32, %c0_i32_0 : i32, i32
  }
  func.func @transform_9(%arg0: i32, %arg1: i32) -> (i32, i32, i32) {
    %c0_i32 = arith.constant 0 : i32
    %c0_i32_0 = arith.constant 0 : i32
    return %arg0, %arg1, %c0_i32 : i32, i32, i32
  }
}

</mosaic_0001>

<llo_original>
// kernel: tpu_custom_call.1
$region0: #{tpu_custom_call.1}
  #allocation0 [shape = 'u32[]', space=smem, size = 0x4, offset = 0x4, fixed_abs, tag = 'smem constant byte address 0x4 - core index']
  #allocation1 [shape = 'u32[144,128]{1,0:T(1,128)}', space=vmem, size = 0x12000, scoped, tag = 'internal scratch']
  #allocation2 [shape = 'bf16[4,8,8]{2,1,0:T(8,128)(2,1)}', space=vmem, size = 0x2000, scoped, tag = 'scratch operand']
  #allocation3 [shape = 'bf16[4,8,8]{2,1,0:T(8,128)(2,1)}', space=vmem, size = 0x2000, scoped, tag = 'scratch operand']
  %s0 = inlined_call_operand.vmem [shape: bf16[2,8,32], index: 0, kind: input, shape index: {}]
  %s1 = inlined_call_operand.vmem [shape: bf16[4,32,8], index: 1, kind: input, shape index: {}]
  %s2 = inlined_call_operand.vmem [shape: bf16[4,32,8], index: 2, kind: input, shape index: {}]
  %s3 = inlined_call_operand.vmem [shape: bf16[4,32,8], index: 3, kind: input, shape index: {}]
  %s4 = inlined_call_operand.vmem [shape: f32[4,1,8], index: 4, kind: input, shape index: {}]
  %s5 = inlined_call_operand.vmem [shape: f32[4,1,8], index: 5, kind: input, shape index: {}]
  %s6 = inlined_call_operand.vmem [shape: f32[4,1,8], index: 6, kind: input, shape index: {}]
  %s7 = inlined_call_operand.vmem [shape: bf16[4,8,128], index: 7, kind: input, shape index: {}]
  %s8 = inlined_call_operand.vmem [shape: f32[1,128], index: 8, kind: input, shape index: {}]
  %s9 = inlined_call_operand.hbm [shape: f32[2,8,128], index: 9, kind: output, shape index: {}]
  %s10 = sld [smem:[#allocation0]]
  $region73: #{tpu_custom_call.1} parent=0
    _
  %s12 = ssub.s32 1, %s10
  %s13 = scalar_select 0, %s12, %s10
  $region1: #{tpu_custom_call.1} parent=0
    #allocation4 [shape = 'u8[8192]{0}', space=vmem, size = 0x2000, scoped, tag = 'output window, operand 0']
    #allocation5 [shape = 's32[2]{0}', space=sflag, size = 0x8, scoped, tag = 'scoped memory for tpu_custom_call.1']
    %14 = vsyncpa [#allocation5], 0
    %s15 = scalar_lea.sflag [#allocation5], 1
    %16 = vsyncpa %s15, 0
    loop: start=0, step=1, limit=4
    $region2: #{tpu_custom_call.1} parent=1 // loop_pre_header
      _
    $region3: #{tpu_custom_call.1} parent=1 // loop_header
      %s18 = sphi 0, %s22
      %p19 = scmp.ge.s32.totalorder %s18, 4
      %s25 = sphi 0, %s37
      %s26 = sphi 0, %s33
      %s27 = sphi 0, %s25
      %s28 = sphi 0, %s26
      %s29 = sphi 0, %s27
      %s30 = sphi 0, %s28
      %s40 = sphi 0, %s42
      %s43 = sphi 0, %s40
      %s44 = sphi 0, %s43
      %s60 = sphi 0, %s44
      %s64 = sphi 0, %s64
      %s66 = sphi 0, %s64
      %s67 = sphi 0, %s66
      %s81 = sphi 0, %s67
      %s85 = sphi 0, %s85
      %s87 = sphi 0, %s85
      %s88 = sphi 0, %s87
      %s102 = sphi 0, %s88
      %s106 = sphi 0, %s106
      %s108 = sphi 0, %s106
      %s109 = sphi 0, %s108
      %s123 = sphi 0, %s109
      %s127 = sphi 0, %s127
      %s129 = sphi 0, %s127
      %s130 = sphi 0, %s129
      %s144 = sphi 0, %s130
      %s148 = sphi 0, %s148
      %s150 = sphi 0, %s148
      %s151 = sphi 0, %s150
      %s165 = sphi 0, %s151
      %s169 = sphi 0, %s169
      %s171 = sphi 0, %s169
      %s172 = sphi 0, %s171
      %s186 = sphi 0, %s172
      %s190 = sphi 0, %s190
      %s192 = sphi 0, %s190
      %s193 = sphi 0, %s192
      %s207 = sphi 0, %s193
      %s211 = sphi 0, %s211
      %s213 = sphi 0, %s211
      %s214 = sphi 0, %s213
      %s228 = sphi 0, %s214
      %s236 = sphi 0, %s238
      %s239 = sphi 0, %s236
      %s240 = sphi 0, %s239
      %s256 = sphi 0, %s240
    $region4: #{tpu_custom_call.1} parent=1 // loop_header_branch
      %21 = sbr.rel (%p19) target = $region8
    $region5: #{tpu_custom_call.1} parent=1 // loop_body
      %s23 = ssub.s32 %s18, 1
      %s24 = ssub.s32 %s18, 2
      %s31 = sadd.s32 1, %s26
      %p32 = scmp.ge.s32.totalorder %s31, 1
      %s33 = scalar_select %p32, 0, %s31
      %s34 = sadd.s32 1, %s25
      %s35 = scalar_select %p32, %s34, %s25
      %p36 = scmp.ge.s32.totalorder %s35, 2
      %s37 = scalar_select %p36, 0, %s35
      %s38 = ssub.s32 %s25, %s37
      %p39 = scmp.eq.s32.totalorder %s38, 0
      %s41 = sadd.s32 %s40, 1
      %s42 = scalar_select %p39, %s40, %s41
      %p45 = pneg %p39
      %p46 = scmp.eq.s32.totalorder %s18, 1
      %p47 = por %p45, %p46
      %p48 = scmp.ne.s32.totalorder %s40, %s43
      %p49 = scmp.eq.s32.totalorder %s18, 0
      %p50 = por %p48, %p49
      %p51 = scmp.ne.s32.totalorder %s40, %s43
      %p52 = scmp.eq.s32.totalorder %s23, 1
      %p53 = por %p51, %p52
      %p54 = scmp.ne.s32.totalorder %s43, %s44
      %p55 = scmp.eq.s32.totalorder %s23, 0
      %p56 = por %p54, %p55
      %p57 = scmp.ne.s32.totalorder %s43, %s44
      %p58 = scmp.eq.s32.totalorder %s24, 1
      %p59 = por %p57, %p58
      %p61 = scmp.ne.s32.totalorder %s44, %s60
      %p62 = scmp.eq.s32.totalorder %s24, 0
      %p63 = por %p61, %p62
      %s65 = sadd.s32 %s64, 1
      %p68 = scmp.eq.s32.totalorder %s18, 1
      %p69 = scmp.ne.s32.totalorder %s64, %s66
      %p70 = scmp.eq.s32.totalorder %s18, 0
      %p71 = por %p69, %p70
      %p72 = scmp.ne.s32.totalorder %s64, %s66
      %p73 = scmp.eq.s32.totalorder %s23, 1
      %p74 = por %p72, %p73
      %p75 = scmp.ne.s32.totalorder %s66, %s67
      %p76 = scmp.eq.s32.totalorder %s23, 0
      %p77 = por %p75, %p76
      %p78 = scmp.ne.s32.totalorder %s66, %s67
      %p79 = scmp.eq.s32.totalorder %s24, 1
      %p80 = por %p78, %p79
      %p82 = scmp.ne.s32.totalorder %s67, %s81
      %p83 = scmp.eq.s32.totalorder %s24, 0
      %p84 = por %p82, %p83
      %s86 = sadd.s32 %s85, 1
      %p89 = scmp.eq.s32.totalorder %s18, 1
      %p90 = scmp.ne.s32.totalorder %s85, %s87
      %p91 = scmp.eq.s32.totalorder %s18, 0
      %p92 = por %p90, %p91
      %p93 = scmp.ne.s32.totalorder %s85, %s87
      %p94 = scmp.eq.s32.totalorder %s23, 1
      %p95 = por %p93, %p94
      %p96 = scmp.ne.s32.totalorder %s87, %s88
      %p97 = scmp.eq.s32.totalorder %s23, 0
      %p98 = por %p96, %p97
      %p99 = scmp.ne.s32.totalorder %s87, %s88
      %p100 = scmp.eq.s32.totalorder %s24, 1
      %p101 = por %p99, %p100
      %p103 = scmp.ne.s32.totalorder %s88, %s102
      %p104 = scmp.eq.s32.totalorder %s24, 0
      %p105 = por %p103, %p104
      %s107 = sadd.s32 %s106, 1
      %p110 = scmp.eq.s32.totalorder %s18, 1
      %p111 = scmp.ne.s32.totalorder %s106, %s108
      %p112 = scmp.eq.s32.totalorder %s18, 0
      %p113 = por %p111, %p112
      %p114 = scmp.ne.s32.totalorder %s106, %s108
      %p115 = scmp.eq.s32.totalorder %s23, 1
      %p116 = por %p114, %p115
      %p117 = scmp.ne.s32.totalorder %s108, %s109
      %p118 = scmp.eq.s32.totalorder %s23, 0
      %p119 = por %p117, %p118
      %p120 = scmp.ne.s32.totalorder %s108, %s109
      %p121 = scmp.eq.s32.totalorder %s24, 1
      %p122 = por %p120, %p121
      %p124 = scmp.ne.s32.totalorder %s109, %s123
      %p125 = scmp.eq.s32.totalorder %s24, 0
      %p126 = por %p124, %p125
      %s128 = sadd.s32 %s127, 1
      %p131 = scmp.eq.s32.totalorder %s18, 1
      %p132 = scmp.ne.s32.totalorder %s127, %s129
      %p133 = scmp.eq.s32.totalorder %s18, 0
      %p134 = por %p132, %p133
      %p135 = scmp.ne.s32.totalorder %s127, %s129
      %p136 = scmp.eq.s32.totalorder %s23, 1
      %p137 = por %p135, %p136
      %p138 = scmp.ne.s32.totalorder %s129, %s130
      %p139 = scmp.eq.s32.totalorder %s23, 0
      %p140 = por %p138, %p139
      %p141 = scmp.ne.s32.totalorder %s129, %s130
      %p142 = scmp.eq.s32.totalorder %s24, 1
      %p143 = por %p141, %p142
      %p145 = scmp.ne.s32.totalorder %s130, %s144
      %p146 = scmp.eq.s32.totalorder %s24, 0
      %p147 = por %p145, %p146
      %s149 = sadd.s32 %s148, 1
      %p152 = scmp.eq.s32.totalorder %s18, 1
      %p153 = scmp.ne.s32.totalorder %s148, %s150
      %p154 = scmp.eq.s32.totalorder %s18, 0
      %p155 = por %p153, %p154
      %p156 = scmp.ne.s32.totalorder %s148, %s150
      %p157 = scmp.eq.s32.totalorder %s23, 1
      %p158 = por %p156, %p157
      %p159 = scmp.ne.s32.totalorder %s150, %s151
      %p160 = scmp.eq.s32.totalorder %s23, 0
      %p161 = por %p159, %p160
      %p162 = scmp.ne.s32.totalorder %s150, %s151
      %p163 = scmp.eq.s32.totalorder %s24, 1
      %p164 = por %p162, %p163
      %p166 = scmp.ne.s32.totalorder %s151, %s165
      %p167 = scmp.eq.s32.totalorder %s24, 0
      %p168 = por %p166, %p167
      %s170 = sadd.s32 %s169, 1
      %p173 = scmp.eq.s32.totalorder %s18, 1
      %p174 = scmp.ne.s32.totalorder %s169, %s171
      %p175 = scmp.eq.s32.totalorder %s18, 0
      %p176 = por %p174, %p175
      %p177 = scmp.ne.s32.totalorder %s169, %s171
      %p178 = scmp.eq.s32.totalorder %s23, 1
      %p179 = por %p177, %p178
      %p180 = scmp.ne.s32.totalorder %s171, %s172
      %p181 = scmp.eq.s32.totalorder %s23, 0
      %p182 = por %p180, %p181
      %p183 = scmp.ne.s32.totalorder %s171, %s172
      %p184 = scmp.eq.s32.totalorder %s24, 1
      %p185 = por %p183, %p184
      %p187 = scmp.ne.s32.totalorder %s172, %s186
      %p188 = scmp.eq.s32.totalorder %s24, 0
      %p189 = por %p187, %p188
      %s191 = sadd.s32 %s190, 1
      %p194 = scmp.eq.s32.totalorder %s18, 1
      %p195 = scmp.ne.s32.totalorder %s190, %s192
      %p196 = scmp.eq.s32.totalorder %s18, 0
      %p197 = por %p195, %p196
      %p198 = scmp.ne.s32.totalorder %s190, %s192
      %p199 = scmp.eq.s32.totalorder %s23, 1
      %p200 = por %p198, %p199
      %p201 = scmp.ne.s32.totalorder %s192, %s193
      %p202 = scmp.eq.s32.totalorder %s23, 0
      %p203 = por %p201, %p202
      %p204 = scmp.ne.s32.totalorder %s192, %s193
      %p205 = scmp.eq.s32.totalorder %s24, 1
      %p206 = por %p204, %p205
      %p208 = scmp.ne.s32.totalorder %s193, %s207
      %p209 = scmp.eq.s32.totalorder %s24, 0
      %p210 = por %p208, %p209
      %s212 = sadd.s32 %s211, 1
      %p215 = scmp.eq.s32.totalorder %s18, 1
      %p216 = scmp.ne.s32.totalorder %s211, %s213
      %p217 = scmp.eq.s32.totalorder %s18, 0
      %p218 = por %p216, %p217
      %p219 = scmp.ne.s32.totalorder %s211, %s213
      %p220 = scmp.eq.s32.totalorder %s23, 1
      %p221 = por %p219, %p220
      %p222 = scmp.ne.s32.totalorder %s213, %s214
      %p223 = scmp.eq.s32.totalorder %s23, 0
      %p224 = por %p222, %p223
      %p225 = scmp.ne.s32.totalorder %s213, %s214
      %p226 = scmp.eq.s32.totalorder %s24, 1
      %p227 = por %p225, %p226
      %p229 = scmp.ne.s32.totalorder %s214, %s228
      %p230 = scmp.eq.s32.totalorder %s24, 0
      %p231 = por %p229, %p230
      %s232 = ssub.s32 %s25, %s37
      %s233 = ssub.s32 %s26, %s33
      %s234 = sor.u32 %s232, %s233
      %p235 = scmp.eq.s32.totalorder %s234, 0
      %s237 = sadd.s32 %s236, 1
      %s238 = scalar_select %p235, %s236, %s237
      %p241 = pneg %p235
      %p242 = scmp.eq.s32.totalorder %s18, 1
      %p243 = por %p241, %p242
      %p244 = scmp.ne.s32.totalorder %s236, %s239
      %p245 = scmp.eq.s32.totalorder %s18, 0
      %p246 = por %p244, %p245
      %p247 = scmp.ne.s32.totalorder %s236, %s239
      %p248 = scmp.eq.s32.totalorder %s23, 1
      %p249 = por %p247, %p248
      %p250 = scmp.ne.s32.totalorder %s239, %s240
      %p251 = scmp.eq.s32.totalorder %s23, 0
      %p252 = por %p250, %p251
      %p253 = scmp.ne.s32.totalorder %s239, %s240
      %p254 = scmp.eq.s32.totalorder %s24, 1
      %p255 = por %p253, %p254
      %p257 = scmp.ne.s32.totalorder %s240, %s256
      %p258 = scmp.eq.s32.totalorder %s24, 0
      %p259 = por %p257, %p258
      %p260 = scmp.le.s32.totalorder 1, %s18
      %p261 = scmp.lt.s32.totalorder %s18, 3
      %p262 = pnand %p260, %p261
      %p263 = pneg %p262
      // Predicated region
      $region9: #{tpu_custom_call.1} parent=5 // pred_check
        _
      $region10: #{tpu_custom_call.1} parent=5 // pred_check_branch
        %265 = sbr.rel (%p262) target = $region12
      $region11: #{tpu_custom_call.1} parent=5 // pred_region
        %s266 = ssub.s32 %s18, 1
        // Predicated region
        $region13: #{tpu_custom_call.1} parent=11 // pred_check
          %p267 = pneg %p77
        $region14: #{tpu_custom_call.1} parent=11 // pred_check_branch
          %269 = sbr.rel (%p267) target = $region16
        $region15: #{tpu_custom_call.1} parent=11 // pred_region
          _
        $region16: #{tpu_custom_call.1} parent=11 // pred_fallthru
          _
        // Predicated region
        $region17: #{tpu_custom_call.1} parent=11 // pred_check
          %p270 = pneg %p98
        $region18: #{tpu_custom_call.1} parent=11 // pred_check_branch
          %272 = sbr.rel (%p270) target = $region20
        $region19: #{tpu_custom_call.1} parent=11 // pred_region
          _
        $region20: #{tpu_custom_call.1} parent=11 // pred_fallthru
          _
        // Predicated region
        $region21: #{tpu_custom_call.1} parent=11 // pred_check
          %p273 = pneg %p119
        $region22: #{tpu_custom_call.1} parent=11 // pred_check_branch
          %275 = sbr.rel (%p273) target = $region24
        $region23: #{tpu_custom_call.1} parent=11 // pred_region
          _
        $region24: #{tpu_custom_call.1} parent=11 // pred_fallthru
          _
        // Predicated region
        $region25: #{tpu_custom_call.1} parent=11 // pred_check
          %p276 = pneg %p140
        $region26: #{tpu_custom_call.1} parent=11 // pred_check_branch
          %278 = sbr.rel (%p276) target = $region28
        $region27: #{tpu_custom_call.1} parent=11 // pred_region
          _
        $region28: #{tpu_custom_call.1} parent=11 // pred_fallthru
          _
        // Predicated region
        $region29: #{tpu_custom_call.1} parent=11 // pred_check
          %p279 = pneg %p161
        $region30: #{tpu_custom_call.1} parent=11 // pred_check_branch
          %281 = sbr.rel (%p279) target = $region32
        $region31: #{tpu_custom_call.1} parent=11 // pred_region
          _
        $region32: #{tpu_custom_call.1} parent=11 // pred_fallthru
          _
        // Predicated region
        $region33: #{tpu_custom_call.1} parent=11 // pred_check
          %p282 = pneg %p182
        $region34: #{tpu_custom_call.1} parent=11 // pred_check_branch
          %284 = sbr.rel (%p282) target = $region36
        $region35: #{tpu_custom_call.1} parent=11 // pred_region
          _
        $region36: #{tpu_custom_call.1} parent=11 // pred_fallthru
          _
        // Predicated region
        $region37: #{tpu_custom_call.1} parent=11 // pred_check
          %p285 = pneg %p203
        $region38: #{tpu_custom_call.1} parent=11 // pred_check_branch
          %287 = sbr.rel (%p285) target = $region40
        $region39: #{tpu_custom_call.1} parent=11 // pred_region
          _
        $region40: #{tpu_custom_call.1} parent=11 // pred_fallthru
          _
        // Predicated region
        $region41: #{tpu_custom_call.1} parent=11 // pred_check
          %p288 = pneg %p224
        $region42: #{tpu_custom_call.1} parent=11 // pred_check_branch
          %290 = sbr.rel (%p288) target = $region44
        $region43: #{tpu_custom_call.1} parent=11 // pred_region
          _
        $region44: #{tpu_custom_call.1} parent=11 // pred_fallthru
          _
      $region12: #{tpu_custom_call.1} parent=5 // pred_fallthru
        _
      %p291 = scmp.lt.s32.totalorder %s18, 2
      // Predicated region
      $region45: #{tpu_custom_call.1} parent=5 // pred_check
        %p292 = pneg %p291
      $region46: #{tpu_custom_call.1} parent=5 // pred_check_branch
        %294 = sbr.rel (%p292) target = $region48
      $region47: #{tpu_custom_call.1} parent=5 // pred_region
        // Predicated region
        $region49: #{tpu_custom_call.1} parent=47 // pred_check
          %p295 = pneg %p50
        $region50: #{tpu_custom_call.1} parent=47 // pred_check_branch
          %297 = sbr.rel (%p295) target = $region52
        $region51: #{tpu_custom_call.1} parent=47 // pred_region
          %p298 = scmp.lt.s32.totalorder %s25, 1
          %s299 = scalar_select %p298, %s25, 1
          %s300 = smul.addr %s299, 4
          %s301 = scalar_lea.vmem %s0, %s300
        $region52: #{tpu_custom_call.1} parent=47 // pred_fallthru
          _
      $region48: #{tpu_custom_call.1} parent=5 // pred_fallthru
        _
      %p302 = scmp.le.s32.totalorder 1, %s18
      %p303 = scmp.lt.s32.totalorder %s18, 3
      %p304 = pnand %p302, %p303
      %p305 = pneg %p304
      // Predicated region
      $region53: #{tpu_custom_call.1} parent=5 // pred_check
        _
      $region54: #{tpu_custom_call.1} parent=5 // pred_check_branch
        %307 = sbr.rel (%p304) target = $region56
      $region55: #{tpu_custom_call.1} parent=5 // pred_region
        %s308 = ssub.s32 %s18, 1
        %p309 = scmp.lt.s32.totalorder %s27, 1
        %s310 = scalar_select %p309, %s27, 1
        %s311 = smul.addr %s310, 4
        %s312 = scalar_lea.vmem %s0, %s311
        %p313 = pneg %p56
        %p314 = pneg %p53
        %p315 = pneg %p77
        %p316 = pneg %p74
        %p317 = pneg %p98
        %p318 = pneg %p95
        %p319 = pneg %p119
        %p320 = pneg %p116
        %p321 = pneg %p140
        %p322 = pneg %p137
        %p323 = pneg %p161
        %p324 = pneg %p158
        %p325 = pneg %p182
        %p326 = pneg %p179
        %p327 = pneg %p203
        %p328 = pneg %p200
        %p329 = pneg %p224
        %p330 = pneg %p221
        %p331 = pneg %p252
        %p332 = pneg %p249
        %s333 = sand.u32 %s239, 1
        %s334 = scalar_lea.sflag [#allocation5], %s333
        %s335 = sand.u32 %s239, 1
        %s336 = smul.addr %s335, 8
        %s337 = scalar_lea.vmem [#allocation4], %s336
        %p338 = scmp.lt.s32.totalorder %s27, 1
        %s339 = scalar_select %p338, %s27, 1
        %s340 = smul.addr %s339, 4
        %s341 = scalar_lea.vmem %s0, %s340
        %p343 = scmp.eq.s32.totalorder %s28, 0
        // Predicated region
        $region57: #{tpu_custom_call.1} parent=55 // pred_check
          %p344 = pneg %p343
        $region58: #{tpu_custom_call.1} parent=55 // pred_check_branch
          %346 = sbr.rel (%p344) target = $region60
        $region59: #{tpu_custom_call.1} parent=55 // pred_region
          %v347 = vld [vmem:[%s341] sm:$0xf]
          %v348 = vld [vmem:[%s2] sm:$0xf]
          %v349 = vld [vmem:[%s2 + $0x4] sm:$0xf]
          %v350 = vld [vmem:[%s2 + $0x8] sm:$0xf]
          %v351 = vld [vmem:[%s2 + $0xc] sm:$0xf]
          %v352 = vld [vmem:[%s5] sm:$0x1]
          %v354 = vlaneseq
          %v355 = vshrl.u32 %v354, 7
          %v356 = vsub.s32 0, %v355
          %v357 = vrot.slane %v352, %v356
          %v363 = vunpack.c.l.b16 %v348
          %v364 = vunpack.c.l.b16 %v349
          %v365 = vunpack.c.l.b16 %v350
          %v366 = vunpack.c.l.b16 %v351
          %v367 = vpack.c.b16 %v364, %v363
          %v368 = vpack.c.b16 %v366, %v365
          %vm371 = vcmask 261120
          %v373 = vsel %vm371, %v347, 0
          %375 = vmatprep.subr.bf16.mxu0 0
          %376 = vmatpush1.bf16.msra.mxu0 0
          %377 = vmatprep.subr.bf16.mxu0 0
          %378 = vmatpush1.bf16.msra.mxu0 0
          %379 = vmatprep.subr.bf16.mxu0 0
          %380 = vmatpush1.bf16.msra.mxu0 0
          %381 = vmatprep.subr.bf16.mxu0 0
          %382 = vmatpush1.bf16.msra.mxu0 0
          %383 = vmatprep.subr.bf16.mxu0 0
          %384 = vmatpush1.bf16.msra.mxu0 0
          %385 = vmatprep.subr.bf16.mxu0 0
          %386 = vmatpush1.bf16.msra.mxu0 0
          %387 = vmatprep.subr.bf16.mxu0 0
          %388 = vmatpush1.bf16.msra.mxu0 %v368
          %389 = vmatprep.subr.bf16.mxu0 0
          %390 = vmatpush1.bf16.msra.mxu0 %v367
          %391 = vmatprep.subr.bf16.mxu0 0
          %392 = vmatpush2.bf16.msra.mxu0 0
          %393 = vmatprep.subr.bf16.mxu0 0
          %394 = vmatpush2.bf16.msra.mxu0 0
          %395 = vmatprep.subr.bf16.mxu0 0
          %396 = vmatpush2.bf16.msra.mxu0 0
          %397 = vmatprep.subr.bf16.mxu0 0
          %398 = vmatpush2.bf16.msra.mxu0 0
          %399 = vmatprep.subr.bf16.mxu0 0
          %400 = vmatpush2.bf16.msra.mxu0 0
          %401 = vmatprep.subr.bf16.mxu0 0
          %402 = vmatpush2.bf16.msra.mxu0 0
          %403 = vmatprep.subr.bf16.mxu0 0
          %404 = vmatpush2.bf16.msra.mxu0 0
          %405 = vmatprep.subr.bf16.mxu0 0
          %406 = vmatpush2.bf16.msra.mxu0 0
          %407 = vmatprep.mubr.bf16.mxu0 0
          %408 = vmatmul.mubr.bf16.gmra.mxu0 %v373
          %v409 = vpop.f32.mrf.mxu0
          %v410 = vadd.f32 %v357, %v409
          %v411 = vpop.f32.mrf.mxu0
          %v412 = vpop.f32.mrf.mxu0
          %v413 = vpop.f32.mrf.mxu0
          %414 = vdwg.mxu0
          %v415 = vld [vmem:[%s3] sm:$0xf]
          %v416 = vld [vmem:[%s3 + $0x4] sm:$0xf]
          %v417 = vld [vmem:[%s3 + $0x8] sm:$0xf]
          %v418 = vld [vmem:[%s3 + $0xc] sm:$0xf]
          %v419 = vld [vmem:[%s6] sm:$0x1]
          %v421 = vlaneseq
          %v422 = vshrl.u32 %v421, 7
          %v423 = vsub.s32 0, %v422
          %v424 = vrot.slane %v419, %v423
          %v430 = vunpack.c.l.b16 %v415
          %v431 = vunpack.c.l.b16 %v416
          %v432 = vunpack.c.l.b16 %v417
          %v433 = vunpack.c.l.b16 %v418
          %v434 = vpack.c.b16 %v431, %v430
          %v435 = vpack.c.b16 %v433, %v432
          %438 = vmatprep.subr.bf16.mxu0 0
          %439 = vmatpush1.bf16.msra.mxu0 0
          %440 = vmatprep.subr.bf16.mxu0 0
          %441 = vmatpush1.bf16.msra.mxu0 0
          %442 = vmatprep.subr.bf16.mxu0 0
          %443 = vmatpush1.bf16.msra.mxu0 0
          %444 = vmatprep.subr.bf16.mxu0 0
          %445 = vmatpush1.bf16.msra.mxu0 0
          %446 = vmatprep.subr.bf16.mxu0 0
          %447 = vmatpush1.bf16.msra.mxu0 0
          %448 = vmatprep.subr.bf16.mxu0 0
          %449 = vmatpush1.bf16.msra.mxu0 0
          %450 = vmatprep.subr.bf16.mxu0 0
          %451 = vmatpush1.bf16.msra.mxu0 %v435
          %452 = vmatprep.subr.bf16.mxu0 0
          %453 = vmatpush1.bf16.msra.mxu0 %v434
          %454 = vmatprep.subr.bf16.mxu0 0
          %455 = vmatpush2.bf16.msra.mxu0 0
          %456 = vmatprep.subr.bf16.mxu0 0
          %457 = vmatpush2.bf16.msra.mxu0 0
          %458 = vmatprep.subr.bf16.mxu0 0
          %459 = vmatpush2.bf16.msra.mxu0 0
          %460 = vmatprep.subr.bf16.mxu0 0
          %461 = vmatpush2.bf16.msra.mxu0 0
          %462 = vmatprep.subr.bf16.mxu0 0
          %463 = vmatpush2.bf16.msra.mxu0 0
          %464 = vmatprep.subr.bf16.mxu0 0
          %465 = vmatpush2.bf16.msra.mxu0 0
          %466 = vmatprep.subr.bf16.mxu0 0
          %467 = vmatpush2.bf16.msra.mxu0 0
          %468 = vmatprep.subr.bf16.mxu0 0
          %469 = vmatpush2.bf16.msra.mxu0 0
          %470 = vmatprep.mubr.bf16.mxu0 0
          %471 = vmatmul.mubr.bf16.gmra.mxu0 %v373
          %v472 = vpop.f32.mrf.mxu0
          %v473 = vadd.f32 %v424, %v472
          %v474 = vpop.f32.mrf.mxu0
          %v475 = vpop.f32.mrf.mxu0
          %v476 = vpop.f32.mrf.mxu0
          %477 = vdwg.mxu0
          %478 = vxpose.xlu0.b32.start [1/16] %v410, 128
          %479 = vxpose.xlu0.b32.cont [2/16] 0.0, 128
          %480 = vxpose.xlu0.b32.cont [3/16] 0.0, 128
          %481 = vxpose.xlu0.b32.cont [4/16] 0.0, 128
          %482 = vxpose.xlu0.b32.cont [5/16] 0.0, 128
          %483 = vxpose.xlu0.b32.cont [6/16] 0.0, 128
          %484 = vxpose.xlu0.b32.cont [7/16] 0.0, 128
          %485 = vxpose.xlu0.b32.cont [8/16] 0.0, 128
          %486 = vxpose.xlu0.b32.cont [9/16] 0.0, 128
          %487 = vxpose.xlu0.b32.cont [10/16] 0.0, 128
          %488 = vxpose.xlu0.b32.cont [11/16] 0.0, 128
          %489 = vxpose.xlu0.b32.cont [12/16] 0.0, 128
          %490 = vxpose.xlu0.b32.cont [13/16] 0.0, 128
          %491 = vxpose.xlu0.b32.cont [14/16] 0.0, 128
          %492 = vxpose.xlu0.b32.cont [15/16] 0.0, 128
          %493 = vxpose.xlu0.b32.end [16/16] 0.0, 128
          %v494 = vpop.trf.xlu0
          %v495 = vpop.trf.xlu0
          %v496 = vpop.trf.xlu0
          %v497 = vpop.trf.xlu0
          %v498 = vpop.trf.xlu0
          %v499 = vpop.trf.xlu0
          %v500 = vpop.trf.xlu0
          %v501 = vpop.trf.xlu0
          %v502 = vpop.trf.xlu0
          %v503 = vpop.trf.xlu0
          %v504 = vpop.trf.xlu0
          %v505 = vpop.trf.xlu0
          %v506 = vpop.trf.xlu0
          %v507 = vpop.trf.xlu0
          %v508 = vpop.trf.xlu0
          %v509 = vpop.trf.xlu0
          %v510 = vpack.c.bf16 %v494, %v494
          %vm511 = vcmask 60416
          %512 = vst.msk [vmem:[#allocation2] sm:$0xf] %vm511, %v510
          %v513 = vpack.c.bf16 %v473, %v473
          %514 = vst.msk [vmem:[#allocation3] sm:$0xf] %vm511, %v513
          %s515 = scalar_lea.vmem %s2, 16
          %v516 = vld [vmem:[%s515] sm:$0xf]
          %v517 = vld [vmem:[%s515 + $0x4] sm:$0xf]
          %v518 = vld [vmem:[%s515 + $0x8] sm:$0xf]
          %v519 = vld [vmem:[%s515 + $0xc] sm:$0xf]
          %s520 = scalar_lea.vmem %s5, 1
          %v521 = vld [vmem:[%s520] sm:$0x1]
          %v523 = vlaneseq
          %v524 = vshrl.u32 %v523, 7
          %v525 = vsub.s32 0, %v524
          %v526 = vrot.slane %v521, %v525
          %v532 = vunpack.c.l.b16 %v516
          %v533 = vunpack.c.l.b16 %v517
          %v534 = vunpack.c.l.b16 %v518
          %v535 = vunpack.c.l.b16 %v519
          %v536 = vpack.c.b16 %v533, %v532
          %v537 = vpack.c.b16 %v535, %v534
          %540 = vmatprep.subr.bf16.mxu0 0
          %541 = vmatpush1.bf16.msra.mxu0 0
          %542 = vmatprep.subr.bf16.mxu0 0
          %543 = vmatpush1.bf16.msra.mxu0 0
          %544 = vmatprep.subr.bf16.mxu0 0
          %545 = vmatpush1.bf16.msra.mxu0 0
          %546 = vmatprep.subr.bf16.mxu0 0
          %547 = vmatpush1.bf16.msra.mxu0 0
          %548 = vmatprep.subr.bf16.mxu0 0
          %549 = vmatpush1.bf16.msra.mxu0 0
          %550 = vmatprep.subr.bf16.mxu0 0
          %551 = vmatpush1.bf16.msra.mxu0 0
          %552 = vmatprep.subr.bf16.mxu0 0
          %553 = vmatpush1.bf16.msra.mxu0 %v537
          %554 = vmatprep.subr.bf16.mxu0 0
          %555 = vmatpush1.bf16.msra.mxu0 %v536
          %556 = vmatprep.subr.bf16.mxu0 0
          %557 = vmatpush2.bf16.msra.mxu0 0
          %558 = vmatprep.subr.bf16.mxu0 0
          %559 = vmatpush2.bf16.msra.mxu0 0
          %560 = vmatprep.subr.bf16.mxu0 0
          %561 = vmatpush2.bf16.msra.mxu0 0
          %562 = vmatprep.subr.bf16.mxu0 0
          %563 = vmatpush2.bf16.msra.mxu0 0
          %564 = vmatprep.subr.bf16.mxu0 0
          %565 = vmatpush2.bf16.msra.mxu0 0
          %566 = vmatprep.subr.bf16.mxu0 0
          %567 = vmatpush2.bf16.msra.mxu0 0
          %568 = vmatprep.subr.bf16.mxu0 0
          %569 = vmatpush2.bf16.msra.mxu0 0
          %570 = vmatprep.subr.bf16.mxu0 0
          %571 = vmatpush2.bf16.msra.mxu0 0
          %572 = vmatprep.mubr.bf16.mxu0 0
          %573 = vmatmul.mubr.bf16.gmra.mxu0 %v373
          %v574 = vpop.f32.mrf.mxu0
          %v575 = vadd.f32 %v526, %v574
          %v576 = vpop.f32.mrf.mxu0
          %v577 = vpop.f32.mrf.mxu0
          %v578 = vpop.f32.mrf.mxu0
          %579 = vdwg.mxu0
          %s580 = scalar_lea.vmem %s3, 16
          %v581 = vld [vmem:[%s580] sm:$0xf]
          %v582 = vld [vmem:[%s580 + $0x4] sm:$0xf]
          %v583 = vld [vmem:[%s580 + $0x8] sm:$0xf]
          %v584 = vld [vmem:[%s580 + $0xc] sm:$0xf]
          %s585 = scalar_lea.vmem %s6, 1
          %v586 = vld [vmem:[%s585] sm:$0x1]
          %v588 = vlaneseq
          %v589 = vshrl.u32 %v588, 7
          %v590 = vsub.s32 0, %v589
          %v591 = vrot.slane %v586, %v590
          %v597 = vunpack.c.l.b16 %v581
          %v598 = vunpack.c.l.b16 %v582
          %v599 = vunpack.c.l.b16 %v583
          %v600 = vunpack.c.l.b16 %v584
          %v601 = vpack.c.b16 %v598, %v597
          %v602 = vpack.c.b16 %v600, %v599
          %605 = vmatprep.subr.bf16.mxu0 0
          %606 = vmatpush1.bf16.msra.mxu0 0
          %607 = vmatprep.subr.bf16.mxu0 0
          %608 = vmatpush1.bf16.msra.mxu0 0
          %609 = vmatprep.subr.bf16.mxu0 0
          %610 = vmatpush1.bf16.msra.mxu0 0
          %611 = vmatprep.subr.bf16.mxu0 0
          %612 = vmatpush1.bf16.msra.mxu0 0
          %613 = vmatprep.subr.bf16.mxu0 0
          %614 = vmatpush1.bf16.msra.mxu0 0
          %615 = vmatprep.subr.bf16.mxu0 0
          %616 = vmatpush1.bf16.msra.mxu0 0
          %617 = vmatprep.subr.bf16.mxu0 0
          %618 = vmatpush1.bf16.msra.mxu0 %v602
          %619 = vmatprep.subr.bf16.mxu0 0
          %620 = vmatpush1.bf16.msra.mxu0 %v601
          %621 = vmatprep.subr.bf16.mxu0 0
          %622 = vmatpush2.bf16.msra.mxu0 0
          %623 = vmatprep.subr.bf16.mxu0 0
          %624 = vmatpush2.bf16.msra.mxu0 0
          %625 = vmatprep.subr.bf16.mxu0 0
          %626 = vmatpush2.bf16.msra.mxu0 0
          %627 = vmatprep.subr.bf16.mxu0 0
          %628 = vmatpush2.bf16.msra.mxu0 0
          %629 = vmatprep.subr.bf16.mxu0 0
          %630 = vmatpush2.bf16.msra.mxu0 0
          %631 = vmatprep.subr.bf16.mxu0 0
          %632 = vmatpush2.bf16.msra.mxu0 0
          %633 = vmatprep.subr.bf16.mxu0 0
          %634 = vmatpush2.bf16.msra.mxu0 0
          %635 = vmatprep.subr.bf16.mxu0 0
          %636 = vmatpush2.bf16.msra.mxu0 0
          %637 = vmatprep.mubr.bf16.mxu0 0
          %638 = vmatmul.mubr.bf16.gmra.mxu0 %v373
          %v639 = vpop.f32.mrf.mxu0
          %v640 = vadd.f32 %v591, %v639
          %v641 = vpop.f32.mrf.mxu0
          %v642 = vpop.f32.mrf.mxu0
          %v643 = vpop.f32.mrf.mxu0
          %644 = vdwg.mxu0
          %645 = vxpose.xlu0.b32.start [1/16] %v575, 128
          %646 = vxpose.xlu0.b32.cont [2/16] 0.0, 128
          %647 = vxpose.xlu0.b32.cont [3/16] 0.0, 128
          %648 = vxpose.xlu0.b32.cont [4/16] 0.0, 128
          %649 = vxpose.xlu0.b32.cont [5/16] 0.0, 128
          %650 = vxpose.xlu0.b32.cont [6/16] 0.0, 128
          %651 = vxpose.xlu0.b32.cont [7/16] 0.0, 128
          %652 = vxpose.xlu0.b32.cont [8/16] 0.0, 128
          %653 = vxpose.xlu0.b32.cont [9/16] 0.0, 128
          %654 = vxpose.xlu0.b32.cont [10/16] 0.0, 128
          %655 = vxpose.xlu0.b32.cont [11/16] 0.0, 128
          %656 = vxpose.xlu0.b32.cont [12/16] 0.0, 128
          %657 = vxpose.xlu0.b32.cont [13/16] 0.0, 128
          %658 = vxpose.xlu0.b32.cont [14/16] 0.0, 128
          %659 = vxpose.xlu0.b32.cont [15/16] 0.0, 128
          %660 = vxpose.xlu0.b32.end [16/16] 0.0, 128
          %v661 = vpop.trf.xlu0
          %v662 = vpop.trf.xlu0
          %v663 = vpop.trf.xlu0
          %v664 = vpop.trf.xlu0
          %v665 = vpop.trf.xlu0
          %v666 = vpop.trf.xlu0
          %v667 = vpop.trf.xlu0
          %v668 = vpop.trf.xlu0
          %v669 = vpop.trf.xlu0
          %v670 = vpop.trf.xlu0
          %v671 = vpop.trf.xlu0
          %v672 = vpop.trf.xlu0
          %v673 = vpop.trf.xlu0
          %v674 = vpop.trf.xlu0
          %v675 = vpop.trf.xlu0
          %v676 = vpop.trf.xlu0
          %v677 = vpack.c.bf16 %v661, %v661
          %s678 = scalar_lea.vmem [#allocation2], 4
          %679 = vst.msk [vmem:[%s678] sm:$0xf] %vm511, %v677
          %v680 = vpack.c.bf16 %v640, %v640
          %s681 = scalar_lea.vmem [#allocation3], 4
          %682 = vst.msk [vmem:[%s681] sm:$0xf] %vm511, %v680
          %s683 = scalar_lea.vmem %s2, 32
          %v684 = vld [vmem:[%s683] sm:$0xf]
          %v685 = vld [vmem:[%s683 + $0x4] sm:$0xf]
          %v686 = vld [vmem:[%s683 + $0x8] sm:$0xf]
          %v687 = vld [vmem:[%s683 + $0xc] sm:$0xf]
          %s688 = scalar_lea.vmem %s5, 2
          %v689 = vld [vmem:[%s688] sm:$0x1]
          %v691 = vlaneseq
          %v692 = vshrl.u32 %v691, 7
          %v693 = vsub.s32 0, %v692
          %v694 = vrot.slane %v689, %v693
          %v700 = vunpack.c.l.b16 %v684
          %v701 = vunpack.c.l.b16 %v685
          %v702 = vunpack.c.l.b16 %v686
          %v703 = vunpack.c.l.b16 %v687
          %v704 = vpack.c.b16 %v701, %v700
          %v705 = vpack.c.b16 %v703, %v702
          %708 = vmatprep.subr.bf16.mxu0 0
          %709 = vmatpush1.bf16.msra.mxu0 0
          %710 = vmatprep.subr.bf16.mxu0 0
          %711 = vmatpush1.bf16.msra.mxu0 0
          %712 = vmatprep.subr.bf16.mxu0 0
          %713 = vmatpush1.bf16.msra.mxu0 0
          %714 = vmatprep.subr.bf16.mxu0 0
          %715 = vmatpush1.bf16.msra.mxu0 0
          %716 = vmatprep.subr.bf16.mxu0 0
          %717 = vmatpush1.bf16.msra.mxu0 0
          %718 = vmatprep.subr.bf16.mxu0 0
          %719 = vmatpush1.bf16.msra.mxu0 0
          %720 = vmatprep.subr.bf16.mxu0 0
          %721 = vmatpush1.bf16.msra.mxu0 %v705
          %722 = vmatprep.subr.bf16.mxu0 0
          %723 = vmatpush1.bf16.msra.mxu0 %v704
          %724 = vmatprep.subr.bf16.mxu0 0
          %725 = vmatpush2.bf16.msra.mxu0 0
          %726 = vmatprep.subr.bf16.mxu0 0
          %727 = vmatpush2.bf16.msra.mxu0 0
          %728 = vmatprep.subr.bf16.mxu0 0
          %729 = vmatpush2.bf16.msra.mxu0 0
          %730 = vmatprep.subr.bf16.mxu0 0
          %731 = vmatpush2.bf16.msra.mxu0 0
          %732 = vmatprep.subr.bf16.mxu0 0
          %733 = vmatpush2.bf16.msra.mxu0 0
          %734 = vmatprep.subr.bf16.mxu0 0
          %735 = vmatpush2.bf16.msra.mxu0 0
          %736 = vmatprep.subr.bf16.mxu0 0
          %737 = vmatpush2.bf16.msra.mxu0 0
          %738 = vmatprep.subr.bf16.mxu0 0
          %739 = vmatpush2.bf16.msra.mxu0 0
          %740 = vmatprep.mubr.bf16.mxu0 0
          %741 = vmatmul.mubr.bf16.gmra.mxu0 %v373
          %v742 = vpop.f32.mrf.mxu0
          %v743 = vadd.f32 %v694, %v742
          %v744 = vpop.f32.mrf.mxu0
          %v745 = vpop.f32.mrf.mxu0
          %v746 = vpop.f32.mrf.mxu0
          %747 = vdwg.mxu0
          %s748 = scalar_lea.vmem %s3, 32
          %v749 = vld [vmem:[%s748] sm:$0xf]
          %v750 = vld [vmem:[%s748 + $0x4] sm:$0xf]
          %v751 = vld [vmem:[%s748 + $0x8] sm:$0xf]
          %v752 = vld [vmem:[%s748 + $0xc] sm:$0xf]
          %s753 = scalar_lea.vmem %s6, 2
          %v754 = vld [vmem:[%s753] sm:$0x1]
          %v756 = vlaneseq
          %v757 = vshrl.u32 %v756, 7
          %v758 = vsub.s32 0, %v757
          %v759 = vrot.slane %v754, %v758
          %v765 = vunpack.c.l.b16 %v749
          %v766 = vunpack.c.l.b16 %v750
          %v767 = vunpack.c.l.b16 %v751
          %v768 = vunpack.c.l.b16 %v752
          %v769 = vpack.c.b16 %v766, %v765
          %v770 = vpack.c.b16 %v768, %v767
          %773 = vmatprep.subr.bf16.mxu0 0
          %774 = vmatpush1.bf16.msra.mxu0 0
          %775 = vmatprep.subr.bf16.mxu0 0
          %776 = vmatpush1.bf16.msra.mxu0 0
          %777 = vmatprep.subr.bf16.mxu0 0
          %778 = vmatpush1.bf16.msra.mxu0 0
          %779 = vmatprep.subr.bf16.mxu0 0
          %780 = vmatpush1.bf16.msra.mxu0 0
          %781 = vmatprep.subr.bf16.mxu0 0
          %782 = vmatpush1.bf16.msra.mxu0 0
          %783 = vmatprep.subr.bf16.mxu0 0
          %784 = vmatpush1.bf16.msra.mxu0 0
          %785 = vmatprep.subr.bf16.mxu0 0
          %786 = vmatpush1.bf16.msra.mxu0 %v770
          %787 = vmatprep.subr.bf16.mxu0 0
          %788 = vmatpush1.bf16.msra.mxu0 %v769
          %789 = vmatprep.subr.bf16.mxu0 0
          %790 = vmatpush2.bf16.msra.mxu0 0
          %791 = vmatprep.subr.bf16.mxu0 0
          %792 = vmatpush2.bf16.msra.mxu0 0
          %793 = vmatprep.subr.bf16.mxu0 0
          %794 = vmatpush2.bf16.msra.mxu0 0
          %795 = vmatprep.subr.bf16.mxu0 0
          %796 = vmatpush2.bf16.msra.mxu0 0
          %797 = vmatprep.subr.bf16.mxu0 0
          %798 = vmatpush2.bf16.msra.mxu0 0
          %799 = vmatprep.subr.bf16.mxu0 0
          %800 = vmatpush2.bf16.msra.mxu0 0
          %801 = vmatprep.subr.bf16.mxu0 0
          %802 = vmatpush2.bf16.msra.mxu0 0
          %803 = vmatprep.subr.bf16.mxu0 0
          %804 = vmatpush2.bf16.msra.mxu0 0
          %805 = vmatprep.mubr.bf16.mxu0 0
          %806 = vmatmul.mubr.bf16.gmra.mxu0 %v373
          %v807 = vpop.f32.mrf.mxu0
          %v808 = vadd.f32 %v759, %v807
          %v809 = vpop.f32.mrf.mxu0
          %v810 = vpop.f32.mrf.mxu0
          %v811 = vpop.f32.mrf.mxu0
          %812 = vdwg.mxu0
          %813 = vxpose.xlu0.b32.start [1/16] %v743, 128
          %814 = vxpose.xlu0.b32.cont [2/16] 0.0, 128
          %815 = vxpose.xlu0.b32.cont [3/16] 0.0, 128
          %816 = vxpose.xlu0.b32.cont [4/16] 0.0, 128
          %817 = vxpose.xlu0.b32.cont [5/16] 0.0, 128
          %818 = vxpose.xlu0.b32.cont [6/16] 0.0, 128
          %819 = vxpose.xlu0.b32.cont [7/16] 0.0, 128
          %820 = vxpose.xlu0.b32.cont [8/16] 0.0, 128
          %821 = vxpose.xlu0.b32.cont [9/16] 0.0, 128
          %822 = vxpose.xlu0.b32.cont [10/16] 0.0, 128
          %823 = vxpose.xlu0.b32.cont [11/16] 0.0, 128
          %824 = vxpose.xlu0.b32.cont [12/16] 0.0, 128
          %825 = vxpose.xlu0.b32.cont [13/16] 0.0, 128
          %826 = vxpose.xlu0.b32.cont [14/16] 0.0, 128
          %827 = vxpose.xlu0.b32.cont [15/16] 0.0, 128
          %828 = vxpose.xlu0.b32.end [16/16] 0.0, 128
          %v829 = vpop.trf.xlu0
          %v830 = vpop.trf.xlu0
          %v831 = vpop.trf.xlu0
          %v832 = vpop.trf.xlu0
          %v833 = vpop.trf.xlu0
          %v834 = vpop.trf.xlu0
          %v835 = vpop.trf.xlu0
          %v836 = vpop.trf.xlu0
          %v837 = vpop.trf.xlu0
          %v838 = vpop.trf.xlu0
          %v839 = vpop.trf.xlu0
          %v840 = vpop.trf.xlu0
          %v841 = vpop.trf.xlu0
          %v842 = vpop.trf.xlu0
          %v843 = vpop.trf.xlu0
          %v844 = vpop.trf.xlu0
          %v845 = vpack.c.bf16 %v829, %v829
          %s846 = scalar_lea.vmem [#allocation2], 8
          %847 = vst.msk [vmem:[%s846] sm:$0xf] %vm511, %v845
          %v848 = vpack.c.bf16 %v808, %v808
          %s849 = scalar_lea.vmem [#allocation3], 8
          %850 = vst.msk [vmem:[%s849] sm:$0xf] %vm511, %v848
          %s851 = scalar_lea.vmem %s2, 48
          %v852 = vld [vmem:[%s851] sm:$0xf]
          %v853 = vld [vmem:[%s851 + $0x4] sm:$0xf]
          %v854 = vld [vmem:[%s851 + $0x8] sm:$0xf]
          %v855 = vld [vmem:[%s851 + $0xc] sm:$0xf]
          %s856 = scalar_lea.vmem %s5, 3
          %v857 = vld [vmem:[%s856] sm:$0x1]
          %v859 = vlaneseq
          %v860 = vshrl.u32 %v859, 7
          %v861 = vsub.s32 0, %v860
          %v862 = vrot.slane %v857, %v861
          %v868 = vunpack.c.l.b16 %v852
          %v869 = vunpack.c.l.b16 %v853
          %v870 = vunpack.c.l.b16 %v854
          %v871 = vunpack.c.l.b16 %v855
          %v872 = vpack.c.b16 %v869, %v868
          %v873 = vpack.c.b16 %v871, %v870
          %876 = vmatprep.subr.bf16.mxu0 0
          %877 = vmatpush1.bf16.msra.mxu0 0
          %878 = vmatprep.subr.bf16.mxu0 0
          %879 = vmatpush1.bf16.msra.mxu0 0
          %880 = vmatprep.subr.bf16.mxu0 0
          %881 = vmatpush1.bf16.msra.mxu0 0
          %882 = vmatprep.subr.bf16.mxu0 0
          %883 = vmatpush1.bf16.msra.mxu0 0
          %884 = vmatprep.subr.bf16.mxu0 0
          %885 = vmatpush1.bf16.msra.mxu0 0
          %886 = vmatprep.subr.bf16.mxu0 0
          %887 = vmatpush1.bf16.msra.mxu0 0
          %888 = vmatprep.subr.bf16.mxu0 0
          %889 = vmatpush1.bf16.msra.mxu0 %v873
          %890 = vmatprep.subr.bf16.mxu0 0
          %891 = vmatpush1.bf16.msra.mxu0 %v872
          %892 = vmatprep.subr.bf16.mxu0 0
          %893 = vmatpush2.bf16.msra.mxu0 0
          %894 = vmatprep.subr.bf16.mxu0 0
          %895 = vmatpush2.bf16.msra.mxu0 0
          %896 = vmatprep.subr.bf16.mxu0 0
          %897 = vmatpush2.bf16.msra.mxu0 0
          %898 = vmatprep.subr.bf16.mxu0 0
          %899 = vmatpush2.bf16.msra.mxu0 0
          %900 = vmatprep.subr.bf16.mxu0 0
          %901 = vmatpush2.bf16.msra.mxu0 0
          %902 = vmatprep.subr.bf16.mxu0 0
          %903 = vmatpush2.bf16.msra.mxu0 0
          %904 = vmatprep.subr.bf16.mxu0 0
          %905 = vmatpush2.bf16.msra.mxu0 0
          %906 = vmatprep.subr.bf16.mxu0 0
          %907 = vmatpush2.bf16.msra.mxu0 0
          %908 = vmatprep.mubr.bf16.mxu0 0
          %909 = vmatmul.mubr.bf16.gmra.mxu0 %v373
          %v910 = vpop.f32.mrf.mxu0
          %v911 = vadd.f32 %v862, %v910
          %v912 = vpop.f32.mrf.mxu0
          %v913 = vpop.f32.mrf.mxu0
          %v914 = vpop.f32.mrf.mxu0
          %915 = vdwg.mxu0
          %s916 = scalar_lea.vmem %s3, 48
          %v917 = vld [vmem:[%s916] sm:$0xf]
          %v918 = vld [vmem:[%s916 + $0x4] sm:$0xf]
          %v919 = vld [vmem:[%s916 + $0x8] sm:$0xf]
          %v920 = vld [vmem:[%s916 + $0xc] sm:$0xf]
          %s921 = scalar_lea.vmem %s6, 3
          %v922 = vld [vmem:[%s921] sm:$0x1]
          %v924 = vlaneseq
          %v925 = vshrl.u32 %v924, 7
          %v926 = vsub.s32 0, %v925
          %v927 = vrot.slane %v922, %v926
          %v933 = vunpack.c.l.b16 %v917
          %v934 = vunpack.c.l.b16 %v918
          %v935 = vunpack.c.l.b16 %v919
          %v936 = vunpack.c.l.b16 %v920
          %v937 = vpack.c.b16 %v934, %v933
          %v938 = vpack.c.b16 %v936, %v935
          %941 = vmatprep.subr.bf16.mxu0 0
          %942 = vmatpush1.bf16.msra.mxu0 0
          %943 = vmatprep.subr.bf16.mxu0 0
          %944 = vmatpush1.bf16.msra.mxu0 0
          %945 = vmatprep.subr.bf16.mxu0 0
          %946 = vmatpush1.bf16.msra.mxu0 0
          %947 = vmatprep.subr.bf16.mxu0 0
          %948 = vmatpush1.bf16.msra.mxu0 0
          %949 = vmatprep.subr.bf16.mxu0 0
          %950 = vmatpush1.bf16.msra.mxu0 0
          %951 = vmatprep.subr.bf16.mxu0 0
          %952 = vmatpush1.bf16.msra.mxu0 0
          %953 = vmatprep.subr.bf16.mxu0 0
          %954 = vmatpush1.bf16.msra.mxu0 %v938
          %955 = vmatprep.subr.bf16.mxu0 0
          %956 = vmatpush1.bf16.msra.mxu0 %v937
          %957 = vmatprep.subr.bf16.mxu0 0
          %958 = vmatpush2.bf16.msra.mxu0 0
          %959 = vmatprep.subr.bf16.mxu0 0
          %960 = vmatpush2.bf16.msra.mxu0 0
          %961 = vmatprep.subr.bf16.mxu0 0
          %962 = vmatpush2.bf16.msra.mxu0 0
          %963 = vmatprep.subr.bf16.mxu0 0
          %964 = vmatpush2.bf16.msra.mxu0 0
          %965 = vmatprep.subr.bf16.mxu0 0
          %966 = vmatpush2.bf16.msra.mxu0 0
          %967 = vmatprep.subr.bf16.mxu0 0
          %968 = vmatpush2.bf16.msra.mxu0 0
          %969 = vmatprep.subr.bf16.mxu0 0
          %970 = vmatpush2.bf16.msra.mxu0 0
          %971 = vmatprep.subr.bf16.mxu0 0
          %972 = vmatpush2.bf16.msra.mxu0 0
          %973 = vmatprep.mubr.bf16.mxu0 0
          %974 = vmatmul.mubr.bf16.gmra.mxu0 %v373
          %v975 = vpop.f32.mrf.mxu0
          %v976 = vadd.f32 %v927, %v975
          %v977 = vpop.f32.mrf.mxu0
          %v978 = vpop.f32.mrf.mxu0
          %v979 = vpop.f32.mrf.mxu0
          %980 = vdwg.mxu0
          %981 = vxpose.xlu0.b32.start [1/16] %v911, 128
          %982 = vxpose.xlu0.b32.cont [2/16] 0.0, 128
          %983 = vxpose.xlu0.b32.cont [3/16] 0.0, 128
          %984 = vxpose.xlu0.b32.cont [4/16] 0.0, 128
          %985 = vxpose.xlu0.b32.cont [5/16] 0.0, 128
          %986 = vxpose.xlu0.b32.cont [6/16] 0.0, 128
          %987 = vxpose.xlu0.b32.cont [7/16] 0.0, 128
          %988 = vxpose.xlu0.b32.cont [8/16] 0.0, 128
          %989 = vxpose.xlu0.b32.cont [9/16] 0.0, 128
          %990 = vxpose.xlu0.b32.cont [10/16] 0.0, 128
          %991 = vxpose.xlu0.b32.cont [11/16] 0.0, 128
          %992 = vxpose.xlu0.b32.cont [12/16] 0.0, 128
          %993 = vxpose.xlu0.b32.cont [13/16] 0.0, 128
          %994 = vxpose.xlu0.b32.cont [14/16] 0.0, 128
          %995 = vxpose.xlu0.b32.cont [15/16] 0.0, 128
          %996 = vxpose.xlu0.b32.end [16/16] 0.0, 128
          %v997 = vpop.trf.xlu0
          %v998 = vpop.trf.xlu0
          %v999 = vpop.trf.xlu0
          %v1000 = vpop.trf.xlu0
          %v1001 = vpop.trf.xlu0
          %v1002 = vpop.trf.xlu0
          %v1003 = vpop.trf.xlu0
          %v1004 = vpop.trf.xlu0
          %v1005 = vpop.trf.xlu0
          %v1006 = vpop.trf.xlu0
          %v1007 = vpop.trf.xlu0
          %v1008 = vpop.trf.xlu0
          %v1009 = vpop.trf.xlu0
          %v1010 = vpop.trf.xlu0
          %v1011 = vpop.trf.xlu0
          %v1012 = vpop.trf.xlu0
          %v1013 = vpack.c.bf16 %v997, %v997
          %s1014 = scalar_lea.vmem [#allocation2], 12
          %1015 = vst.msk [vmem:[%s1014] sm:$0xf] %vm511, %v1013
          %v1016 = vpack.c.bf16 %v976, %v976
          %s1017 = scalar_lea.vmem [#allocation3], 12
          %1018 = vst.msk [vmem:[%s1017] sm:$0xf] %vm511, %v1016
        $region60: #{tpu_custom_call.1} parent=55 // pred_fallthru
          _
        %s1019 = smul.u32 %s28, 8
        %s1020 = sshra.s32 %s1019, 3
        %s1021 = sand.u32 %s1019, 7
        %s1022 = smul.addr %s1020, 4
        %s1023 = scalar_lea.vmem %s341, %s1022
        %v1024 = vld [vmem:[%s1023] sm:$0xf]
        %v1025 = vld [vmem:[%s1] sm:$0xf]
        %v1026 = vld [vmem:[%s1 + $0x4] sm:$0xf]
        %v1027 = vld [vmem:[%s1 + $0x8] sm:$0xf]
        %v1028 = vld [vmem:[%s1 + $0xc] sm:$0xf]
        %v1029 = vld [vmem:[%s4] sm:$0x1]
        %v1031 = vlaneseq
        %v1032 = vshrl.u32 %v1031, 7
        %v1033 = vsub.s32 0, %v1032
        %v1034 = vrot.slane %v1029, %v1033
        %v1040 = vunpack.c.l.b16 %v1025
        %v1041 = vunpack.c.l.b16 %v1026
        %v1042 = vunpack.c.l.b16 %v1027
        %v1043 = vunpack.c.l.b16 %v1028
        %v1044 = vpack.c.b16 %v1041, %v1040
        %v1045 = vpack.c.b16 %v1043, %v1042
        %vm1048 = vcmask 261120
        %v1050 = vsel %vm1048, %v1024, 0
        %1052 = vmatprep.subr.bf16.mxu0 0
        %1053 = vmatpush1.bf16.msra.mxu0 0
        %1054 = vmatprep.subr.bf16.mxu0 0
        %1055 = vmatpush1.bf16.msra.mxu0 0
        %1056 = vmatprep.subr.bf16.mxu0 0
        %1057 = vmatpush1.bf16.msra.mxu0 0
        %1058 = vmatprep.subr.bf16.mxu0 0
        %1059 = vmatpush1.bf16.msra.mxu0 0
        %1060 = vmatprep.subr.bf16.mxu0 0
        %1061 = vmatpush1.bf16.msra.mxu0 0
        %1062 = vmatprep.subr.bf16.mxu0 0
        %1063 = vmatpush1.bf16.msra.mxu0 0
        %1064 = vmatprep.subr.bf16.mxu0 0
        %1065 = vmatpush1.bf16.msra.mxu0 %v1045
        %1066 = vmatprep.subr.bf16.mxu0 0
        %1067 = vmatpush1.bf16.msra.mxu0 %v1044
        %1068 = vmatprep.subr.bf16.mxu0 0
        %1069 = vmatpush2.bf16.msra.mxu0 0
        %1070 = vmatprep.subr.bf16.mxu0 0
        %1071 = vmatpush2.bf16.msra.mxu0 0
        %1072 = vmatprep.subr.bf16.mxu0 0
        %1073 = vmatpush2.bf16.msra.mxu0 0
        %1074 = vmatprep.subr.bf16.mxu0 0
        %1075 = vmatpush2.bf16.msra.mxu0 0
        %1076 = vmatprep.subr.bf16.mxu0 0
        %1077 = vmatpush2.bf16.msra.mxu0 0
        %1078 = vmatprep.subr.bf16.mxu0 0
        %1079 = vmatpush2.bf16.msra.mxu0 0
        %1080 = vmatprep.subr.bf16.mxu0 0
        %1081 = vmatpush2.bf16.msra.mxu0 0
        %1082 = vmatprep.subr.bf16.mxu0 0
        %1083 = vmatpush2.bf16.msra.mxu0 0
        %1084 = vmatprep.mubr.bf16.mxu0 0
        %1085 = vmatmul.mubr.bf16.gmra.mxu0 %v1050
        %v1086 = vpop.f32.mrf.mxu0
        %v1087 = vadd.f32 %v1034, %v1086
        %v1088 = vpop.f32.mrf.mxu0
        %v1089 = vpop.f32.mrf.mxu0
        %v1090 = vpop.f32.mrf.mxu0
        %1091 = vdwg.mxu0
        %v1092 = vpack.c.bf16 %v1087, %v1087
        %v1093 = vld [vmem:[#allocation2] sm:$0xf]
        %vm1094 = vcmask 64512
        %v1096 = vsel %vm1094, %v1092, 0
        %vm1098 = vcmask 1043456
        %v1100 = vsel %vm1098, %v1093, 0
        %1102 = vmatprep.subr.bf16.mxu0 0
        %1103 = vmatpush1.bf16.msra.mxu0 0
        %1104 = vmatprep.subr.bf16.mxu0 0
        %1105 = vmatpush1.bf16.msra.mxu0 0
        %1106 = vmatprep.subr.bf16.mxu0 0
        %1107 = vmatpush1.bf16.msra.mxu0 0
        %1108 = vmatprep.subr.bf16.mxu0 0
        %1109 = vmatpush1.bf16.msra.mxu0 0
        %1110 = vmatprep.subr.bf16.mxu0 0
        %1111 = vmatpush1.bf16.msra.mxu0 0
        %1112 = vmatprep.subr.bf16.mxu0 0
        %1113 = vmatpush1.bf16.msra.mxu0 0
        %1114 = vmatprep.subr.bf16.mxu0 0
        %1115 = vmatpush1.bf16.msra.mxu0 0
        %1116 = vmatprep.subr.bf16.mxu0 0
        %1117 = vmatpush1.bf16.msra.mxu0 %v1100
        %1118 = vmatprep.subr.bf16.mxu0 0
        %1119 = vmatpush2.bf16.msra.mxu0 0
        %1120 = vmatprep.subr.bf16.mxu0 0
        %1121 = vmatpush2.bf16.msra.mxu0 0
        %1122 = vmatprep.subr.bf16.mxu0 0
        %1123 = vmatpush2.bf16.msra.mxu0 0
        %1124 = vmatprep.subr.bf16.mxu0 0
        %1125 = vmatpush2.bf16.msra.mxu0 0
        %1126 = vmatprep.subr.bf16.mxu0 0
        %1127 = vmatpush2.bf16.msra.mxu0 0
        %1128 = vmatprep.subr.bf16.mxu0 0
        %1129 = vmatpush2.bf16.msra.mxu0 0
        %1130 = vmatprep.subr.bf16.mxu0 0
        %1131 = vmatpush2.bf16.msra.mxu0 0
        %1132 = vmatprep.subr.bf16.mxu0 0
        %1133 = vmatpush2.bf16.msra.mxu0 0
        %1134 = vmatprep.mubr.bf16.mxu0 0
        %1135 = vmatmul.mubr.bf16.gmra.mxu0 %v1096
        %v1136 = vpop.f32.mrf.mxu0
        %v1137 = vadd.f32 0.0, %v1136
        %v1138 = vpop.f32.mrf.mxu0
        %v1139 = vpop.f32.mrf.mxu0
        %v1140 = vpop.f32.mrf.mxu0
        %1141 = vdwg.mxu0
        %v1142 = vsel %vm1094, %v1137, -inf
        %1143 = vmax.xlane.f32.xlu0 %v1142
        %v1144 = vpop.xlane.xlu0 %1143
        %v1145 = vsub.f32 %v1137, %v1144
        %v1146 = vmul.f32 %v1145, 1.442695
        %v1147 = vpow.pop %v1146
        %v1148 = vsel %vm1094, %v1147, 0.0
        %1149 = vadd.xlane.f32.xlu0 %v1148
        %v1150 = vpop.xlane.xlu0 %1149
        %v1151 = vrcp.pop %v1150
        %v1152 = vpack.c.bf16 %v1147, %v1147
        %v1153 = vld [vmem:[#allocation3] sm:$0xf]
        %v1155 = vsel %vm1094, %v1152, 0
        %v1158 = vsel %vm1098, %v1153, 0
        %1160 = vmatprep.subr.bf16.mxu0 0
        %1161 = vmatpush1.bf16.msra.mxu0 0
        %1162 = vmatprep.subr.bf16.mxu0 0
        %1163 = vmatpush1.bf16.msra.mxu0 0
        %1164 = vmatprep.subr.bf16.mxu0 0
        %1165 = vmatpush1.bf16.msra.mxu0 0
        %1166 = vmatprep.subr.bf16.mxu0 0
        %1167 = vmatpush1.bf16.msra.mxu0 0
        %1168 = vmatprep.subr.bf16.mxu0 0
        %1169 = vmatpush1.bf16.msra.mxu0 0
        %1170 = vmatprep.subr.bf16.mxu0 0
        %1171 = vmatpush1.bf16.msra.mxu0 0
        %1172 = vmatprep.subr.bf16.mxu0 0
        %1173 = vmatpush1.bf16.msra.mxu0 0
        %1174 = vmatprep.subr.bf16.mxu0 0
        %1175 = vmatpush1.bf16.msra.mxu0 %v1158
        %1176 = vmatprep.subr.bf16.mxu0 0
        %1177 = vmatpush2.bf16.msra.mxu0 0
        %1178 = vmatprep.subr.bf16.mxu0 0
        %1179 = vmatpush2.bf16.msra.mxu0 0
        %1180 = vmatprep.subr.bf16.mxu0 0
        %1181 = vmatpush2.bf16.msra.mxu0 0
        %1182 = vmatprep.subr.bf16.mxu0 0
        %1183 = vmatpush2.bf16.msra.mxu0 0
        %1184 = vmatprep.subr.bf16.mxu0 0
        %1185 = vmatpush2.bf16.msra.mxu0 0
        %1186 = vmatprep.subr.bf16.mxu0 0
        %1187 = vmatpush2.bf16.msra.mxu0 0
        %1188 = vmatprep.subr.bf16.mxu0 0
        %1189 = vmatpush2.bf16.msra.mxu0 0
        %1190 = vmatprep.subr.bf16.mxu0 0
        %1191 = vmatpush2.bf16.msra.mxu0 0
        %1192 = vmatprep.mubr.bf16.mxu0 0
        %1193 = vmatmul.mubr.bf16.gmra.mxu0 %v1155
        %v1194 = vpop.f32.mrf.mxu0
        %v1195 = vadd.f32 0.0, %v1194
        %v1196 = vpop.f32.mrf.mxu0
        %v1197 = vpop.f32.mrf.mxu0
        %v1198 = vpop.f32.mrf.mxu0
        %1199 = vdwg.mxu0
        %v1200 = vmul.f32 %v1195, %v1151
        %v1201 = vpack.c.bf16 %v1200, %v1200
        %v1202 = vld [vmem:[%s7] sm:$0xf]
        %s1203 = scalar_lea.vmem %s1, 16
        %v1204 = vld [vmem:[%s1203] sm:$0xf]
        %v1205 = vld [vmem:[%s1203 + $0x4] sm:$0xf]
        %v1206 = vld [vmem:[%s1203 + $0x8] sm:$0xf]
        %v1207 = vld [vmem:[%s1203 + $0xc] sm:$0xf]
        %s1208 = scalar_lea.vmem %s4, 1
        %v1209 = vld [vmem:[%s1208] sm:$0x1]
        %v1211 = vlaneseq
        %v1212 = vshrl.u32 %v1211, 7
        %v1213 = vsub.s32 0, %v1212
        %v1214 = vrot.slane %v1209, %v1213
        %v1220 = vunpack.c.l.b16 %v1204
        %v1221 = vunpack.c.l.b16 %v1205
        %v1222 = vunpack.c.l.b16 %v1206
        %v1223 = vunpack.c.l.b16 %v1207
        %v1224 = vpack.c.b16 %v1221, %v1220
        %v1225 = vpack.c.b16 %v1223, %v1222
        %1228 = vmatprep.subr.bf16.mxu0 0
        %1229 = vmatpush1.bf16.msra.mxu0 0
        %1230 = vmatprep.subr.bf16.mxu0 0
        %1231 = vmatpush1.bf16.msra.mxu0 0
        %1232 = vmatprep.subr.bf16.mxu0 0
        %1233 = vmatpush1.bf16.msra.mxu0 0
        %1234 = vmatprep.subr.bf16.mxu0 0
        %1235 = vmatpush1.bf16.msra.mxu0 0
        %1236 = vmatprep.subr.bf16.mxu0 0
        %1237 = vmatpush1.bf16.msra.mxu0 0
        %1238 = vmatprep.subr.bf16.mxu0 0
        %1239 = vmatpush1.bf16.msra.mxu0 0
        %1240 = vmatprep.subr.bf16.mxu0 0
        %1241 = vmatpush1.bf16.msra.mxu0 %v1225
        %1242 = vmatprep.subr.bf16.mxu0 0
        %1243 = vmatpush1.bf16.msra.mxu0 %v1224
        %1244 = vmatprep.subr.bf16.mxu0 0
        %1245 = vmatpush2.bf16.msra.mxu0 0
        %1246 = vmatprep.subr.bf16.mxu0 0
        %1247 = vmatpush2.bf16.msra.mxu0 0
        %1248 = vmatprep.subr.bf16.mxu0 0
        %1249 = vmatpush2.bf16.msra.mxu0 0
        %1250 = vmatprep.subr.bf16.mxu0 0
        %1251 = vmatpush2.bf16.msra.mxu0 0
        %1252 = vmatprep.subr.bf16.mxu0 0
        %1253 = vmatpush2.bf16.msra.mxu0 0
        %1254 = vmatprep.subr.bf16.mxu0 0
        %1255 = vmatpush2.bf16.msra.mxu0 0
        %1256 = vmatprep.subr.bf16.mxu0 0
        %1257 = vmatpush2.bf16.msra.mxu0 0
        %1258 = vmatprep.subr.bf16.mxu0 0
        %1259 = vmatpush2.bf16.msra.mxu0 0
        %1260 = vmatprep.mubr.bf16.mxu0 0
        %1261 = vmatmul.mubr.bf16.gmra.mxu0 %v1050
        %v1262 = vpop.f32.mrf.mxu0
        %v1263 = vadd.f32 %v1214, %v1262
        %v1264 = vpop.f32.mrf.mxu0
        %v1265 = vpop.f32.mrf.mxu0
        %v1266 = vpop.f32.mrf.mxu0
        %1267 = vdwg.mxu0
        %v1268 = vpack.c.bf16 %v1263, %v1263
        %s1269 = scalar_lea.vmem [#allocation2], 4
        %v1270 = vld [vmem:[%s1269] sm:$0xf]
        %v1272 = vsel %vm1094, %v1268, 0
        %v1275 = vsel %vm1098, %v1270, 0
        %1277 = vmatprep.subr.bf16.mxu0 0
        %1278 = vmatpush1.bf16.msra.mxu0 0
        %1279 = vmatprep.subr.bf16.mxu0 0
        %1280 = vmatpush1.bf16.msra.mxu0 0
        %1281 = vmatprep.subr.bf16.mxu0 0
        %1282 = vmatpush1.bf16.msra.mxu0 0
        %1283 = vmatprep.subr.bf16.mxu0 0
        %1284 = vmatpush1.bf16.msra.mxu0 0
        %1285 = vmatprep.subr.bf16.mxu0 0
        %1286 = vmatpush1.bf16.msra.mxu0 0
        %1287 = vmatprep.subr.bf16.mxu0 0
        %1288 = vmatpush1.bf16.msra.mxu0 0
        %1289 = vmatprep.subr.bf16.mxu0 0
        %1290 = vmatpush1.bf16.msra.mxu0 0
        %1291 = vmatprep.subr.bf16.mxu0 0
        %1292 = vmatpush1.bf16.msra.mxu0 %v1275
        %1293 = vmatprep.subr.bf16.mxu0 0
        %1294 = vmatpush2.bf16.msra.mxu0 0
        %1295 = vmatprep.subr.bf16.mxu0 0
        %1296 = vmatpush2.bf16.msra.mxu0 0
        %1297 = vmatprep.subr.bf16.mxu0 0
        %1298 = vmatpush2.bf16.msra.mxu0 0
        %1299 = vmatprep.subr.bf16.mxu0 0
        %1300 = vmatpush2.bf16.msra.mxu0 0
        %1301 = vmatprep.subr.bf16.mxu0 0
        %1302 = vmatpush2.bf16.msra.mxu0 0
        %1303 = vmatprep.subr.bf16.mxu0 0
        %1304 = vmatpush2.bf16.msra.mxu0 0
        %1305 = vmatprep.subr.bf16.mxu0 0
        %1306 = vmatpush2.bf16.msra.mxu0 0
        %1307 = vmatprep.subr.bf16.mxu0 0
        %1308 = vmatpush2.bf16.msra.mxu0 0
        %1309 = vmatprep.mubr.bf16.mxu0 0
        %1310 = vmatmul.mubr.bf16.gmra.mxu0 %v1272
        %v1311 = vpop.f32.mrf.mxu0
        %v1312 = vadd.f32 0.0, %v1311
        %v1313 = vpop.f32.mrf.mxu0
        %v1314 = vpop.f32.mrf.mxu0
        %v1315 = vpop.f32.mrf.mxu0
        %1316 = vdwg.mxu0
        %v1317 = vsel %vm1094, %v1312, -inf
        %1318 = vmax.xlane.f32.xlu0 %v1317
        %v1319 = vpop.xlane.xlu0 %1318
        %v1320 = vsub.f32 %v1312, %v1319
        %v1321 = vmul.f32 %v1320, 1.442695
        %v1322 = vpow.pop %v1321
        %v1323 = vsel %vm1094, %v1322, 0.0
        %1324 = vadd.xlane.f32.xlu0 %v1323
        %v1325 = vpop.xlane.xlu0 %1324
        %v1326 = vrcp.pop %v1325
        %v1327 = vpack.c.bf16 %v1322, %v1322
        %s1328 = scalar_lea.vmem [#allocation3], 4
        %v1329 = vld [vmem:[%s1328] sm:$0xf]
        %v1331 = vsel %vm1094, %v1327, 0
        %v1334 = vsel %vm1098, %v1329, 0
        %1336 = vmatprep.subr.bf16.mxu0 0
        %1337 = vmatpush1.bf16.msra.mxu0 0
        %1338 = vmatprep.subr.bf16.mxu0 0
        %1339 = vmatpush1.bf16.msra.mxu0 0
        %1340 = vmatprep.subr.bf16.mxu0 0
        %1341 = vmatpush1.bf16.msra.mxu0 0
        %1342 = vmatprep.subr.bf16.mxu0 0
        %1343 = vmatpush1.bf16.msra.mxu0 0
        %1344 = vmatprep.subr.bf16.mxu0 0
        %1345 = vmatpush1.bf16.msra.mxu0 0
        %1346 = vmatprep.subr.bf16.mxu0 0
        %1347 = vmatpush1.bf16.msra.mxu0 0
        %1348 = vmatprep.subr.bf16.mxu0 0
        %1349 = vmatpush1.bf16.msra.mxu0 0
        %1350 = vmatprep.subr.bf16.mxu0 0
        %1351 = vmatpush1.bf16.msra.mxu0 %v1334
        %1352 = vmatprep.subr.bf16.mxu0 0
        %1353 = vmatpush2.bf16.msra.mxu0 0
        %1354 = vmatprep.subr.bf16.mxu0 0
        %1355 = vmatpush2.bf16.msra.mxu0 0
        %1356 = vmatprep.subr.bf16.mxu0 0
        %1357 = vmatpush2.bf16.msra.mxu0 0
        %1358 = vmatprep.subr.bf16.mxu0 0
        %1359 = vmatpush2.bf16.msra.mxu0 0
        %1360 = vmatprep.subr.bf16.mxu0 0
        %1361 = vmatpush2.bf16.msra.mxu0 0
        %1362 = vmatprep.subr.bf16.mxu0 0
        %1363 = vmatpush2.bf16.msra.mxu0 0
        %1364 = vmatprep.subr.bf16.mxu0 0
        %1365 = vmatpush2.bf16.msra.mxu0 0
        %1366 = vmatprep.subr.bf16.mxu0 0
        %1367 = vmatpush2.bf16.msra.mxu0 0
        %1368 = vmatprep.mubr.bf16.mxu0 0
        %1369 = vmatmul.mubr.bf16.gmra.mxu0 %v1331
        %v1370 = vpop.f32.mrf.mxu0
        %v1371 = vadd.f32 0.0, %v1370
        %v1372 = vpop.f32.mrf.mxu0
        %v1373 = vpop.f32.mrf.mxu0
        %v1374 = vpop.f32.mrf.mxu0
        %1375 = vdwg.mxu0
        %v1376 = vmul.f32 %v1371, %v1326
        %v1377 = vpack.c.bf16 %v1376, %v1376
        %s1378 = scalar_lea.vmem %s7, 4
        %v1379 = vld [vmem:[%s1378] sm:$0xf]
        %v1381 = vsel %vm1094, %v1377, 0
        %v1384 = vsel %vm1098, %v1379, 0
        %1386 = vmatprep.subr.bf16.mxu0 0
        %1387 = vmatpush1.bf16.msra.mxu0 0
        %1388 = vmatprep.subr.bf16.mxu0 0
        %1389 = vmatpush1.bf16.msra.mxu0 0
        %1390 = vmatprep.subr.bf16.mxu0 0
        %1391 = vmatpush1.bf16.msra.mxu0 0
        %1392 = vmatprep.subr.bf16.mxu0 0
        %1393 = vmatpush1.bf16.msra.mxu0 0
        %1394 = vmatprep.subr.bf16.mxu0 0
        %1395 = vmatpush1.bf16.msra.mxu0 0
        %1396 = vmatprep.subr.bf16.mxu0 0
        %1397 = vmatpush1.bf16.msra.mxu0 0
        %1398 = vmatprep.subr.bf16.mxu0 0
        %1399 = vmatpush1.bf16.msra.mxu0 0
        %1400 = vmatprep.subr.bf16.mxu0 0
        %1401 = vmatpush1.bf16.msra.mxu0 %v1384
        %1402 = vmatprep.subr.bf16.mxu0 0
        %1403 = vmatpush2.bf16.msra.mxu0 0
        %1404 = vmatprep.subr.bf16.mxu0 0
        %1405 = vmatpush2.bf16.msra.mxu0 0
        %1406 = vmatprep.subr.bf16.mxu0 0
        %1407 = vmatpush2.bf16.msra.mxu0 0
        %1408 = vmatprep.subr.bf16.mxu0 0
        %1409 = vmatpush2.bf16.msra.mxu0 0
        %1410 = vmatprep.subr.bf16.mxu0 0
        %1411 = vmatpush2.bf16.msra.mxu0 0
        %1412 = vmatprep.subr.bf16.mxu0 0
        %1413 = vmatpush2.bf16.msra.mxu0 0
        %1414 = vmatprep.subr.bf16.mxu0 0
        %1415 = vmatpush2.bf16.msra.mxu0 0
        %1416 = vmatprep.subr.bf16.mxu0 0
        %1417 = vmatpush2.bf16.msra.mxu0 0
        %1418 = vmatprep.mubr.bf16.mxu0 0
        %1419 = vmatmul.mubr.bf16.gmra.mxu0 %v1381
        %v1420 = vpop.f32.mrf.mxu0
        %v1421 = vadd.f32 0.0, %v1420
        %v1422 = vpop.f32.mrf.mxu0
        %v1423 = vpop.f32.mrf.mxu0
        %v1424 = vpop.f32.mrf.mxu0
        %1425 = vdwg.mxu0
        %v1427 = vsel %vm1094, %v1201, 0
        %v1430 = vsel %vm1098, %v1202, 0
        %1432 = vmatprep.subr.bf16.mxu0 0
        %1433 = vmatpush1.bf16.msra.mxu0 0
        %1434 = vmatprep.subr.bf16.mxu0 0
        %1435 = vmatpush1.bf16.msra.mxu0 0
        %1436 = vmatprep.subr.bf16.mxu0 0
        %1437 = vmatpush1.bf16.msra.mxu0 0
        %1438 = vmatprep.subr.bf16.mxu0 0
        %1439 = vmatpush1.bf16.msra.mxu0 0
        %1440 = vmatprep.subr.bf16.mxu0 0
        %1441 = vmatpush1.bf16.msra.mxu0 0
        %1442 = vmatprep.subr.bf16.mxu0 0
        %1443 = vmatpush1.bf16.msra.mxu0 0
        %1444 = vmatprep.subr.bf16.mxu0 0
        %1445 = vmatpush1.bf16.msra.mxu0 0
        %1446 = vmatprep.subr.bf16.mxu0 0
        %1447 = vmatpush1.bf16.msra.mxu0 %v1430
        %1448 = vmatprep.subr.bf16.mxu0 0
        %1449 = vmatpush2.bf16.msra.mxu0 0
        %1450 = vmatprep.subr.bf16.mxu0 0
        %1451 = vmatpush2.bf16.msra.mxu0 0
        %1452 = vmatprep.subr.bf16.mxu0 0
        %1453 = vmatpush2.bf16.msra.mxu0 0
        %1454 = vmatprep.subr.bf16.mxu0 0
        %1455 = vmatpush2.bf16.msra.mxu0 0
        %1456 = vmatprep.subr.bf16.mxu0 0
        %1457 = vmatpush2.bf16.msra.mxu0 0
        %1458 = vmatprep.subr.bf16.mxu0 0
        %1459 = vmatpush2.bf16.msra.mxu0 0
        %1460 = vmatprep.subr.bf16.mxu0 0
        %1461 = vmatpush2.bf16.msra.mxu0 0
        %1462 = vmatprep.subr.bf16.mxu0 0
        %1463 = vmatpush2.bf16.msra.mxu0 0
        %1464 = vmatprep.mubr.bf16.mxu0 0
        %1465 = vmatmul.mubr.bf16.gmra.mxu0 %v1427
        %v1466 = vpop.f32.mrf.mxu0
        %v1467 = vadd.f32 %v1421, %v1466
        %v1468 = vpop.f32.mrf.mxu0
        %v1469 = vpop.f32.mrf.mxu0
        %v1470 = vpop.f32.mrf.mxu0
        %1471 = vdwg.mxu0
        %s1472 = scalar_lea.vmem %s1, 32
        %v1473 = vld [vmem:[%s1472] sm:$0xf]
        %v1474 = vld [vmem:[%s1472 + $0x4] sm:$0xf]
        %v1475 = vld [vmem:[%s1472 + $0x8] sm:$0xf]
        %v1476 = vld [vmem:[%s1472 + $0xc] sm:$0xf]
        %s1477 = scalar_lea.vmem %s4, 2
        %v1478 = vld [vmem:[%s1477] sm:$0x1]
        %v1480 = vlaneseq
        %v1481 = vshrl.u32 %v1480, 7
        %v1482 = vsub.s32 0, %v1481
        %v1483 = vrot.slane %v1478, %v1482
        %v1489 = vunpack.c.l.b16 %v1473
        %v1490 = vunpack.c.l.b16 %v1474
        %v1491 = vunpack.c.l.b16 %v1475
        %v1492 = vunpack.c.l.b16 %v1476
        %v1493 = vpack.c.b16 %v1490, %v1489
        %v1494 = vpack.c.b16 %v1492, %v1491
        %1497 = vmatprep.subr.bf16.mxu0 0
        %1498 = vmatpush1.bf16.msra.mxu0 0
        %1499 = vmatprep.subr.bf16.mxu0 0
        %1500 = vmatpush1.bf16.msra.mxu0 0
        %1501 = vmatprep.subr.bf16.mxu0 0
        %1502 = vmatpush1.bf16.msra.mxu0 0
        %1503 = vmatprep.subr.bf16.mxu0 0
        %1504 = vmatpush1.bf16.msra.mxu0 0
        %1505 = vmatprep.subr.bf16.mxu0 0
        %1506 = vmatpush1.bf16.msra.mxu0 0
        %1507 = vmatprep.subr.bf16.mxu0 0
        %1508 = vmatpush1.bf16.msra.mxu0 0
        %1509 = vmatprep.subr.bf16.mxu0 0
        %1510 = vmatpush1.bf16.msra.mxu0 %v1494
        %1511 = vmatprep.subr.bf16.mxu0 0
        %1512 = vmatpush1.bf16.msra.mxu0 %v1493
        %1513 = vmatprep.subr.bf16.mxu0 0
        %1514 = vmatpush2.bf16.msra.mxu0 0
        %1515 = vmatprep.subr.bf16.mxu0 0
        %1516 = vmatpush2.bf16.msra.mxu0 0
        %1517 = vmatprep.subr.bf16.mxu0 0
        %1518 = vmatpush2.bf16.msra.mxu0 0
        %1519 = vmatprep.subr.bf16.mxu0 0
        %1520 = vmatpush2.bf16.msra.mxu0 0
        %1521 = vmatprep.subr.bf16.mxu0 0
        %1522 = vmatpush2.bf16.msra.mxu0 0
        %1523 = vmatprep.subr.bf16.mxu0 0
        %1524 = vmatpush2.bf16.msra.mxu0 0
        %1525 = vmatprep.subr.bf16.mxu0 0
        %1526 = vmatpush2.bf16.msra.mxu0 0
        %1527 = vmatprep.subr.bf16.mxu0 0
        %1528 = vmatpush2.bf16.msra.mxu0 0
        %1529 = vmatprep.mubr.bf16.mxu0 0
        %1530 = vmatmul.mubr.bf16.gmra.mxu0 %v1050
        %v1531 = vpop.f32.mrf.mxu0
        %v1532 = vadd.f32 %v1483, %v1531
        %v1533 = vpop.f32.mrf.mxu0
        %v1534 = vpop.f32.mrf.mxu0
        %v1535 = vpop.f32.mrf.mxu0
        %1536 = vdwg.mxu0
        %v1537 = vpack.c.bf16 %v1532, %v1532
        %s1538 = scalar_lea.vmem [#allocation2], 8
        %v1539 = vld [vmem:[%s1538] sm:$0xf]
        %v1541 = vsel %vm1094, %v1537, 0
        %v1544 = vsel %vm1098, %v1539, 0
        %1546 = vmatprep.subr.bf16.mxu0 0
        %1547 = vmatpush1.bf16.msra.mxu0 0
        %1548 = vmatprep.subr.bf16.mxu0 0
        %1549 = vmatpush1.bf16.msra.mxu0 0
        %1550 = vmatprep.subr.bf16.mxu0 0
        %1551 = vmatpush1.bf16.msra.mxu0 0
        %1552 = vmatprep.subr.bf16.mxu0 0
        %1553 = vmatpush1.bf16.msra.mxu0 0
        %1554 = vmatprep.subr.bf16.mxu0 0
        %1555 = vmatpush1.bf16.msra.mxu0 0
        %1556 = vmatprep.subr.bf16.mxu0 0
        %1557 = vmatpush1.bf16.msra.mxu0 0
        %1558 = vmatprep.subr.bf16.mxu0 0
        %1559 = vmatpush1.bf16.msra.mxu0 0
        %1560 = vmatprep.subr.bf16.mxu0 0
        %1561 = vmatpush1.bf16.msra.mxu0 %v1544
        %1562 = vmatprep.subr.bf16.mxu0 0
        %1563 = vmatpush2.bf16.msra.mxu0 0
        %1564 = vmatprep.subr.bf16.mxu0 0
        %1565 = vmatpush2.bf16.msra.mxu0 0
        %1566 = vmatprep.subr.bf16.mxu0 0
        %1567 = vmatpush2.bf16.msra.mxu0 0
        %1568 = vmatprep.subr.bf16.mxu0 0
        %1569 = vmatpush2.bf16.msra.mxu0 0
        %1570 = vmatprep.subr.bf16.mxu0 0
        %1571 = vmatpush2.bf16.msra.mxu0 0
        %1572 = vmatprep.subr.bf16.mxu0 0
        %1573 = vmatpush2.bf16.msra.mxu0 0
        %1574 = vmatprep.subr.bf16.mxu0 0
        %1575 = vmatpush2.bf16.msra.mxu0 0
        %1576 = vmatprep.subr.bf16.mxu0 0
        %1577 = vmatpush2.bf16.msra.mxu0 0
        %1578 = vmatprep.mubr.bf16.mxu0 0
        %1579 = vmatmul.mubr.bf16.gmra.mxu0 %v1541
        %v1580 = vpop.f32.mrf.mxu0
        %v1581 = vadd.f32 0.0, %v1580
        %v1582 = vpop.f32.mrf.mxu0
        %v1583 = vpop.f32.mrf.mxu0
        %v1584 = vpop.f32.mrf.mxu0
        %1585 = vdwg.mxu0
        %v1586 = vsel %vm1094, %v1581, -inf
        %1587 = vmax.xlane.f32.xlu0 %v1586
        %v1588 = vpop.xlane.xlu0 %1587
        %v1589 = vsub.f32 %v1581, %v1588
        %v1590 = vmul.f32 %v1589, 1.442695
        %v1591 = vpow.pop %v1590
        %v1592 = vsel %vm1094, %v1591, 0.0
        %1593 = vadd.xlane.f32.xlu0 %v1592
        %v1594 = vpop.xlane.xlu0 %1593
        %v1595 = vrcp.pop %v1594
        %v1596 = vpack.c.bf16 %v1591, %v1591
        %s1597 = scalar_lea.vmem [#allocation3], 8
        %v1598 = vld [vmem:[%s1597] sm:$0xf]
        %v1600 = vsel %vm1094, %v1596, 0
        %v1603 = vsel %vm1098, %v1598, 0
        %1605 = vmatprep.subr.bf16.mxu0 0
        %1606 = vmatpush1.bf16.msra.mxu0 0
        %1607 = vmatprep.subr.bf16.mxu0 0
        %1608 = vmatpush1.bf16.msra.mxu0 0
        %1609 = vmatprep.subr.bf16.mxu0 0
        %1610 = vmatpush1.bf16.msra.mxu0 0
        %1611 = vmatprep.subr.bf16.mxu0 0
        %1612 = vmatpush1.bf16.msra.mxu0 0
        %1613 = vmatprep.subr.bf16.mxu0 0
        %1614 = vmatpush1.bf16.msra.mxu0 0
        %1615 = vmatprep.subr.bf16.mxu0 0
        %1616 = vmatpush1.bf16.msra.mxu0 0
        %1617 = vmatprep.subr.bf16.mxu0 0
        %1618 = vmatpush1.bf16.msra.mxu0 0
        %1619 = vmatprep.subr.bf16.mxu0 0
        %1620 = vmatpush1.bf16.msra.mxu0 %v1603
        %1621 = vmatprep.subr.bf16.mxu0 0
        %1622 = vmatpush2.bf16.msra.mxu0 0
        %1623 = vmatprep.subr.bf16.mxu0 0
        %1624 = vmatpush2.bf16.msra.mxu0 0
        %1625 = vmatprep.subr.bf16.mxu0 0
        %1626 = vmatpush2.bf16.msra.mxu0 0
        %1627 = vmatprep.subr.bf16.mxu0 0
        %1628 = vmatpush2.bf16.msra.mxu0 0
        %1629 = vmatprep.subr.bf16.mxu0 0
        %1630 = vmatpush2.bf16.msra.mxu0 0
        %1631 = vmatprep.subr.bf16.mxu0 0
        %1632 = vmatpush2.bf16.msra.mxu0 0
        %1633 = vmatprep.subr.bf16.mxu0 0
        %1634 = vmatpush2.bf16.msra.mxu0 0
        %1635 = vmatprep.subr.bf16.mxu0 0
        %1636 = vmatpush2.bf16.msra.mxu0 0
        %1637 = vmatprep.mubr.bf16.mxu0 0
        %1638 = vmatmul.mubr.bf16.gmra.mxu0 %v1600
        %v1639 = vpop.f32.mrf.mxu0
        %v1640 = vadd.f32 0.0, %v1639
        %v1641 = vpop.f32.mrf.mxu0
        %v1642 = vpop.f32.mrf.mxu0
        %v1643 = vpop.f32.mrf.mxu0
        %1644 = vdwg.mxu0
        %v1645 = vmul.f32 %v1640, %v1595
        %v1646 = vpack.c.bf16 %v1645, %v1645
        %s1647 = scalar_lea.vmem %s7, 8
        %v1648 = vld [vmem:[%s1647] sm:$0xf]
        %v1650 = vsel %vm1094, %v1646, 0
        %v1653 = vsel %vm1098, %v1648, 0
        %1655 = vmatprep.subr.bf16.mxu0 0
        %1656 = vmatpush1.bf16.msra.mxu0 0
        %1657 = vmatprep.subr.bf16.mxu0 0
        %1658 = vmatpush1.bf16.msra.mxu0 0
        %1659 = vmatprep.subr.bf16.mxu0 0
        %1660 = vmatpush1.bf16.msra.mxu0 0
        %1661 = vmatprep.subr.bf16.mxu0 0
        %1662 = vmatpush1.bf16.msra.mxu0 0
        %1663 = vmatprep.subr.bf16.mxu0 0
        %1664 = vmatpush1.bf16.msra.mxu0 0
        %1665 = vmatprep.subr.bf16.mxu0 0
        %1666 = vmatpush1.bf16.msra.mxu0 0
        %1667 = vmatprep.subr.bf16.mxu0 0
        %1668 = vmatpush1.bf16.msra.mxu0 0
        %1669 = vmatprep.subr.bf16.mxu0 0
        %1670 = vmatpush1.bf16.msra.mxu0 %v1653
        %1671 = vmatprep.subr.bf16.mxu0 0
        %1672 = vmatpush2.bf16.msra.mxu0 0
        %1673 = vmatprep.subr.bf16.mxu0 0
        %1674 = vmatpush2.bf16.msra.mxu0 0
        %1675 = vmatprep.subr.bf16.mxu0 0
        %1676 = vmatpush2.bf16.msra.mxu0 0
        %1677 = vmatprep.subr.bf16.mxu0 0
        %1678 = vmatpush2.bf16.msra.mxu0 0
        %1679 = vmatprep.subr.bf16.mxu0 0
        %1680 = vmatpush2.bf16.msra.mxu0 0
        %1681 = vmatprep.subr.bf16.mxu0 0
        %1682 = vmatpush2.bf16.msra.mxu0 0
        %1683 = vmatprep.subr.bf16.mxu0 0
        %1684 = vmatpush2.bf16.msra.mxu0 0
        %1685 = vmatprep.subr.bf16.mxu0 0
        %1686 = vmatpush2.bf16.msra.mxu0 0
        %1687 = vmatprep.mubr.bf16.mxu0 0
        %1688 = vmatmul.mubr.bf16.gmra.mxu0 %v1650
        %v1689 = vpop.f32.mrf.mxu0
        %v1690 = vadd.f32 0.0, %v1689
        %v1691 = vpop.f32.mrf.mxu0
        %v1692 = vpop.f32.mrf.mxu0
        %v1693 = vpop.f32.mrf.mxu0
        %1694 = vdwg.mxu0
        %v1695 = vadd.f32 %v1467, %v1690
        %s1696 = scalar_lea.vmem %s1, 48
        %v1697 = vld [vmem:[%s1696] sm:$0xf]
        %v1698 = vld [vmem:[%s1696 + $0x4] sm:$0xf]
        %v1699 = vld [vmem:[%s1696 + $0x8] sm:$0xf]
        %v1700 = vld [vmem:[%s1696 + $0xc] sm:$0xf]
        %s1701 = scalar_lea.vmem %s4, 3
        %v1702 = vld [vmem:[%s1701] sm:$0x1]
        %v1704 = vlaneseq
        %v1705 = vshrl.u32 %v1704, 7
        %v1706 = vsub.s32 0, %v1705
        %v1707 = vrot.slane %v1702, %v1706
        %v1713 = vunpack.c.l.b16 %v1697
        %v1714 = vunpack.c.l.b16 %v1698
        %v1715 = vunpack.c.l.b16 %v1699
        %v1716 = vunpack.c.l.b16 %v1700
        %v1717 = vpack.c.b16 %v1714, %v1713
        %v1718 = vpack.c.b16 %v1716, %v1715
        %1721 = vmatprep.subr.bf16.mxu0 0
        %1722 = vmatpush1.bf16.msra.mxu0 0
        %1723 = vmatprep.subr.bf16.mxu0 0
        %1724 = vmatpush1.bf16.msra.mxu0 0
        %1725 = vmatprep.subr.bf16.mxu0 0
        %1726 = vmatpush1.bf16.msra.mxu0 0
        %1727 = vmatprep.subr.bf16.mxu0 0
        %1728 = vmatpush1.bf16.msra.mxu0 0
        %1729 = vmatprep.subr.bf16.mxu0 0
        %1730 = vmatpush1.bf16.msra.mxu0 0
        %1731 = vmatprep.subr.bf16.mxu0 0
        %1732 = vmatpush1.bf16.msra.mxu0 0
        %1733 = vmatprep.subr.bf16.mxu0 0
        %1734 = vmatpush1.bf16.msra.mxu0 %v1718
        %1735 = vmatprep.subr.bf16.mxu0 0
        %1736 = vmatpush1.bf16.msra.mxu0 %v1717
        %1737 = vmatprep.subr.bf16.mxu0 0
        %1738 = vmatpush2.bf16.msra.mxu0 0
        %1739 = vmatprep.subr.bf16.mxu0 0
        %1740 = vmatpush2.bf16.msra.mxu0 0
        %1741 = vmatprep.subr.bf16.mxu0 0
        %1742 = vmatpush2.bf16.msra.mxu0 0
        %1743 = vmatprep.subr.bf16.mxu0 0
        %1744 = vmatpush2.bf16.msra.mxu0 0
        %1745 = vmatprep.subr.bf16.mxu0 0
        %1746 = vmatpush2.bf16.msra.mxu0 0
        %1747 = vmatprep.subr.bf16.mxu0 0
        %1748 = vmatpush2.bf16.msra.mxu0 0
        %1749 = vmatprep.subr.bf16.mxu0 0
        %1750 = vmatpush2.bf16.msra.mxu0 0
        %1751 = vmatprep.subr.bf16.mxu0 0
        %1752 = vmatpush2.bf16.msra.mxu0 0
        %1753 = vmatprep.mubr.bf16.mxu0 0
        %1754 = vmatmul.mubr.bf16.gmra.mxu0 %v1050
        %v1755 = vpop.f32.mrf.mxu0
        %v1756 = vadd.f32 %v1707, %v1755
        %v1757 = vpop.f32.mrf.mxu0
        %v1758 = vpop.f32.mrf.mxu0
        %v1759 = vpop.f32.mrf.mxu0
        %1760 = vdwg.mxu0
        %v1761 = vpack.c.bf16 %v1756, %v1756
        %s1762 = scalar_lea.vmem [#allocation2], 12
        %v1763 = vld [vmem:[%s1762] sm:$0xf]
        %v1765 = vsel %vm1094, %v1761, 0
        %v1768 = vsel %vm1098, %v1763, 0
        %1770 = vmatprep.subr.bf16.mxu0 0
        %1771 = vmatpush1.bf16.msra.mxu0 0
        %1772 = vmatprep.subr.bf16.mxu0 0
        %1773 = vmatpush1.bf16.msra.mxu0 0
        %1774 = vmatprep.subr.bf16.mxu0 0
        %1775 = vmatpush1.bf16.msra.mxu0 0
        %1776 = vmatprep.subr.bf16.mxu0 0
        %1777 = vmatpush1.bf16.msra.mxu0 0
        %1778 = vmatprep.subr.bf16.mxu0 0
        %1779 = vmatpush1.bf16.msra.mxu0 0
        %1780 = vmatprep.subr.bf16.mxu0 0
        %1781 = vmatpush1.bf16.msra.mxu0 0
        %1782 = vmatprep.subr.bf16.mxu0 0
        %1783 = vmatpush1.bf16.msra.mxu0 0
        %1784 = vmatprep.subr.bf16.mxu0 0
        %1785 = vmatpush1.bf16.msra.mxu0 %v1768
        %1786 = vmatprep.subr.bf16.mxu0 0
        %1787 = vmatpush2.bf16.msra.mxu0 0
        %1788 = vmatprep.subr.bf16.mxu0 0
        %1789 = vmatpush2.bf16.msra.mxu0 0
        %1790 = vmatprep.subr.bf16.mxu0 0
        %1791 = vmatpush2.bf16.msra.mxu0 0
        %1792 = vmatprep.subr.bf16.mxu0 0
        %1793 = vmatpush2.bf16.msra.mxu0 0
        %1794 = vmatprep.subr.bf16.mxu0 0
        %1795 = vmatpush2.bf16.msra.mxu0 0
        %1796 = vmatprep.subr.bf16.mxu0 0
        %1797 = vmatpush2.bf16.msra.mxu0 0
        %1798 = vmatprep.subr.bf16.mxu0 0
        %1799 = vmatpush2.bf16.msra.mxu0 0
        %1800 = vmatprep.subr.bf16.mxu0 0
        %1801 = vmatpush2.bf16.msra.mxu0 0
        %1802 = vmatprep.mubr.bf16.mxu0 0
        %1803 = vmatmul.mubr.bf16.gmra.mxu0 %v1765
        %v1804 = vpop.f32.mrf.mxu0
        %v1805 = vadd.f32 0.0, %v1804
        %v1806 = vpop.f32.mrf.mxu0
        %v1807 = vpop.f32.mrf.mxu0
        %v1808 = vpop.f32.mrf.mxu0
        %1809 = vdwg.mxu0
        %v1810 = vsel %vm1094, %v1805, -inf
        %1811 = vmax.xlane.f32.xlu0 %v1810
        %v1812 = vpop.xlane.xlu0 %1811
        %v1813 = vsub.f32 %v1805, %v1812
        %v1814 = vmul.f32 %v1813, 1.442695
        %v1815 = vpow.pop %v1814
        %v1816 = vsel %vm1094, %v1815, 0.0
        %1817 = vadd.xlane.f32.xlu0 %v1816
        %v1818 = vpop.xlane.xlu0 %1817
        %v1819 = vrcp.pop %v1818
        %v1820 = vpack.c.bf16 %v1815, %v1815
        %s1821 = scalar_lea.vmem [#allocation3], 12
        %v1822 = vld [vmem:[%s1821] sm:$0xf]
        %v1824 = vsel %vm1094, %v1820, 0
        %v1827 = vsel %vm1098, %v1822, 0
        %1829 = vmatprep.subr.bf16.mxu0 0
        %1830 = vmatpush1.bf16.msra.mxu0 0
        %1831 = vmatprep.subr.bf16.mxu0 0
        %1832 = vmatpush1.bf16.msra.mxu0 0
        %1833 = vmatprep.subr.bf16.mxu0 0
        %1834 = vmatpush1.bf16.msra.mxu0 0
        %1835 = vmatprep.subr.bf16.mxu0 0
        %1836 = vmatpush1.bf16.msra.mxu0 0
        %1837 = vmatprep.subr.bf16.mxu0 0
        %1838 = vmatpush1.bf16.msra.mxu0 0
        %1839 = vmatprep.subr.bf16.mxu0 0
        %1840 = vmatpush1.bf16.msra.mxu0 0
        %1841 = vmatprep.subr.bf16.mxu0 0
        %1842 = vmatpush1.bf16.msra.mxu0 0
        %1843 = vmatprep.subr.bf16.mxu0 0
        %1844 = vmatpush1.bf16.msra.mxu0 %v1827
        %1845 = vmatprep.subr.bf16.mxu0 0
        %1846 = vmatpush2.bf16.msra.mxu0 0
        %1847 = vmatprep.subr.bf16.mxu0 0
        %1848 = vmatpush2.bf16.msra.mxu0 0
        %1849 = vmatprep.subr.bf16.mxu0 0
        %1850 = vmatpush2.bf16.msra.mxu0 0
        %1851 = vmatprep.subr.bf16.mxu0 0
        %1852 = vmatpush2.bf16.msra.mxu0 0
        %1853 = vmatprep.subr.bf16.mxu0 0
        %1854 = vmatpush2.bf16.msra.mxu0 0
        %1855 = vmatprep.subr.bf16.mxu0 0
        %1856 = vmatpush2.bf16.msra.mxu0 0
        %1857 = vmatprep.subr.bf16.mxu0 0
        %1858 = vmatpush2.bf16.msra.mxu0 0
        %1859 = vmatprep.subr.bf16.mxu0 0
        %1860 = vmatpush2.bf16.msra.mxu0 0
        %1861 = vmatprep.mubr.bf16.mxu0 0
        %1862 = vmatmul.mubr.bf16.gmra.mxu0 %v1824
        %v1863 = vpop.f32.mrf.mxu0
        %v1864 = vadd.f32 0.0, %v1863
        %v1865 = vpop.f32.mrf.mxu0
        %v1866 = vpop.f32.mrf.mxu0
        %v1867 = vpop.f32.mrf.mxu0
        %1868 = vdwg.mxu0
        %v1869 = vmul.f32 %v1864, %v1819
        %v1870 = vpack.c.bf16 %v1869, %v1869
        %s1871 = scalar_lea.vmem %s7, 12
        %v1872 = vld [vmem:[%s1871] sm:$0xf]
        %v1874 = vsel %vm1094, %v1870, 0
        %v1877 = vsel %vm1098, %v1872, 0
        %1879 = vmatprep.subr.bf16.mxu0 0
        %1880 = vmatpush1.bf16.msra.mxu0 0
        %1881 = vmatprep.subr.bf16.mxu0 0
        %1882 = vmatpush1.bf16.msra.mxu0 0
        %1883 = vmatprep.subr.bf16.mxu0 0
        %1884 = vmatpush1.bf16.msra.mxu0 0
        %1885 = vmatprep.subr.bf16.mxu0 0
        %1886 = vmatpush1.bf16.msra.mxu0 0
        %1887 = vmatprep.subr.bf16.mxu0 0
        %1888 = vmatpush1.bf16.msra.mxu0 0
        %1889 = vmatprep.subr.bf16.mxu0 0
        %1890 = vmatpush1.bf16.msra.mxu0 0
        %1891 = vmatprep.subr.bf16.mxu0 0
        %1892 = vmatpush1.bf16.msra.mxu0 0
        %1893 = vmatprep.subr.bf16.mxu0 0
        %1894 = vmatpush1.bf16.msra.mxu0 %v1877
        %1895 = vmatprep.subr.bf16.mxu0 0
        %1896 = vmatpush2.bf16.msra.mxu0 0
        %1897 = vmatprep.subr.bf16.mxu0 0
        %1898 = vmatpush2.bf16.msra.mxu0 0
        %1899 = vmatprep.subr.bf16.mxu0 0
        %1900 = vmatpush2.bf16.msra.mxu0 0
        %1901 = vmatprep.subr.bf16.mxu0 0
        %1902 = vmatpush2.bf16.msra.mxu0 0
        %1903 = vmatprep.subr.bf16.mxu0 0
        %1904 = vmatpush2.bf16.msra.mxu0 0
        %1905 = vmatprep.subr.bf16.mxu0 0
        %1906 = vmatpush2.bf16.msra.mxu0 0
        %1907 = vmatprep.subr.bf16.mxu0 0
        %1908 = vmatpush2.bf16.msra.mxu0 0
        %1909 = vmatprep.subr.bf16.mxu0 0
        %1910 = vmatpush2.bf16.msra.mxu0 0
        %1911 = vmatprep.mubr.bf16.mxu0 0
        %1912 = vmatmul.mubr.bf16.gmra.mxu0 %v1874
        %v1913 = vpop.f32.mrf.mxu0
        %v1914 = vadd.f32 0.0, %v1913
        %v1915 = vpop.f32.mrf.mxu0
        %v1916 = vpop.f32.mrf.mxu0
        %v1917 = vpop.f32.mrf.mxu0
        %1918 = vdwg.mxu0
        %v1919 = vadd.f32 %v1695, %v1914
        %v1920 = vld [vmem:[%s8] sm:$0x1]
        %v1922 = vlaneseq
        %v1923 = vshrl.u32 %v1922, 7
        %v1924 = vsub.s32 0, %v1923
        %v1925 = vrot.slane %v1920, %v1924
        %v1927 = vadd.f32 %v1919, %v1925
        %1928 = vst [vmem:[%s337] sm:$0xff] %v1927
        %s1929 = sand.u32 %s239, 1
        %s1930 = scalar_lea.sflag [#allocation5], %s1929
        %s1931 = sand.u32 %s239, 1
        %s1932 = smul.addr %s1931, 8
        %s1933 = scalar_lea.vmem [#allocation4], %s1932
        // Predicated region
        $region61: #{tpu_custom_call.1} parent=55 // pred_check
          %p1934 = pneg %p249
        $region62: #{tpu_custom_call.1} parent=55 // pred_check_branch
          %1936 = sbr.rel (%p1934) target = $region64
        $region63: #{tpu_custom_call.1} parent=55 // pred_region
          %s1938 = ssub.s32 128, 128
          %1939 = vsyncadd %s1930, %s1938
          %s1940 = sadd.s32 %s28, %s27
          %s1941 = smul.addr %s1940, 128
          %s1942 = scalar_lea.hbm %s9, %s1941
          %s1944 = sshll.u32 %s1933, 4
          %s1945 = int_to_ptr.vmem [resolvable:$true] %s1944
          %1947 = dma.vmem_to_hbm [thread:$0]  %s1945, 128, %s1942, %s1930
        $region64: #{tpu_custom_call.1} parent=55 // pred_fallthru
          _
      $region56: #{tpu_custom_call.1} parent=5 // pred_fallthru
        _
      %p1948 = scmp.le.s32.totalorder 2, %s18
      // Predicated region
      $region65: #{tpu_custom_call.1} parent=5 // pred_check
        %p1949 = pneg %p1948
      $region66: #{tpu_custom_call.1} parent=5 // pred_check_branch
        %1951 = sbr.rel (%p1949) target = $region68
      $region67: #{tpu_custom_call.1} parent=5 // pred_region
        %s1952 = ssub.s32 %s18, 2
        // Predicated region
        $region69: #{tpu_custom_call.1} parent=67 // pred_check
          %p1953 = pneg %p255
        $region70: #{tpu_custom_call.1} parent=67 // pred_check_branch
          %1955 = sbr.rel (%p1953) target = $region72
        $region71: #{tpu_custom_call.1} parent=67 // pred_region
          %s1956 = sand.u32 %s240, 1
          %s1957 = scalar_lea.sflag [#allocation5], %s1956
          %s1958 = sand.u32 %s240, 1
          %s1959 = smul.addr %s1958, 8
          %s1960 = scalar_lea.vmem [#allocation4], %s1959
          %1961 = dma.done %s1957, 128
        $region72: #{tpu_custom_call.1} parent=67 // pred_fallthru
          _
      $region68: #{tpu_custom_call.1} parent=5 // pred_fallthru
        _
    $region6: #{tpu_custom_call.1} parent=1 // loop_footer
      %s22 = sadd.s32 1, %s18
    $region7: #{tpu_custom_call.1} parent=1 // loop_footer_branch
      %17 = sbr.rel target = $region3
    $region8: #{tpu_custom_call.1} parent=1 // loop_exit
      _
    %1962 = vsyncpa [#allocation5], 1
    %s1963 = scalar_lea.sflag [#allocation5], 1
    %1964 = vsyncpa %s1963, 1

// kernel: tpu_custom_call.1
$region0: #{tpu_custom_call.1}
  #allocation0 [shape = 'u32[]', space=smem, size = 0x4, offset = 0x4, fixed_abs, tag = 'smem constant byte address 0x4 - core index']
  #allocation1 [shape = 'u32[144,128]{1,0:T(1,128)}', space=vmem, size = 0x12000, scoped, tag = 'internal scratch']
  #allocation2 [shape = 'bf16[4,8,8]{2,1,0:T(8,128)(2,1)}', space=vmem, size = 0x2000, scoped, tag = 'scratch operand']
  #allocation3 [shape = 'bf16[4,8,8]{2,1,0:T(8,128)(2,1)}', space=vmem, size = 0x2000, scoped, tag = 'scratch operand']
  %s0 = inlined_call_operand.vmem [shape: bf16[2,8,32], index: 0, kind: input, shape index: {}]
  %s1 = inlined_call_operand.vmem [shape: bf16[4,32,8], index: 1, kind: input, shape index: {}]
  %s2 = inlined_call_operand.vmem [shape: bf16[4,32,8], index: 2, kind: input, shape index: {}]
  %s3 = inlined_call_operand.vmem [shape: bf16[4,32,8], index: 3, kind: input, shape index: {}]
  %s4 = inlined_call_operand.vmem [shape: f32[4,1,8], index: 4, kind: input, shape index: {}]
  %s5 = inlined_call_operand.vmem [shape: f32[4,1,8], index: 5, kind: input, shape index: {}]
  %s6 = inlined_call_operand.vmem [shape: f32[4,1,8], index: 6, kind: input, shape index: {}]
  %s7 = inlined_call_operand.vmem [shape: bf16[4,8,128], index: 7, kind: input, shape index: {}]
  %s8 = inlined_call_operand.vmem [shape: f32[1,128], index: 8, kind: input, shape index: {}]
  %s9 = inlined_call_operand.hbm [shape: f32[2,8,128], index: 9, kind: output, shape index: {}]
  %s10 = sld [smem:[#allocation0]]
  $region73: #{tpu_custom_call.1} parent=0
    _
  %s12 = ssub.s32 1, %s10
  %s13 = scalar_select 0, %s12, %s10
  $region1: #{tpu_custom_call.1} parent=0
    #allocation4 [shape = 'u8[8192]{0}', space=vmem, size = 0x2000, scoped, tag = 'output window, operand 0']
    #allocation5 [shape = 's32[2]{0}', space=sflag, size = 0x8, scoped, tag = 'scoped memory for tpu_custom_call.1']
    %14 = vsyncpa [#allocation5], 0
    %s15 = scalar_lea.sflag [#allocation5], 1
    %16 = vsyncpa %s15, 0
    loop: start=0, step=1, limit=4
    $region2: #{tpu_custom_call.1} parent=1 // loop_pre_header
      _
    $region3: #{tpu_custom_call.1} parent=1 // loop_header
      %s18 = sphi 0, %s22
      %p19 = scmp.ge.s32.totalorder %s18, 4
      %s25 = sphi 0, %s37
      %s26 = sphi 0, %s33
      %s27 = sphi 0, %s25
      %s28 = sphi 0, %s26
      %s29 = sphi 0, %s27
      %s30 = sphi 0, %s28
      %s40 = sphi 0, %s42
      %s43 = sphi 0, %s40
      %s44 = sphi 0, %s43
      %s60 = sphi 0, %s44
      %s64 = sphi 0, %s64
      %s66 = sphi 0, %s64
      %s67 = sphi 0, %s66
      %s81 = sphi 0, %s67
      %s85 = sphi 0, %s85
      %s87 = sphi 0, %s85
      %s88 = sphi 0, %s87
      %s102 = sphi 0, %s88
      %s106 = sphi 0, %s106
      %s108 = sphi 0, %s106
      %s109 = sphi 0, %s108
      %s123 = sphi 0, %s109
      %s127 = sphi 0, %s127
      %s129 = sphi 0, %s127
      %s130 = sphi 0, %s129
      %s144 = sphi 0, %s130
      %s148 = sphi 0, %s148
      %s150 = sphi 0, %s148
      %s151 = sphi 0, %s150
      %s165 = sphi 0, %s151
      %s169 = sphi 0, %s169
      %s171 = sphi 0, %s169
      %s172 = sphi 0, %s171
      %s186 = sphi 0, %s172
      %s190 = sphi 0, %s190
      %s192 = sphi 0, %s190
      %s193 = sphi 0, %s192
      %s207 = sphi 0, %s193
      %s211 = sphi 0, %s211
      %s213 = sphi 0, %s211
      %s214 = sphi 0, %s213
      %s228 = sphi 0, %s214
      %s236 = sphi 0, %s238
      %s239 = sphi 0, %s236
      %s240 = sphi 0, %s239
      %s256 = sphi 0, %s240
    $region4: #{tpu_custom_call.1} parent=1 // loop_header_branch
      %21 = sbr.rel (%p19) target = $region8
    $region5: #{tpu_custom_call.1} parent=1 // loop_body
      %s23 = ssub.s32 %s18, 1
      %s24 = ssub.s32 %s18, 2
      %s31 = sadd.s32 1, %s26
      %p32 = scmp.ge.s32.totalorder %s31, 1
      %s33 = scalar_select %p32, 0, %s31
      %s34 = sadd.s32 1, %s25
      %s35 = scalar_select %p32, %s34, %s25
      %p36 = scmp.ge.s32.totalorder %s35, 2
      %s37 = scalar_select %p36, 0, %s35
      %s38 = ssub.s32 %s25, %s37
      %p39 = scmp.eq.s32.totalorder %s38, 0
      %s41 = sadd.s32 %s40, 1
      %s42 = scalar_select %p39, %s40, %s41
      %p45 = pneg %p39
      %p46 = scmp.eq.s32.totalorder %s18, 1
      %p47 = por %p45, %p46
      %p48 = scmp.ne.s32.totalorder %s40, %s43
      %p49 = scmp.eq.s32.totalorder %s18, 0
      %p50 = por %p48, %p49
      %p51 = scmp.ne.s32.totalorder %s40, %s43
      %p52 = scmp.eq.s32.totalorder %s23, 1
      %p53 = por %p51, %p52
      %p54 = scmp.ne.s32.totalorder %s43, %s44
      %p55 = scmp.eq.s32.totalorder %s23, 0
      %p56 = por %p54, %p55
      %p57 = scmp.ne.s32.totalorder %s43, %s44
      %p58 = scmp.eq.s32.totalorder %s24, 1
      %p59 = por %p57, %p58
      %p61 = scmp.ne.s32.totalorder %s44, %s60
      %p62 = scmp.eq.s32.totalorder %s24, 0
      %p63 = por %p61, %p62
      %s65 = sadd.s32 %s64, 1
      %p68 = scmp.eq.s32.totalorder %s18, 1
      %p69 = scmp.ne.s32.totalorder %s64, %s66
      %p70 = scmp.eq.s32.totalorder %s18, 0
      %p71 = por %p69, %p70
      %p72 = scmp.ne.s32.totalorder %s64, %s66
      %p73 = scmp.eq.s32.totalorder %s23, 1
      %p74 = por %p72, %p73
      %p75 = scmp.ne.s32.totalorder %s66, %s67
      %p76 = scmp.eq.s32.totalorder %s23, 0
      %p77 = por %p75, %p76
      %p78 = scmp.ne.s32.totalorder %s66, %s67
      %p79 = scmp.eq.s32.totalorder %s24, 1
      %p80 = por %p78, %p79
      %p82 = scmp.ne.s32.totalorder %s67, %s81
      %p83 = scmp.eq.s32.totalorder %s24, 0
      %p84 = por %p82, %p83
      %s86 = sadd.s32 %s85, 1
      %p89 = scmp.eq.s32.totalorder %s18, 1
      %p90 = scmp.ne.s32.totalorder %s85, %s87
      %p91 = scmp.eq.s32.totalorder %s18, 0
      %p92 = por %p90, %p91
      %p93 = scmp.ne.s32.totalorder %s85, %s87
      %p94 = scmp.eq.s32.totalorder %s23, 1
      %p95 = por %p93, %p94
      %p96 = scmp.ne.s32.totalorder %s87, %s88
      %p97 = scmp.eq.s32.totalorder %s23, 0
      %p98 = por %p96, %p97
      %p99 = scmp.ne.s32.totalorder %s87, %s88
      %p100 = scmp.eq.s32.totalorder %s24, 1
      %p101 = por %p99, %p100
      %p103 = scmp.ne.s32.totalorder %s88, %s102
      %p104 = scmp.eq.s32.totalorder %s24, 0
      %p105 = por %p103, %p104
      %s107 = sadd.s32 %s106, 1
      %p110 = scmp.eq.s32.totalorder %s18, 1
      %p111 = scmp.ne.s32.totalorder %s106, %s108
      %p112 = scmp.eq.s32.totalorder %s18, 0
      %p113 = por %p111, %p112
      %p114 = scmp.ne.s32.totalorder %s106, %s108
      %p115 = scmp.eq.s32.totalorder %s23, 1
      %p116 = por %p114, %p115
      %p117 = scmp.ne.s32.totalorder %s108, %s109
      %p118 = scmp.eq.s32.totalorder %s23, 0
      %p119 = por %p117, %p118
      %p120 = scmp.ne.s32.totalorder %s108, %s109
      %p121 = scmp.eq.s32.totalorder %s24, 1
      %p122 = por %p120, %p121
      %p124 = scmp.ne.s32.totalorder %s109, %s123
      %p125 = scmp.eq.s32.totalorder %s24, 0
      %p126 = por %p124, %p125
      %s128 = sadd.s32 %s127, 1
      %p131 = scmp.eq.s32.totalorder %s18, 1
      %p132 = scmp.ne.s32.totalorder %s127, %s129
      %p133 = scmp.eq.s32.totalorder %s18, 0
      %p134 = por %p132, %p133
      %p135 = scmp.ne.s32.totalorder %s127, %s129
      %p136 = scmp.eq.s32.totalorder %s23, 1
      %p137 = por %p135, %p136
      %p138 = scmp.ne.s32.totalorder %s129, %s130
      %p139 = scmp.eq.s32.totalorder %s23, 0
      %p140 = por %p138, %p139
      %p141 = scmp.ne.s32.totalorder %s129, %s130
      %p142 = scmp.eq.s32.totalorder %s24, 1
      %p143 = por %p141, %p142
      %p145 = scmp.ne.s32.totalorder %s130, %s144
      %p146 = scmp.eq.s32.totalorder %s24, 0
      %p147 = por %p145, %p146
      %s149 = sadd.s32 %s148, 1
      %p152 = scmp.eq.s32.totalorder %s18, 1
      %p153 = scmp.ne.s32.totalorder %s148, %s150
      %p154 = scmp.eq.s32.totalorder %s18, 0
      %p155 = por %p153, %p154
      %p156 = scmp.ne.s32.totalorder %s148, %s150
      %p157 = scmp.eq.s32.totalorder %s23, 1
      %p158 = por %p156, %p157
      %p159 = scmp.ne.s32.totalorder %s150, %s151
      %p160 = scmp.eq.s32.totalorder %s23, 0
      %p161 = por %p159, %p160
      %p162 = scmp.ne.s32.totalorder %s150, %s151
      %p163 = scmp.eq.s32.totalorder %s24, 1
      %p164 = por %p162, %p163
      %p166 = scmp.ne.s32.totalorder %s151, %s165
      %p167 = scmp.eq.s32.totalorder %s24, 0
      %p168 = por %p166, %p167
      %s170 = sadd.s32 %s169, 1
      %p173 = scmp.eq.s32.totalorder %s18, 1
      %p174 = scmp.ne.s32.totalorder %s169, %s171
      %p175 = scmp.eq.s32.totalorder %s18, 0
      %p176 = por %p174, %p175
      %p177 = scmp.ne.s32.totalorder %s169, %s171
      %p178 = scmp.eq.s32.totalorder %s23, 1
      %p179 = por %p177, %p178
      %p180 = scmp.ne.s32.totalorder %s171, %s172
      %p181 = scmp.eq.s32.totalorder %s23, 0
      %p182 = por %p180, %p181
      %p183 = scmp.ne.s32.totalorder %s171, %s172
      %p184 = scmp.eq.s32.totalorder %s24, 1
      %p185 = por %p183, %p184
      %p187 = scmp.ne.s32.totalorder %s172, %s186
      %p188 = scmp.eq.s32.totalorder %s24, 0
      %p189 = por %p187, %p188
      %s191 = sadd.s32 %s190, 1
      %p194 = scmp.eq.s32.totalorder %s18, 1
      %p195 = scmp.ne.s32.totalorder %s190, %s192
      %p196 = scmp.eq.s32.totalorder %s18, 0
      %p197 = por %p195, %p196
      %p198 = scmp.ne.s32.totalorder %s190, %s192
      %p199 = scmp.eq.s32.totalorder %s23, 1
      %p200 = por %p198, %p199
      %p201 = scmp.ne.s32.totalorder %s192, %s193
      %p202 = scmp.eq.s32.totalorder %s23, 0
      %p203 = por %p201, %p202
      %p204 = scmp.ne.s32.totalorder %s192, %s193
      %p205 = scmp.eq.s32.totalorder %s24, 1
      %p206 = por %p204, %p205
      %p208 = scmp.ne.s32.totalorder %s193, %s207
      %p209 = scmp.eq.s32.totalorder %s24, 0
      %p210 = por %p208, %p209
      %s212 = sadd.s32 %s211, 1
      %p215 = scmp.eq.s32.totalorder %s18, 1
      %p216 = scmp.ne.s32.totalorder %s211, %s213
      %p217 = scmp.eq.s32.totalorder %s18, 0
      %p218 = por %p216, %p217
      %p219 = scmp.ne.s32.totalorder %s211, %s213
      %p220 = scmp.eq.s32.totalorder %s23, 1
      %p221 = por %p219, %p220
      %p222 = scmp.ne.s32.totalorder %s213, %s214
      %p223 = scmp.eq.s32.totalorder %s23, 0
      %p224 = por %p222, %p223
      %p225 = scmp.ne.s32.totalorder %s213, %s214
      %p226 = scmp.eq.s32.totalorder %s24, 1
      %p227 = por %p225, %p226
      %p229 = scmp.ne.s32.totalorder %s214, %s228
      %p230 = scmp.eq.s32.totalorder %s24, 0
      %p231 = por %p229, %p230
      %s232 = ssub.s32 %s25, %s37
      %s233 = ssub.s32 %s26, %s33
      %s234 = sor.u32 %s232, %s233
      %p235 = scmp.eq.s32.totalorder %s234, 0
      %s237 = sadd.s32 %s236, 1
      %s238 = scalar_select %p235, %s236, %s237
      %p241 = pneg %p235
      %p242 = scmp.eq.s32.totalorder %s18, 1
      %p243 = por %p241, %p242
      %p244 = scmp.ne.s32.totalorder %s236, %s239
      %p245 = scmp.eq.s32.totalorder %s18, 0
      %p246 = por %p244, %p245
      %p247 = scmp.ne.s32.totalorder %s236, %s239
      %p248 = scmp.eq.s32.totalorder %s23, 1
      %p249 = por %p247, %p248
      %p250 = scmp.ne.s32.totalorder %s239, %s240
      %p251 = scmp.eq.s32.totalorder %s23, 0
      %p252 = por %p250, %p251
      %p253 = scmp.ne.s32.totalorder %s239, %s240
      %p254 = scmp.eq.s32.totalorder %s24, 1
      %p255 = por %p253, %p254
      %p257 = scmp.ne.s32.totalorder %s240, %s256
      %p258 = scmp.eq.s32.totalorder %s24, 0
      %p259 = por %p257, %p258
      %p260 = scmp.le.s32.totalorder 1, %s18
      %p261 = scmp.lt.s32.totalorder %s18, 3
      %p262 = pnand %p260, %p261
      %p263 = pneg %p262
      // Predicated region
      $region9: #{tpu_custom_call.1} parent=5 // pred_check
        _
      $region10: #{tpu_custom_call.1} parent=5 // pred_check_branch
        %265 = sbr.rel (%p262) target = $region12
      $region11: #{tpu_custom_call.1} parent=5 // pred_region
        %s266 = ssub.s32 %s18, 1
        // Predicated region
        $region13: #{tpu_custom_call.1} parent=11 // pred_check
          %p267 = pneg %p77
        $region14: #{tpu_custom_call.1} parent=11 // pred_check_branch
          %269 = sbr.rel (%p267) target = $region16
        $region15: #{tpu_custom_call.1} parent=11 // pred_region
          _
        $region16: #{tpu_custom_call.1} parent=11 // pred_fallthru
          _
        // Predicated region
        $region17: #{tpu_custom_call.1} parent=11 // pred_check
          %p270 = pneg %p98
        $region18: #{tpu_custom_call.1} parent=11 // pred_check_branch
          %272 = sbr.rel (%p270) target = $region20
        $region19: #{tpu_custom_call.1} parent=11 // pred_region
          _
        $region20: #{tpu_custom_call.1} parent=11 // pred_fallthru
          _
        // Predicated region
        $region21: #{tpu_custom_call.1} parent=11 // pred_check
          %p273 = pneg %p119
        $region22: #{tpu_custom_call.1} parent=11 // pred_check_branch
          %275 = sbr.rel (%p273) target = $region24
        $region23: #{tpu_custom_call.1} parent=11 // pred_region
          _
        $region24: #{tpu_custom_call.1} parent=11 // pred_fallthru
          _
        // Predicated region
        $region25: #{tpu_custom_call.1} parent=11 // pred_check
          %p276 = pneg %p140
        $region26: #{tpu_custom_call.1} parent=11 // pred_check_branch
          %278 = sbr.rel (%p276) target = $region28
        $region27: #{tpu_custom_call.1} parent=11 // pred_region
          _
        $region28: #{tpu_custom_call.1} parent=11 // pred_fallthru
          _
        // Predicated region
        $region29: #{tpu_custom_call.1} parent=11 // pred_check
          %p279 = pneg %p161
        $region30: #{tpu_custom_call.1} parent=11 // pred_check_branch
          %281 = sbr.rel (%p279) target = $region32
        $region31: #{tpu_custom_call.1} parent=11 // pred_region
          _
        $region32: #{tpu_custom_call.1} parent=11 // pred_fallthru
          _
        // Predicated region
        $region33: #{tpu_custom_call.1} parent=11 // pred_check
          %p282 = pneg %p182
        $region34: #{tpu_custom_call.1} parent=11 // pred_check_branch
          %284 = sbr.rel (%p282) target = $region36
        $region35: #{tpu_custom_call.1} parent=11 // pred_region
          _
        $region36: #{tpu_custom_call.1} parent=11 // pred_fallthru
          _
        // Predicated region
        $region37: #{tpu_custom_call.1} parent=11 // pred_check
          %p285 = pneg %p203
        $region38: #{tpu_custom_call.1} parent=11 // pred_check_branch
          %287 = sbr.rel (%p285) target = $region40
        $region39: #{tpu_custom_call.1} parent=11 // pred_region
          _
        $region40: #{tpu_custom_call.1} parent=11 // pred_fallthru
          _
        // Predicated region
        $region41: #{tpu_custom_call.1} parent=11 // pred_check
          %p288 = pneg %p224
        $region42: #{tpu_custom_call.1} parent=11 // pred_check_branch
          %290 = sbr.rel (%p288) target = $region44
        $region43: #{tpu_custom_call.1} parent=11 // pred_region
          _
        $region44: #{tpu_custom_call.1} parent=11 // pred_fallthru
          _
      $region12: #{tpu_custom_call.1} parent=5 // pred_fallthru
        _
      %p291 = scmp.lt.s32.totalorder %s18, 2
      // Predicated region
      $region45: #{tpu_custom_call.1} parent=5 // pred_check
        %p292 = pneg %p291
      $region46: #{tpu_custom_call.1} parent=5 // pred_check_branch
        %294 = sbr.rel (%p292) target = $region48
      $region47: #{tpu_custom_call.1} parent=5 // pred_region
        // Predicated region
        $region49: #{tpu_custom_call.1} parent=47 // pred_check
          %p295 = pneg %p50
        $region50: #{tpu_custom_call.1} parent=47 // pred_check_branch
          %297 = sbr.rel (%p295) target = $region52
        $region51: #{tpu_custom_call.1} parent=47 // pred_region
          %p298 = scmp.lt.s32.totalorder %s25, 1
          %s299 = scalar_select %p298, %s25, 1
          %s300 = smul.addr %s299, 4
          %s301 = scalar_lea.vmem %s0, %s300
        $region52: #{tpu_custom_call.1} parent=47 // pred_fallthru
          _
      $region48: #{tpu_custom_call.1} parent=5 // pred_fallthru
        _
      %p302 = scmp.le.s32.totalorder 1, %s18
      %p303 = scmp.lt.s32.totalorder %s18, 3
      %p304 = pnand %p302, %p303
      %p305 = pneg %p304
      // Predicated region
      $region53: #{tpu_custom_call.1} parent=5 // pred_check
        _
      $region54: #{tpu_custom_call.1} parent=5 // pred_check_branch
        %307 = sbr.rel (%p304) target = $region56
      $region55: #{tpu_custom_call.1} parent=5 // pred_region
        %s308 = ssub.s32 %s18, 1
        %p309 = scmp.lt.s32.totalorder %s27, 1
        %s310 = scalar_select %p309, %s27, 1
        %s311 = smul.addr %s310, 4
        %s312 = scalar_lea.vmem %s0, %s311
        %p313 = pneg %p56
        %p314 = pneg %p53
        %p315 = pneg %p77
        %p316 = pneg %p74
        %p317 = pneg %p98
        %p318 = pneg %p95
        %p319 = pneg %p119
        %p320 = pneg %p116
        %p321 = pneg %p140
        %p322 = pneg %p137
        %p323 = pneg %p161
        %p324 = pneg %p158
        %p325 = pneg %p182
        %p326 = pneg %p179
        %p327 = pneg %p203
        %p328 = pneg %p200
        %p329 = pneg %p224
        %p330 = pneg %p221
        %p331 = pneg %p252
        %p332 = pneg %p249
        %s333 = sand.u32 %s239, 1
        %s334 = scalar_lea.sflag [#allocation5], %s333
        %s335 = sand.u32 %s239, 1
        %s336 = smul.addr %s335, 8
        %s337 = scalar_lea.vmem [#allocation4], %s336
        %p338 = scmp.lt.s32.totalorder %s27, 1
        %s339 = scalar_select %p338, %s27, 1
        %s340 = smul.addr %s339, 4
        %s341 = scalar_lea.vmem %s0, %s340
        %p343 = scmp.eq.s32.totalorder %s28, 0
        // Predicated region
        $region57: #{tpu_custom_call.1} parent=55 // pred_check
          %p344 = pneg %p343
        $region58: #{tpu_custom_call.1} parent=55 // pred_check_branch
          %346 = sbr.rel (%p344) target = $region60
        $region59: #{tpu_custom_call.1} parent=55 // pred_region
          %v347 = vld [vmem:[%s341] sm:$0xf]
          %v348 = vld [vmem:[%s2] sm:$0xf]
          %v349 = vld [vmem:[%s2 + $0x4] sm:$0xf]
          %v350 = vld [vmem:[%s2 + $0x8] sm:$0xf]
          %v351 = vld [vmem:[%s2 + $0xc] sm:$0xf]
          %v352 = vld [vmem:[%s5] sm:$0x1]
          %v354 = vlaneseq
          %v355 = vshrl.u32 %v354, 7
          %v356 = vsub.s32 0, %v355
          %v357 = vrot.slane %v352, %v356
          %v363 = vunpack.c.l.b16 %v348
          %v364 = vunpack.c.l.b16 %v349
          %v365 = vunpack.c.l.b16 %v350
          %v366 = vunpack.c.l.b16 %v351
          %v367 = vpack.c.b16 %v364, %v363
          %v368 = vpack.c.b16 %v366, %v365
          %vm371 = vcmask 261120
          %v373 = vsel %vm371, %v347, 0
          %375 = vmatprep.subr.bf16.mxu0 0
          %376 = vmatpush1.bf16.msra.mxu0 0
          %377 = vmatprep.subr.bf16.mxu0 0
          %378 = vmatpush1.bf16.msra.mxu0 0
          %379 = vmatprep.subr.bf16.mxu0 0
          %380 = vmatpush1.bf16.msra.mxu0 0
          %381 = vmatprep.subr.bf16.mxu0 0
          %382 = vmatpush1.bf16.msra.mxu0 0
          %383 = vmatprep.subr.bf16.mxu0 0
          %384 = vmatpush1.bf16.msra.mxu0 0
          %385 = vmatprep.subr.bf16.mxu0 0
          %386 = vmatpush1.bf16.msra.mxu0 0
          %387 = vmatprep.subr.bf16.mxu0 0
          %388 = vmatpush1.bf16.msra.mxu0 %v368
          %389 = vmatprep.subr.bf16.mxu0 0
          %390 = vmatpush1.bf16.msra.mxu0 %v367
          %391 = vmatprep.subr.bf16.mxu0 0
          %392 = vmatpush2.bf16.msra.mxu0 0
          %393 = vmatprep.subr.bf16.mxu0 0
          %394 = vmatpush2.bf16.msra.mxu0 0
          %395 = vmatprep.subr.bf16.mxu0 0
          %396 = vmatpush2.bf16.msra.mxu0 0
          %397 = vmatprep.subr.bf16.mxu0 0
          %398 = vmatpush2.bf16.msra.mxu0 0
          %399 = vmatprep.subr.bf16.mxu0 0
          %400 = vmatpush2.bf16.msra.mxu0 0
          %401 = vmatprep.subr.bf16.mxu0 0
          %402 = vmatpush2.bf16.msra.mxu0 0
          %403 = vmatprep.subr.bf16.mxu0 0
          %404 = vmatpush2.bf16.msra.mxu0 0
          %405 = vmatprep.subr.bf16.mxu0 0
          %406 = vmatpush2.bf16.msra.mxu0 0
          %407 = vmatprep.mubr.bf16.mxu0 0
          %408 = vmatmul.mubr.bf16.gmra.mxu0 %v373
          %v409 = vpop.f32.mrf.mxu0
          %v410 = vadd.f32 %v357, %v409
          %v411 = vpop.f32.mrf.mxu0
          %v412 = vpop.f32.mrf.mxu0
          %v413 = vpop.f32.mrf.mxu0
          %414 = vdwg.mxu0
          %v415 = vld [vmem:[%s3] sm:$0xf]
          %v416 = vld [vmem:[%s3 + $0x4] sm:$0xf]
          %v417 = vld [vmem:[%s3 + $0x8] sm:$0xf]
          %v418 = vld [vmem:[%s3 + $0xc] sm:$0xf]
          %v419 = vld [vmem:[%s6] sm:$0x1]
          %v421 = vlaneseq
          %v422 = vshrl.u32 %v421, 7
          %v423 = vsub.s32 0, %v422
          %v424 = vrot.slane %v419, %v423
          %v430 = vunpack.c.l.b16 %v415
          %v431 = vunpack.c.l.b16 %v416
          %v432 = vunpack.c.l.b16 %v417
          %v433 = vunpack.c.l.b16 %v418
          %v434 = vpack.c.b16 %v431, %v430
          %v435 = vpack.c.b16 %v433, %v432
          %438 = vmatprep.subr.bf16.mxu0 0
          %439 = vmatpush1.bf16.msra.mxu0 0
          %440 = vmatprep.subr.bf16.mxu0 0
          %441 = vmatpush1.bf16.msra.mxu0 0
          %442 = vmatprep.subr.bf16.mxu0 0
          %443 = vmatpush1.bf16.msra.mxu0 0
          %444 = vmatprep.subr.bf16.mxu0 0
          %445 = vmatpush1.bf16.msra.mxu0 0
          %446 = vmatprep.subr.bf16.mxu0 0
          %447 = vmatpush1.bf16.msra.mxu0 0
          %448 = vmatprep.subr.bf16.mxu0 0
          %449 = vmatpush1.bf16.msra.mxu0 0
          %450 = vmatprep.subr.bf16.mxu0 0
          %451 = vmatpush1.bf16.msra.mxu0 %v435
          %452 = vmatprep.subr.bf16.mxu0 0
          %453 = vmatpush1.bf16.msra.mxu0 %v434
          %454 = vmatprep.subr.bf16.mxu0 0
          %455 = vmatpush2.bf16.msra.mxu0 0
          %456 = vmatprep.subr.bf16.mxu0 0
          %457 = vmatpush2.bf16.msra.mxu0 0
          %458 = vmatprep.subr.bf16.mxu0 0
          %459 = vmatpush2.bf16.msra.mxu0 0
          %460 = vmatprep.subr.bf16.mxu0 0
          %461 = vmatpush2.bf16.msra.mxu0 0
          %462 = vmatprep.subr.bf16.mxu0 0
          %463 = vmatpush2.bf16.msra.mxu0 0
          %464 = vmatprep.subr.bf16.mxu0 0
          %465 = vmatpush2.bf16.msra.mxu0 0
          %466 = vmatprep.subr.bf16.mxu0 0
          %467 = vmatpush2.bf16.msra.mxu0 0
          %468 = vmatprep.subr.bf16.mxu0 0
          %469 = vmatpush2.bf16.msra.mxu0 0
          %470 = vmatprep.mubr.bf16.mxu0 0
          %471 = vmatmul.mubr.bf16.gmra.mxu0 %v373
          %v472 = vpop.f32.mrf.mxu0
          %v473 = vadd.f32 %v424, %v472
          %v474 = vpop.f32.mrf.mxu0
          %v475 = vpop.f32.mrf.mxu0
          %v476 = vpop.f32.mrf.mxu0
          %477 = vdwg.mxu0
          %478 = vxpose.xlu0.b32.start [1/16] %v410, 128
          %479 = vxpose.xlu0.b32.cont [2/16] 0.0, 128
          %480 = vxpose.xlu0.b32.cont [3/16] 0.0, 128
          %481 = vxpose.xlu0.b32.cont [4/16] 0.0, 128
          %482 = vxpose.xlu0.b32.cont [5/16] 0.0, 128
          %483 = vxpose.xlu0.b32.cont [6/16] 0.0, 128
          %484 = vxpose.xlu0.b32.cont [7/16] 0.0, 128
          %485 = vxpose.xlu0.b32.cont [8/16] 0.0, 128
          %486 = vxpose.xlu0.b32.cont [9/16] 0.0, 128
          %487 = vxpose.xlu0.b32.cont [10/16] 0.0, 128
          %488 = vxpose.xlu0.b32.cont [11/16] 0.0, 128
          %489 = vxpose.xlu0.b32.cont [12/16] 0.0, 128
          %490 = vxpose.xlu0.b32.cont [13/16] 0.0, 128
          %491 = vxpose.xlu0.b32.cont [14/16] 0.0, 128
          %492 = vxpose.xlu0.b32.cont [15/16] 0.0, 128
          %493 = vxpose.xlu0.b32.end [16/16] 0.0, 128
          %v494 = vpop.trf.xlu0
          %v495 = vpop.trf.xlu0
          %v496 = vpop.trf.xlu0
          %v497 = vpop.trf.xlu0
          %v498 = vpop.trf.xlu0
          %v499 = vpop.trf.xlu0
          %v500 = vpop.trf.xlu0
          %v501 = vpop.trf.xlu0
          %v502 = vpop.trf.xlu0
          %v503 = vpop.trf.xlu0
          %v504 = vpop.trf.xlu0
          %v505 = vpop.trf.xlu0
          %v506 = vpop.trf.xlu0
          %v507 = vpop.trf.xlu0
          %v508 = vpop.trf.xlu0
          %v509 = vpop.trf.xlu0
          %v510 = vpack.c.bf16 %v494, %v494
          %vm511 = vcmask 60416
          %512 = vst.msk [vmem:[#allocation2] sm:$0xf] %vm511, %v510
          %v513 = vpack.c.bf16 %v473, %v473
          %514 = vst.msk [vmem:[#allocation3] sm:$0xf] %vm511, %v513
          %s515 = scalar_lea.vmem %s2, 16
          %v516 = vld [vmem:[%s515] sm:$0xf]
          %v517 = vld [vmem:[%s515 + $0x4] sm:$0xf]
          %v518 = vld [vmem:[%s515 + $0x8] sm:$0xf]
          %v519 = vld [vmem:[%s515 + $0xc] sm:$0xf]
          %s520 = scalar_lea.vmem %s5, 1
          %v521 = vld [vmem:[%s520] sm:$0x1]
          %v523 = vlaneseq
          %v524 = vshrl.u32 %v523, 7
          %v525 = vsub.s32 0, %v524
          %v526 = vrot.slane %v521, %v525
          %v532 = vunpack.c.l.b16 %v516
          %v533 = vunpack.c.l.b16 %v517
          %v534 = vunpack.c.l.b16 %v518
          %v535 = vunpack.c.l.b16 %v519
          %v536 = vpack.c.b16 %v533, %v532
          %v537 = vpack.c.b16 %v535, %v534
          %540 = vmatprep.subr.bf16.mxu0 0
          %541 = vmatpush1.bf16.msra.mxu0 0
          %542 = vmatprep.subr.bf16.mxu0 0
          %543 = vmatpush1.bf16.msra.mxu0 0
          %544 = vmatprep.subr.bf16.mxu0 0
          %545 = vmatpush1.bf16.msra.mxu0 0
          %546 = vmatprep.subr.bf16.mxu0 0
          %547 = vmatpush1.bf16.msra.mxu0 0
          %548 = vmatprep.subr.bf16.mxu0 0
          %549 = vmatpush1.bf16.msra.mxu0 0
          %550 = vmatprep.subr.bf16.mxu0 0
          %551 = vmatpush1.bf16.msra.mxu0 0
          %552 = vmatprep.subr.bf16.mxu0 0
          %553 = vmatpush1.bf16.msra.mxu0 %v537
          %554 = vmatprep.subr.bf16.mxu0 0
          %555 = vmatpush1.bf16.msra.mxu0 %v536
          %556 = vmatprep.subr.bf16.mxu0 0
          %557 = vmatpush2.bf16.msra.mxu0 0
          %558 = vmatprep.subr.bf16.mxu0 0
          %559 = vmatpush2.bf16.msra.mxu0 0
          %560 = vmatprep.subr.bf16.mxu0 0
          %561 = vmatpush2.bf16.msra.mxu0 0
          %562 = vmatprep.subr.bf16.mxu0 0
          %563 = vmatpush2.bf16.msra.mxu0 0
          %564 = vmatprep.subr.bf16.mxu0 0
          %565 = vmatpush2.bf16.msra.mxu0 0
          %566 = vmatprep.subr.bf16.mxu0 0
          %567 = vmatpush2.bf16.msra.mxu0 0
          %568 = vmatprep.subr.bf16.mxu0 0
          %569 = vmatpush2.bf16.msra.mxu0 0
          %570 = vmatprep.subr.bf16.mxu0 0
          %571 = vmatpush2.bf16.msra.mxu0 0
          %572 = vmatprep.mubr.bf16.mxu0 0
          %573 = vmatmul.mubr.bf16.gmra.mxu0 %v373
          %v574 = vpop.f32.mrf.mxu0
          %v575 = vadd.f32 %v526, %v574
          %v576 = vpop.f32.mrf.mxu0
          %v577 = vpop.f32.mrf.mxu0
          %v578 = vpop.f32.mrf.mxu0
          %579 = vdwg.mxu0
          %s580 = scalar_lea.vmem %s3, 16
          %v581 = vld [vmem:[%s580] sm:$0xf]
          %v582 = vld [vmem:[%s580 + $0x4] sm:$0xf]
          %v583 = vld [vmem:[%s580 + $0x8] sm:$0xf]
          %v584 = vld [vmem:[%s580 + $0xc] sm:$0xf]
          %s585 = scalar_lea.vmem %s6, 1
          %v586 = vld [vmem:[%s585] sm:$0x1]
          %v588 = vlaneseq
          %v589 = vshrl.u32 %v588, 7
          %v590 = vsub.s32 0, %v589
          %v591 = vrot.slane %v586, %v590
          %v597 = vunpack.c.l.b16 %v581
          %v598 = vunpack.c.l.b16 %v582
          %v599 = vunpack.c.l.b16 %v583
          %v600 = vunpack.c.l.b16 %v584
          %v601 = vpack.c.b16 %v598, %v597
          %v602 = vpack.c.b16 %v600, %v599
          %605 = vmatprep.subr.bf16.mxu0 0
          %606 = vmatpush1.bf16.msra.mxu0 0
          %607 = vmatprep.subr.bf16.mxu0 0
          %608 = vmatpush1.bf16.msra.mxu0 0
          %609 = vmatprep.subr.bf16.mxu0 0
          %610 = vmatpush1.bf16.msra.mxu0 0
          %611 = vmatprep.subr.bf16.mxu0 0
          %612 = vmatpush1.bf16.msra.mxu0 0
          %613 = vmatprep.subr.bf16.mxu0 0
          %614 = vmatpush1.bf16.msra.mxu0 0
          %615 = vmatprep.subr.bf16.mxu0 0
          %616 = vmatpush1.bf16.msra.mxu0 0
          %617 = vmatprep.subr.bf16.mxu0 0
          %618 = vmatpush1.bf16.msra.mxu0 %v602
          %619 = vmatprep.subr.bf16.mxu0 0
          %620 = vmatpush1.bf16.msra.mxu0 %v601
          %621 = vmatprep.subr.bf16.mxu0 0
          %622 = vmatpush2.bf16.msra.mxu0 0
          %623 = vmatprep.subr.bf16.mxu0 0
          %624 = vmatpush2.bf16.msra.mxu0 0
          %625 = vmatprep.subr.bf16.mxu0 0
          %626 = vmatpush2.bf16.msra.mxu0 0
          %627 = vmatprep.subr.bf16.mxu0 0
          %628 = vmatpush2.bf16.msra.mxu0 0
          %629 = vmatprep.subr.bf16.mxu0 0
          %630 = vmatpush2.bf16.msra.mxu0 0
          %631 = vmatprep.subr.bf16.mxu0 0
          %632 = vmatpush2.bf16.msra.mxu0 0
          %633 = vmatprep.subr.bf16.mxu0 0
          %634 = vmatpush2.bf16.msra.mxu0 0
          %635 = vmatprep.subr.bf16.mxu0 0
          %636 = vmatpush2.bf16.msra.mxu0 0
          %637 = vmatprep.mubr.bf16.mxu0 0
          %638 = vmatmul.mubr.bf16.gmra.mxu0 %v373
          %v639 = vpop.f32.mrf.mxu0
          %v640 = vadd.f32 %v591, %v639
          %v641 = vpop.f32.mrf.mxu0
          %v642 = vpop.f32.mrf.mxu0
          %v643 = vpop.f32.mrf.mxu0
          %644 = vdwg.mxu0
          %645 = vxpose.xlu0.b32.start [1/16] %v575, 128
          %646 = vxpose.xlu0.b32.cont [2/16] 0.0, 128
          %647 = vxpose.xlu0.b32.cont [3/16] 0.0, 128
          %648 = vxpose.xlu0.b32.cont [4/16] 0.0, 128
          %649 = vxpose.xlu0.b32.cont [5/16] 0.0, 128
          %650 = vxpose.xlu0.b32.cont [6/16] 0.0, 128
          %651 = vxpose.xlu0.b32.cont [7/16] 0.0, 128
          %652 = vxpose.xlu0.b32.cont [8/16] 0.0, 128
          %653 = vxpose.xlu0.b32.cont [9/16] 0.0, 128
          %654 = vxpose.xlu0.b32.cont [10/16] 0.0, 128
          %655 = vxpose.xlu0.b32.cont [11/16] 0.0, 128
          %656 = vxpose.xlu0.b32.cont [12/16] 0.0, 128
          %657 = vxpose.xlu0.b32.cont [13/16] 0.0, 128
          %658 = vxpose.xlu0.b32.cont [14/16] 0.0, 128
          %659 = vxpose.xlu0.b32.cont [15/16] 0.0, 128
          %660 = vxpose.xlu0.b32.end [16/16] 0.0, 128
          %v661 = vpop.trf.xlu0
          %v662 = vpop.trf.xlu0
          %v663 = vpop.trf.xlu0
          %v664 = vpop.trf.xlu0
          %v665 = vpop.trf.xlu0
          %v666 = vpop.trf.xlu0
          %v667 = vpop.trf.xlu0
          %v668 = vpop.trf.xlu0
          %v669 = vpop.trf.xlu0
          %v670 = vpop.trf.xlu0
          %v671 = vpop.trf.xlu0
          %v672 = vpop.trf.xlu0
          %v673 = vpop.trf.xlu0
          %v674 = vpop.trf.xlu0
          %v675 = vpop.trf.xlu0
          %v676 = vpop.trf.xlu0
          %v677 = vpack.c.bf16 %v661, %v661
          %s678 = scalar_lea.vmem [#allocation2], 4
          %679 = vst.msk [vmem:[%s678] sm:$0xf] %vm511, %v677
          %v680 = vpack.c.bf16 %v640, %v640
          %s681 = scalar_lea.vmem [#allocation3], 4
          %682 = vst.msk [vmem:[%s681] sm:$0xf] %vm511, %v680
          %s683 = scalar_lea.vmem %s2, 32
          %v684 = vld [vmem:[%s683] sm:$0xf]
          %v685 = vld [vmem:[%s683 + $0x4] sm:$0xf]
          %v686 = vld [vmem:[%s683 + $0x8] sm:$0xf]
          %v687 = vld [vmem:[%s683 + $0xc] sm:$0xf]
          %s688 = scalar_lea.vmem %s5, 2
          %v689 = vld [vmem:[%s688] sm:$0x1]
          %v691 = vlaneseq
          %v692 = vshrl.u32 %v691, 7
          %v693 = vsub.s32 0, %v692
          %v694 = vrot.slane %v689, %v693
          %v700 = vunpack.c.l.b16 %v684
          %v701 = vunpack.c.l.b16 %v685
          %v702 = vunpack.c.l.b16 %v686
          %v703 = vunpack.c.l.b16 %v687
          %v704 = vpack.c.b16 %v701, %v700
          %v705 = vpack.c.b16 %v703, %v702
          %708 = vmatprep.subr.bf16.mxu0 0
          %709 = vmatpush1.bf16.msra.mxu0 0
          %710 = vmatprep.subr.bf16.mxu0 0
          %711 = vmatpush1.bf16.msra.mxu0 0
          %712 = vmatprep.subr.bf16.mxu0 0
          %713 = vmatpush1.bf16.msra.mxu0 0
          %714 = vmatprep.subr.bf16.mxu0 0
          %715 = vmatpush1.bf16.msra.mxu0 0
          %716 = vmatprep.subr.bf16.mxu0 0
          %717 = vmatpush1.bf16.msra.mxu0 0
          %718 = vmatprep.subr.bf16.mxu0 0
          %719 = vmatpush1.bf16.msra.mxu0 0
          %720 = vmatprep.subr.bf16.mxu0 0
          %721 = vmatpush1.bf16.msra.mxu0 %v705
          %722 = vmatprep.subr.bf16.mxu0 0
          %723 = vmatpush1.bf16.msra.mxu0 %v704
          %724 = vmatprep.subr.bf16.mxu0 0
          %725 = vmatpush2.bf16.msra.mxu0 0
          %726 = vmatprep.subr.bf16.mxu0 0
          %727 = vmatpush2.bf16.msra.mxu0 0
          %728 = vmatprep.subr.bf16.mxu0 0
          %729 = vmatpush2.bf16.msra.mxu0 0
          %730 = vmatprep.subr.bf16.mxu0 0
          %731 = vmatpush2.bf16.msra.mxu0 0
          %732 = vmatprep.subr.bf16.mxu0 0
          %733 = vmatpush2.bf16.msra.mxu0 0
          %734 = vmatprep.subr.bf16.mxu0 0
          %735 = vmatpush2.bf16.msra.mxu0 0
          %736 = vmatprep.subr.bf16.mxu0 0
          %737 = vmatpush2.bf16.msra.mxu0 0
          %738 = vmatprep.subr.bf16.mxu0 0
          %739 = vmatpush2.bf16.msra.mxu0 0
          %740 = vmatprep.mubr.bf16.mxu0 0
          %741 = vmatmul.mubr.bf16.gmra.mxu0 %v373
          %v742 = vpop.f32.mrf.mxu0
          %v743 = vadd.f32 %v694, %v742
          %v744 = vpop.f32.mrf.mxu0
          %v745 = vpop.f32.mrf.mxu0
          %v746 = vpop.f32.mrf.mxu0
          %747 = vdwg.mxu0
          %s748 = scalar_lea.vmem %s3, 32
          %v749 = vld [vmem:[%s748] sm:$0xf]
          %v750 = vld [vmem:[%s748 + $0x4] sm:$0xf]
          %v751 = vld [vmem:[%s748 + $0x8] sm:$0xf]
          %v752 = vld [vmem:[%s748 + $0xc] sm:$0xf]
          %s753 = scalar_lea.vmem %s6, 2
          %v754 = vld [vmem:[%s753] sm:$0x1]
          %v756 = vlaneseq
          %v757 = vshrl.u32 %v756, 7
          %v758 = vsub.s32 0, %v757
          %v759 = vrot.slane %v754, %v758
          %v765 = vunpack.c.l.b16 %v749
          %v766 = vunpack.c.l.b16 %v750
          %v767 = vunpack.c.l.b16 %v751
          %v768 = vunpack.c.l.b16 %v752
          %v769 = vpack.c.b16 %v766, %v765
          %v770 = vpack.c.b16 %v768, %v767
          %773 = vmatprep.subr.bf16.mxu0 0
          %774 = vmatpush1.bf16.msra.mxu0 0
          %775 = vmatprep.subr.bf16.mxu0 0
          %776 = vmatpush1.bf16.msra.mxu0 0
          %777 = vmatprep.subr.bf16.mxu0 0
          %778 = vmatpush1.bf16.msra.mxu0 0
          %779 = vmatprep.subr.bf16.mxu0 0
          %780 = vmatpush1.bf16.msra.mxu0 0
          %781 = vmatprep.subr.bf16.mxu0 0
          %782 = vmatpush1.bf16.msra.mxu0 0
          %783 = vmatprep.subr.bf16.mxu0 0
          %784 = vmatpush1.bf16.msra.mxu0 0
          %785 = vmatprep.subr.bf16.mxu0 0
          %786 = vmatpush1.bf16.msra.mxu0 %v770
          %787 = vmatprep.subr.bf16.mxu0 0
          %788 = vmatpush1.bf16.msra.mxu0 %v769
          %789 = vmatprep.subr.bf16.mxu0 0
          %790 = vmatpush2.bf16.msra.mxu0 0
          %791 = vmatprep.subr.bf16.mxu0 0
          %792 = vmatpush2.bf16.msra.mxu0 0
          %793 = vmatprep.subr.bf16.mxu0 0
          %794 = vmatpush2.bf16.msra.mxu0 0
          %795 = vmatprep.subr.bf16.mxu0 0
          %796 = vmatpush2.bf16.msra.mxu0 0
          %797 = vmatprep.subr.bf16.mxu0 0
          %798 = vmatpush2.bf16.msra.mxu0 0
          %799 = vmatprep.subr.bf16.mxu0 0
          %800 = vmatpush2.bf16.msra.mxu0 0
          %801 = vmatprep.subr.bf16.mxu0 0
          %802 = vmatpush2.bf16.msra.mxu0 0
          %803 = vmatprep.subr.bf16.mxu0 0
          %804 = vmatpush2.bf16.msra.mxu0 0
          %805 = vmatprep.mubr.bf16.mxu0 0
          %806 = vmatmul.mubr.bf16.gmra.mxu0 %v373
          %v807 = vpop.f32.mrf.mxu0
          %v808 = vadd.f32 %v759, %v807
          %v809 = vpop.f32.mrf.mxu0
          %v810 = vpop.f32.mrf.mxu0
          %v811 = vpop.f32.mrf.mxu0
          %812 = vdwg.mxu0
          %813 = vxpose.xlu0.b32.start [1/16] %v743, 128
          %814 = vxpose.xlu0.b32.cont [2/16] 0.0, 128
          %815 = vxpose.xlu0.b32.cont [3/16] 0.0, 128
          %816 = vxpose.xlu0.b32.cont [4/16] 0.0, 128
          %817 = vxpose.xlu0.b32.cont [5/16] 0.0, 128
          %818 = vxpose.xlu0.b32.cont [6/16] 0.0, 128
          %819 = vxpose.xlu0.b32.cont [7/16] 0.0, 128
          %820 = vxpose.xlu0.b32.cont [8/16] 0.0, 128
          %821 = vxpose.xlu0.b32.cont [9/16] 0.0, 128
          %822 = vxpose.xlu0.b32.cont [10/16] 0.0, 128
          %823 = vxpose.xlu0.b32.cont [11/16] 0.0, 128
          %824 = vxpose.xlu0.b32.cont [12/16] 0.0, 128
          %825 = vxpose.xlu0.b32.cont [13/16] 0.0, 128
          %826 = vxpose.xlu0.b32.cont [14/16] 0.0, 128
          %827 = vxpose.xlu0.b32.cont [15/16] 0.0, 128
          %828 = vxpose.xlu0.b32.end [16/16] 0.0, 128
          %v829 = vpop.trf.xlu0
          %v830 = vpop.trf.xlu0
          %v831 = vpop.trf.xlu0
          %v832 = vpop.trf.xlu0
          %v833 = vpop.trf.xlu0
          %v834 = vpop.trf.xlu0
          %v835 = vpop.trf.xlu0
          %v836 = vpop.trf.xlu0
          %v837 = vpop.trf.xlu0
          %v838 = vpop.trf.xlu0
          %v839 = vpop.trf.xlu0
          %v840 = vpop.trf.xlu0
          %v841 = vpop.trf.xlu0
          %v842 = vpop.trf.xlu0
          %v843 = vpop.trf.xlu0
          %v844 = vpop.trf.xlu0
          %v845 = vpack.c.bf16 %v829, %v829
          %s846 = scalar_lea.vmem [#allocation2], 8
          %847 = vst.msk [vmem:[%s846] sm:$0xf] %vm511, %v845
          %v848 = vpack.c.bf16 %v808, %v808
          %s849 = scalar_lea.vmem [#allocation3], 8
          %850 = vst.msk [vmem:[%s849] sm:$0xf] %vm511, %v848
          %s851 = scalar_lea.vmem %s2, 48
          %v852 = vld [vmem:[%s851] sm:$0xf]
          %v853 = vld [vmem:[%s851 + $0x4] sm:$0xf]
          %v854 = vld [vmem:[%s851 + $0x8] sm:$0xf]
          %v855 = vld [vmem:[%s851 + $0xc] sm:$0xf]
          %s856 = scalar_lea.vmem %s5, 3
          %v857 = vld [vmem:[%s856] sm:$0x1]
          %v859 = vlaneseq
          %v860 = vshrl.u32 %v859, 7
          %v861 = vsub.s32 0, %v860
          %v862 = vrot.slane %v857, %v861
          %v868 = vunpack.c.l.b16 %v852
          %v869 = vunpack.c.l.b16 %v853
          %v870 = vunpack.c.l.b16 %v854
          %v871 = vunpack.c.l.b16 %v855
          %v872 = vpack.c.b16 %v869, %v868
          %v873 = vpack.c.b16 %v871, %v870
          %876 = vmatprep.subr.bf16.mxu0 0
          %877 = vmatpush1.bf16.msra.mxu0 0
          %878 = vmatprep.subr.bf16.mxu0 0
          %879 = vmatpush1.bf16.msra.mxu0 0
          %880 = vmatprep.subr.bf16.mxu0 0
          %881 = vmatpush1.bf16.msra.mxu0 0
          %882 = vmatprep.subr.bf16.mxu0 0
          %883 = vmatpush1.bf16.msra.mxu0 0
          %884 = vmatprep.subr.bf16.mxu0 0
          %885 = vmatpush1.bf16.msra.mxu0 0
          %886 = vmatprep.subr.bf16.mxu0 0
          %887 = vmatpush1.bf16.msra.mxu0 0
          %888 = vmatprep.subr.bf16.mxu0 0
          %889 = vmatpush1.bf16.msra.mxu0 %v873
          %890 = vmatprep.subr.bf16.mxu0 0
          %891 = vmatpush1.bf16.msra.mxu0 %v872
          %892 = vmatprep.subr.bf16.mxu0 0
          %893 = vmatpush2.bf16.msra.mxu0 0
          %894 = vmatprep.subr.bf16.mxu0 0
          %895 = vmatpush2.bf16.msra.mxu0 0
          %896 = vmatprep.subr.bf16.mxu0 0
          %897 = vmatpush2.bf16.msra.mxu0 0
          %898 = vmatprep.subr.bf16.mxu0 0
          %899 = vmatpush2.bf16.msra.mxu0 0
          %900 = vmatprep.subr.bf16.mxu0 0
          %901 = vmatpush2.bf16.msra.mxu0 0
          %902 = vmatprep.subr.bf16.mxu0 0
          %903 = vmatpush2.bf16.msra.mxu0 0
          %904 = vmatprep.subr.bf16.mxu0 0
          %905 = vmatpush2.bf16.msra.mxu0 0
          %906 = vmatprep.subr.bf16.mxu0 0
          %907 = vmatpush2.bf16.msra.mxu0 0
          %908 = vmatprep.mubr.bf16.mxu0 0
          %909 = vmatmul.mubr.bf16.gmra.mxu0 %v373
          %v910 = vpop.f32.mrf.mxu0
          %v911 = vadd.f32 %v862, %v910
          %v912 = vpop.f32.mrf.mxu0
          %v913 = vpop.f32.mrf.mxu0
          %v914 = vpop.f32.mrf.mxu0
          %915 = vdwg.mxu0
          %s916 = scalar_lea.vmem %s3, 48
          %v917 = vld [vmem:[%s916] sm:$0xf]
          %v918 = vld [vmem:[%s916 + $0x4] sm:$0xf]
          %v919 = vld [vmem:[%s916 + $0x8] sm:$0xf]
          %v920 = vld [vmem:[%s916 + $0xc] sm:$0xf]
          %s921 = scalar_lea.vmem %s6, 3
          %v922 = vld [vmem:[%s921] sm:$0x1]
          %v924 = vlaneseq
          %v925 = vshrl.u32 %v924, 7
          %v926 = vsub.s32 0, %v925
          %v927 = vrot.slane %v922, %v926
          %v933 = vunpack.c.l.b16 %v917
          %v934 = vunpack.c.l.b16 %v918
          %v935 = vunpack.c.l.b16 %v919
          %v936 = vunpack.c.l.b16 %v920
          %v937 = vpack.c.b16 %v934, %v933
          %v938 = vpack.c.b16 %v936, %v935
          %941 = vmatprep.subr.bf16.mxu0 0
          %942 = vmatpush1.bf16.msra.mxu0 0
          %943 = vmatprep.subr.bf16.mxu0 0
          %944 = vmatpush1.bf16.msra.mxu0 0
          %945 = vmatprep.subr.bf16.mxu0 0
          %946 = vmatpush1.bf16.msra.mxu0 0
          %947 = vmatprep.subr.bf16.mxu0 0
          %948 = vmatpush1.bf16.msra.mxu0 0
          %949 = vmatprep.subr.bf16.mxu0 0
          %950 = vmatpush1.bf16.msra.mxu0 0
          %951 = vmatprep.subr.bf16.mxu0 0
          %952 = vmatpush1.bf16.msra.mxu0 0
          %953 = vmatprep.subr.bf16.mxu0 0
          %954 = vmatpush1.bf16.msra.mxu0 %v938
          %955 = vmatprep.subr.bf16.mxu0 0
          %956 = vmatpush1.bf16.msra.mxu0 %v937
          %957 = vmatprep.subr.bf16.mxu0 0
          %958 = vmatpush2.bf16.msra.mxu0 0
          %959 = vmatprep.subr.bf16.mxu0 0
          %960 = vmatpush2.bf16.msra.mxu0 0
          %961 = vmatprep.subr.bf16.mxu0 0
          %962 = vmatpush2.bf16.msra.mxu0 0
          %963 = vmatprep.subr.bf16.mxu0 0
          %964 = vmatpush2.bf16.msra.mxu0 0
          %965 = vmatprep.subr.bf16.mxu0 0
          %966 = vmatpush2.bf16.msra.mxu0 0
          %967 = vmatprep.subr.bf16.mxu0 0
          %968 = vmatpush2.bf16.msra.mxu0 0
          %969 = vmatprep.subr.bf16.mxu0 0
          %970 = vmatpush2.bf16.msra.mxu0 0
          %971 = vmatprep.subr.bf16.mxu0 0
          %972 = vmatpush2.bf16.msra.mxu0 0
          %973 = vmatprep.mubr.bf16.mxu0 0
          %974 = vmatmul.mubr.bf16.gmra.mxu0 %v373
          %v975 = vpop.f32.mrf.mxu0
          %v976 = vadd.f32 %v927, %v975
          %v977 = vpop.f32.mrf.mxu0
          %v978 = vpop.f32.mrf.mxu0
          %v979 = vpop.f32.mrf.mxu0
          %980 = vdwg.mxu0
          %981 = vxpose.xlu0.b32.start [1/16] %v911, 128
          %982 = vxpose.xlu0.b32.cont [2/16] 0.0, 128
          %983 = vxpose.xlu0.b32.cont [3/16] 0.0, 128
          %984 = vxpose.xlu0.b32.cont [4/16] 0.0, 128
          %985 = vxpose.xlu0.b32.cont [5/16] 0.0, 128
          %986 = vxpose.xlu0.b32.cont [6/16] 0.0, 128
          %987 = vxpose.xlu0.b32.cont [7/16] 0.0, 128
          %988 = vxpose.xlu0.b32.cont [8/16] 0.0, 128
          %989 = vxpose.xlu0.b32.cont [9/16] 0.0, 128
          %990 = vxpose.xlu0.b32.cont [10/16] 0.0, 128
          %991 = vxpose.xlu0.b32.cont [11/16] 0.0, 128
          %992 = vxpose.xlu0.b32.cont [12/16] 0.0, 128
          %993 = vxpose.xlu0.b32.cont [13/16] 0.0, 128
          %994 = vxpose.xlu0.b32.cont [14/16] 0.0, 128
          %995 = vxpose.xlu0.b32.cont [15/16] 0.0, 128
          %996 = vxpose.xlu0.b32.end [16/16] 0.0, 128
          %v997 = vpop.trf.xlu0
          %v998 = vpop.trf.xlu0
          %v999 = vpop.trf.xlu0
          %v1000 = vpop.trf.xlu0
          %v1001 = vpop.trf.xlu0
          %v1002 = vpop.trf.xlu0
          %v1003 = vpop.trf.xlu0
          %v1004 = vpop.trf.xlu0
          %v1005 = vpop.trf.xlu0
          %v1006 = vpop.trf.xlu0
          %v1007 = vpop.trf.xlu0
          %v1008 = vpop.trf.xlu0
          %v1009 = vpop.trf.xlu0
          %v1010 = vpop.trf.xlu0
          %v1011 = vpop.trf.xlu0
          %v1012 = vpop.trf.xlu0
          %v1013 = vpack.c.bf16 %v997, %v997
          %s1014 = scalar_lea.vmem [#allocation2], 12
          %1015 = vst.msk [vmem:[%s1014] sm:$0xf] %vm511, %v1013
          %v1016 = vpack.c.bf16 %v976, %v976
          %s1017 = scalar_lea.vmem [#allocation3], 12
          %1018 = vst.msk [vmem:[%s1017] sm:$0xf] %vm511, %v1016
        $region60: #{tpu_custom_call.1} parent=55 // pred_fallthru
          _
        %s1019 = smul.u32 %s28, 8
        %s1020 = sshra.s32 %s1019, 3
        %s1021 = sand.u32 %s1019, 7
        %s1022 = smul.addr %s1020, 4
        %s1023 = scalar_lea.vmem %s341, %s1022
        %v1024 = vld [vmem:[%s1023] sm:$0xf]
        %v1025 = vld [vmem:[%s1] sm:$0xf]
        %v1026 = vld [vmem:[%s1 + $0x4] sm:$0xf]
        %v1027 = vld [vmem:[%s1 + $0x8] sm:$0xf]
        %v1028 = vld [vmem:[%s1 + $0xc] sm:$0xf]
        %v1029 = vld [vmem:[%s4] sm:$0x1]
        %v1031 = vlaneseq
        %v1032 = vshrl.u32 %v1031, 7
        %v1033 = vsub.s32 0, %v1032
        %v1034 = vrot.slane %v1029, %v1033
        %v1040 = vunpack.c.l.b16 %v1025
        %v1041 = vunpack.c.l.b16 %v1026
        %v1042 = vunpack.c.l.b16 %v1027
        %v1043 = vunpack.c.l.b16 %v1028
        %v1044 = vpack.c.b16 %v1041, %v1040
        %v1045 = vpack.c.b16 %v1043, %v1042
        %vm1048 = vcmask 261120
        %v1050 = vsel %vm1048, %v1024, 0
        %1052 = vmatprep.subr.bf16.mxu0 0
        %1053 = vmatpush1.bf16.msra.mxu0 0
        %1054 = vmatprep.subr.bf16.mxu0 0
        %1055 = vmatpush1.bf16.msra.mxu0 0
        %1056 = vmatprep.subr.bf16.mxu0 0
        %1057 = vmatpush1.bf16.msra.mxu0 0
        %1058 = vmatprep.subr.bf16.mxu0 0
        %1059 = vmatpush1.bf16.msra.mxu0 0
        %1060 = vmatprep.subr.bf16.mxu0 0
        %1061 = vmatpush1.bf16.msra.mxu0 0
        %1062 = vmatprep.subr.bf16.mxu0 0
        %1063 = vmatpush1.bf16.msra.mxu0 0
        %1064 = vmatprep.subr.bf16.mxu0 0
        %1065 = vmatpush1.bf16.msra.mxu0 %v1045
        %1066 = vmatprep.subr.bf16.mxu0 0
        %1067 = vmatpush1.bf16.msra.mxu0 %v1044
        %1068 = vmatprep.subr.bf16.mxu0 0
        %1069 = vmatpush2.bf16.msra.mxu0 0
        %1070 = vmatprep.subr.bf16.mxu0 0
        %1071 = vmatpush2.bf16.msra.mxu0 0
        %1072 = vmatprep.subr.bf16.mxu0 0
        %1073 = vmatpush2.bf16.msra.mxu0 0
        %1074 = vmatprep.subr.bf16.mxu0 0
        %1075 = vmatpush2.bf16.msra.mxu0 0
        %1076 = vmatprep.subr.bf16.mxu0 0
        %1077 = vmatpush2.bf16.msra.mxu0 0
        %1078 = vmatprep.subr.bf16.mxu0 0
        %1079 = vmatpush2.bf16.msra.mxu0 0
        %1080 = vmatprep.subr.bf16.mxu0 0
        %1081 = vmatpush2.bf16.msra.mxu0 0
        %1082 = vmatprep.subr.bf16.mxu0 0
        %1083 = vmatpush2.bf16.msra.mxu0 0
        %1084 = vmatprep.mubr.bf16.mxu0 0
        %1085 = vmatmul.mubr.bf16.gmra.mxu0 %v1050
        %v1086 = vpop.f32.mrf.mxu0
        %v1087 = vadd.f32 %v1034, %v1086
        %v1088 = vpop.f32.mrf.mxu0
        %v1089 = vpop.f32.mrf.mxu0
        %v1090 = vpop.f32.mrf.mxu0
        %1091 = vdwg.mxu0
        %v1092 = vpack.c.bf16 %v1087, %v1087
        %v1093 = vld [vmem:[#allocation2] sm:$0xf]
        %vm1094 = vcmask 64512
        %v1096 = vsel %vm1094, %v1092, 0
        %vm1098 = vcmask 1043456
        %v1100 = vsel %vm1098, %v1093, 0
        %1102 = vmatprep.subr.bf16.mxu0 0
        %1103 = vmatpush1.bf16.msra.mxu0 0
        %1104 = vmatprep.subr.bf16.mxu0 0
        %1105 = vmatpush1.bf16.msra.mxu0 0
        %1106 = vmatprep.subr.bf16.mxu0 0
        %1107 = vmatpush1.bf16.msra.mxu0 0
        %1108 = vmatprep.subr.bf16.mxu0 0
        %1109 = vmatpush1.bf16.msra.mxu0 0
        %1110 = vmatprep.subr.bf16.mxu0 0
        %1111 = vmatpush1.bf16.msra.mxu0 0
        %1112 = vmatprep.subr.bf16.mxu0 0
        %1113 = vmatpush1.bf16.msra.mxu0 0
        %1114 = vmatprep.subr.bf16.mxu0 0
        %1115 = vmatpush1.bf16.msra.mxu0 0
        %1116 = vmatprep.subr.bf16.mxu0 0
        %1117 = vmatpush1.bf16.msra.mxu0 %v1100
        %1118 = vmatprep.subr.bf16.mxu0 0
        %1119 = vmatpush2.bf16.msra.mxu0 0
        %1120 = vmatprep.subr.bf16.mxu0 0
        %1121 = vmatpush2.bf16.msra.mxu0 0
        %1122 = vmatprep.subr.bf16.mxu0 0
        %1123 = vmatpush2.bf16.msra.mxu0 0
        %1124 = vmatprep.subr.bf16.mxu0 0
        %1125 = vmatpush2.bf16.msra.mxu0 0
        %1126 = vmatprep.subr.bf16.mxu0 0
        %1127 = vmatpush2.bf16.msra.mxu0 0
        %1128 = vmatprep.subr.bf16.mxu0 0
        %1129 = vmatpush2.bf16.msra.mxu0 0
        %1130 = vmatprep.subr.bf16.mxu0 0
        %1131 = vmatpush2.bf16.msra.mxu0 0
        %1132 = vmatprep.subr.bf16.mxu0 0
        %1133 = vmatpush2.bf16.msra.mxu0 0
        %1134 = vmatprep.mubr.bf16.mxu0 0
        %1135 = vmatmul.mubr.bf16.gmra.mxu0 %v1096
        %v1136 = vpop.f32.mrf.mxu0
        %v1137 = vadd.f32 0.0, %v1136
        %v1138 = vpop.f32.mrf.mxu0
        %v1139 = vpop.f32.mrf.mxu0
        %v1140 = vpop.f32.mrf.mxu0
        %1141 = vdwg.mxu0
        %v1142 = vsel %vm1094, %v1137, -inf
        %1143 = vmax.xlane.f32.xlu0 %v1142
        %v1144 = vpop.xlane.xlu0 %1143
        %v1145 = vsub.f32 %v1137, %v1144
        %v1146 = vmul.f32 %v1145, 1.442695
        %v1147 = vpow.pop %v1146
        %v1148 = vsel %vm1094, %v1147, 0.0
        %1149 = vadd.xlane.f32.xlu0 %v1148
        %v1150 = vpop.xlane.xlu0 %1149
        %v1151 = vrcp.pop %v1150
        %v1152 = vpack.c.bf16 %v1147, %v1147
        %v1153 = vld [vmem:[#allocation3] sm:$0xf]
        %v1155 = vsel %vm1094, %v1152, 0
        %v1158 = vsel %vm1098, %v1153, 0
        %1160 = vmatprep.subr.bf16.mxu0 0
        %1161 = vmatpush1.bf16.msra.mxu0 0
        %1162 = vmatprep.subr.bf16.mxu0 0
        %1163 = vmatpush1.bf16.msra.mxu0 0
        %1164 = vmatprep.subr.bf16.mxu0 0
        %1165 = vmatpush1.bf16.msra.mxu0 0
        %1166 = vmatprep.subr.bf16.mxu0 0
        %1167 = vmatpush1.bf16.msra.mxu0 0
        %1168 = vmatprep.subr.bf16.mxu0 0
        %1169 = vmatpush1.bf16.msra.mxu0 0
        %1170 = vmatprep.subr.bf16.mxu0 0
        %1171 = vmatpush1.bf16.msra.mxu0 0
        %1172 = vmatprep.subr.bf16.mxu0 0
        %1173 = vmatpush1.bf16.msra.mxu0 0
        %1174 = vmatprep.subr.bf16.mxu0 0
        %1175 = vmatpush1.bf16.msra.mxu0 %v1158
        %1176 = vmatprep.subr.bf16.mxu0 0
        %1177 = vmatpush2.bf16.msra.mxu0 0
        %1178 = vmatprep.subr.bf16.mxu0 0
        %1179 = vmatpush2.bf16.msra.mxu0 0
        %1180 = vmatprep.subr.bf16.mxu0 0
        %1181 = vmatpush2.bf16.msra.mxu0 0
        %1182 = vmatprep.subr.bf16.mxu0 0
        %1183 = vmatpush2.bf16.msra.mxu0 0
        %1184 = vmatprep.subr.bf16.mxu0 0
        %1185 = vmatpush2.bf16.msra.mxu0 0
        %1186 = vmatprep.subr.bf16.mxu0 0
        %1187 = vmatpush2.bf16.msra.mxu0 0
        %1188 = vmatprep.subr.bf16.mxu0 0
        %1189 = vmatpush2.bf16.msra.mxu0 0
        %1190 = vmatprep.subr.bf16.mxu0 0
        %1191 = vmatpush2.bf16.msra.mxu0 0
        %1192 = vmatprep.mubr.bf16.mxu0 0
        %1193 = vmatmul.mubr.bf16.gmra.mxu0 %v1155
        %v1194 = vpop.f32.mrf.mxu0
        %v1195 = vadd.f32 0.0, %v1194
        %v1196 = vpop.f32.mrf.mxu0
        %v1197 = vpop.f32.mrf.mxu0
        %v1198 = vpop.f32.mrf.mxu0
        %1199 = vdwg.mxu0
        %v1200 = vmul.f32 %v1195, %v1151
        %v1201 = vpack.c.bf16 %v1200, %v1200
        %v1202 = vld [vmem:[%s7] sm:$0xf]
        %s1203 = scalar_lea.vmem %s1, 16
        %v1204 = vld [vmem:[%s1203] sm:$0xf]
        %v1205 = vld [vmem:[%s1203 + $0x4] sm:$0xf]
        %v1206 = vld [vmem:[%s1203 + $0x8] sm:$0xf]
        %v1207 = vld [vmem:[%s1203 + $0xc] sm:$0xf]
        %s1208 = scalar_lea.vmem %s4, 1
        %v1209 = vld [vmem:[%s1208] sm:$0x1]
        %v1211 = vlaneseq
        %v1212 = vshrl.u32 %v1211, 7
        %v1213 = vsub.s32 0, %v1212
        %v1214 = vrot.slane %v1209, %v1213
        %v1220 = vunpack.c.l.b16 %v1204
        %v1221 = vunpack.c.l.b16 %v1205
        %v1222 = vunpack.c.l.b16 %v1206
        %v1223 = vunpack.c.l.b16 %v1207
        %v1224 = vpack.c.b16 %v1221, %v1220
        %v1225 = vpack.c.b16 %v1223, %v1222
        %1228 = vmatprep.subr.bf16.mxu0 0
        %1229 = vmatpush1.bf16.msra.mxu0 0
        %1230 = vmatprep.subr.bf16.mxu0 0
        %1231 = vmatpush1.bf16.msra.mxu0 0
        %1232 = vmatprep.subr.bf16.mxu0 0
        %1233 = vmatpush1.bf16.msra.mxu0 0
        %1234 = vmatprep.subr.bf16.mxu0 0
        %1235 = vmatpush1.bf16.msra.mxu0 0
        %1236 = vmatprep.subr.bf16.mxu0 0
        %1237 = vmatpush1.bf16.msra.mxu0 0
        %1238 = vmatprep.subr.bf16.mxu0 0
        %1239 = vmatpush1.bf16.msra.mxu0 0
        %1240 = vmatprep.subr.bf16.mxu0 0
        %1241 = vmatpush1.bf16.msra.mxu0 %v1225
        %1242 = vmatprep.subr.bf16.mxu0 0
        %1243 = vmatpush1.bf16.msra.mxu0 %v1224
        %1244 = vmatprep.subr.bf16.mxu0 0
        %1245 = vmatpush2.bf16.msra.mxu0 0
        %1246 = vmatprep.subr.bf16.mxu0 0
        %1247 = vmatpush2.bf16.msra.mxu0 0
        %1248 = vmatprep.subr.bf16.mxu0 0
        %1249 = vmatpush2.bf16.msra.mxu0 0
        %1250 = vmatprep.subr.bf16.mxu0 0
        %1251 = vmatpush2.bf16.msra.mxu0 0
        %1252 = vmatprep.subr.bf16.mxu0 0
        %1253 = vmatpush2.bf16.msra.mxu0 0
        %1254 = vmatprep.subr.bf16.mxu0 0
        %1255 = vmatpush2.bf16.msra.mxu0 0
        %1256 = vmatprep.subr.bf16.mxu0 0
        %1257 = vmatpush2.bf16.msra.mxu0 0
        %1258 = vmatprep.subr.bf16.mxu0 0
        %1259 = vmatpush2.bf16.msra.mxu0 0
        %1260 = vmatprep.mubr.bf16.mxu0 0
        %1261 = vmatmul.mubr.bf16.gmra.mxu0 %v1050
        %v1262 = vpop.f32.mrf.mxu0
        %v1263 = vadd.f32 %v1214, %v1262
        %v1264 = vpop.f32.mrf.mxu0
        %v1265 = vpop.f32.mrf.mxu0
        %v1266 = vpop.f32.mrf.mxu0
        %1267 = vdwg.mxu0
        %v1268 = vpack.c.bf16 %v1263, %v1263
        %s1269 = scalar_lea.vmem [#allocation2], 4
        %v1270 = vld [vmem:[%s1269] sm:$0xf]
        %v1272 = vsel %vm1094, %v1268, 0
        %v1275 = vsel %vm1098, %v1270, 0
        %1277 = vmatprep.subr.bf16.mxu0 0
        %1278 = vmatpush1.bf16.msra.mxu0 0
        %1279 = vmatprep.subr.bf16.mxu0 0
        %1280 = vmatpush1.bf16.msra.mxu0 0
        %1281 = vmatprep.subr.bf16.mxu0 0
        %1282 = vmatpush1.bf16.msra.mxu0 0
        %1283 = vmatprep.subr.bf16.mxu0 0
        %1284 = vmatpush1.bf16.msra.mxu0 0
        %1285 = vmatprep.subr.bf16.mxu0 0
        %1286 = vmatpush1.bf16.msra.mxu0 0
        %1287 = vmatprep.subr.bf16.mxu0 0
        %1288 = vmatpush1.bf16.msra.mxu0 0
        %1289 = vmatprep.subr.bf16.mxu0 0
        %1290 = vmatpush1.bf16.msra.mxu0 0
        %1291 = vmatprep.subr.bf16.mxu0 0
        %1292 = vmatpush1.bf16.msra.mxu0 %v1275
        %1293 = vmatprep.subr.bf16.mxu0 0
        %1294 = vmatpush2.bf16.msra.mxu0 0
        %1295 = vmatprep.subr.bf16.mxu0 0
        %1296 = vmatpush2.bf16.msra.mxu0 0
        %1297 = vmatprep.subr.bf16.mxu0 0
        %1298 = vmatpush2.bf16.msra.mxu0 0
        %1299 = vmatprep.subr.bf16.mxu0 0
        %1300 = vmatpush2.bf16.msra.mxu0 0
        %1301 = vmatprep.subr.bf16.mxu0 0
        %1302 = vmatpush2.bf16.msra.mxu0 0
        %1303 = vmatprep.subr.bf16.mxu0 0
        %1304 = vmatpush2.bf16.msra.mxu0 0
        %1305 = vmatprep.subr.bf16.mxu0 0
        %1306 = vmatpush2.bf16.msra.mxu0 0
        %1307 = vmatprep.subr.bf16.mxu0 0
        %1308 = vmatpush2.bf16.msra.mxu0 0
        %1309 = vmatprep.mubr.bf16.mxu0 0
        %1310 = vmatmul.mubr.bf16.gmra.mxu0 %v1272
        %v1311 = vpop.f32.mrf.mxu0
        %v1312 = vadd.f32 0.0, %v1311
        %v1313 = vpop.f32.mrf.mxu0
        %v1314 = vpop.f32.mrf.mxu0
        %v1315 = vpop.f32.mrf.mxu0
        %1316 = vdwg.mxu0
        %v1317 = vsel %vm1094, %v1312, -inf
        %1318 = vmax.xlane.f32.xlu0 %v1317
        %v1319 = vpop.xlane.xlu0 %1318
        %v1320 = vsub.f32 %v1312, %v1319
        %v1321 = vmul.f32 %v1320, 1.442695
        %v1322 = vpow.pop %v1321
        %v1323 = vsel %vm1094, %v1322, 0.0
        %1324 = vadd.xlane.f32.xlu0 %v1323
        %v1325 = vpop.xlane.xlu0 %1324
        %v1326 = vrcp.pop %v1325
        %v1327 = vpack.c.bf16 %v1322, %v1322
        %s1328 = scalar_lea.vmem [#allocation3], 4
        %v1329 = vld [vmem:[%s1328] sm:$0xf]
        %v1331 = vsel %vm1094, %v1327, 0
        %v1334 = vsel %vm1098, %v1329, 0
        %1336 = vmatprep.subr.bf16.mxu0 0
        %1337 = vmatpush1.bf16.msra.mxu0 0
        %1338 = vmatprep.subr.bf16.mxu0 0
        %1339 = vmatpush1.bf16.msra.mxu0 0
        %1340 = vmatprep.subr.bf16.mxu0 0
        %1341 = vmatpush1.bf16.msra.mxu0 0
        %1342 = vmatprep.subr.bf16.mxu0 0
        %1343 = vmatpush1.bf16.msra.mxu0 0
        %1344 = vmatprep.subr.bf16.mxu0 0
        %1345 = vmatpush1.bf16.msra.mxu0 0
        %1346 = vmatprep.subr.bf16.mxu0 0
        %1347 = vmatpush1.bf16.msra.mxu0 0
        %1348 = vmatprep.subr.bf16.mxu0 0
        %1349 = vmatpush1.bf16.msra.mxu0 0
        %1350 = vmatprep.subr.bf16.mxu0 0
        %1351 = vmatpush1.bf16.msra.mxu0 %v1334
        %1352 = vmatprep.subr.bf16.mxu0 0
        %1353 = vmatpush2.bf16.msra.mxu0 0
        %1354 = vmatprep.subr.bf16.mxu0 0
        %1355 = vmatpush2.bf16.msra.mxu0 0
        %1356 = vmatprep.subr.bf16.mxu0 0
        %1357 = vmatpush2.bf16.msra.mxu0 0
        %1358 = vmatprep.subr.bf16.mxu0 0
        %1359 = vmatpush2.bf16.msra.mxu0 0
        %1360 = vmatprep.subr.bf16.mxu0 0
        %1361 = vmatpush2.bf16.msra.mxu0 0
        %1362 = vmatprep.subr.bf16.mxu0 0
        %1363 = vmatpush2.bf16.msra.mxu0 0
        %1364 = vmatprep.subr.bf16.mxu0 0
        %1365 = vmatpush2.bf16.msra.mxu0 0
        %1366 = vmatprep.subr.bf16.mxu0 0
        %1367 = vmatpush2.bf16.msra.mxu0 0
        %1368 = vmatprep.mubr.bf16.mxu0 0
        %1369 = vmatmul.mubr.bf16.gmra.mxu0 %v1331
        %v1370 = vpop.f32.mrf.mxu0
        %v1371 = vadd.f32 0.0, %v1370
        %v1372 = vpop.f32.mrf.mxu0
        %v1373 = vpop.f32.mrf.mxu0
        %v1374 = vpop.f32.mrf.mxu0
        %1375 = vdwg.mxu0
        %v1376 = vmul.f32 %v1371, %v1326
        %v1377 = vpack.c.bf16 %v1376, %v1376
        %s1378 = scalar_lea.vmem %s7, 4
        %v1379 = vld [vmem:[%s1378] sm:$0xf]
        %v1381 = vsel %vm1094, %v1377, 0
        %v1384 = vsel %vm1098, %v1379, 0
        %1386 = vmatprep.subr.bf16.mxu0 0
        %1387 = vmatpush1.bf16.msra.mxu0 0
        %1388 = vmatprep.subr.bf16.mxu0 0
        %1389 = vmatpush1.bf16.msra.mxu0 0
        %1390 = vmatprep.subr.bf16.mxu0 0
        %1391 = vmatpush1.bf16.msra.mxu0 0
        %1392 = vmatprep.subr.bf16.mxu0 0
        %1393 = vmatpush1.bf16.msra.mxu0 0
        %1394 = vmatprep.subr.bf16.mxu0 0
        %1395 = vmatpush1.bf16.msra.mxu0 0
        %1396 = vmatprep.subr.bf16.mxu0 0
        %1397 = vmatpush1.bf16.msra.mxu0 0
        %1398 = vmatprep.subr.bf16.mxu0 0
        %1399 = vmatpush1.bf16.msra.mxu0 0
        %1400 = vmatprep.subr.bf16.mxu0 0
        %1401 = vmatpush1.bf16.msra.mxu0 %v1384
        %1402 = vmatprep.subr.bf16.mxu0 0
        %1403 = vmatpush2.bf16.msra.mxu0 0
        %1404 = vmatprep.subr.bf16.mxu0 0
        %1405 = vmatpush2.bf16.msra.mxu0 0
        %1406 = vmatprep.subr.bf16.mxu0 0
        %1407 = vmatpush2.bf16.msra.mxu0 0
        %1408 = vmatprep.subr.bf16.mxu0 0
        %1409 = vmatpush2.bf16.msra.mxu0 0
        %1410 = vmatprep.subr.bf16.mxu0 0
        %1411 = vmatpush2.bf16.msra.mxu0 0
        %1412 = vmatprep.subr.bf16.mxu0 0
        %1413 = vmatpush2.bf16.msra.mxu0 0
        %1414 = vmatprep.subr.bf16.mxu0 0
        %1415 = vmatpush2.bf16.msra.mxu0 0
        %1416 = vmatprep.subr.bf16.mxu0 0
        %1417 = vmatpush2.bf16.msra.mxu0 0
        %1418 = vmatprep.mubr.bf16.mxu0 0
        %1419 = vmatmul.mubr.bf16.gmra.mxu0 %v1381
        %v1420 = vpop.f32.mrf.mxu0
        %v1421 = vadd.f32 0.0, %v1420
        %v1422 = vpop.f32.mrf.mxu0
        %v1423 = vpop.f32.mrf.mxu0
        %v1424 = vpop.f32.mrf.mxu0
        %1425 = vdwg.mxu0
        %v1427 = vsel %vm1094, %v1201, 0
        %v1430 = vsel %vm1098, %v1202, 0
        %1432 = vmatprep.subr.bf16.mxu0 0
        %1433 = vmatpush1.bf16.msra.mxu0 0
        %1434 = vmatprep.subr.bf16.mxu0 0
        %1435 = vmatpush1.bf16.msra.mxu0 0
        %1436 = vmatprep.subr.bf16.mxu0 0
        %1437 = vmatpush1.bf16.msra.mxu0 0
        %1438 = vmatprep.subr.bf16.mxu0 0
        %1439 = vmatpush1.bf16.msra.mxu0 0
        %1440 = vmatprep.subr.bf16.mxu0 0
        %1441 = vmatpush1.bf16.msra.mxu0 0
        %1442 = vmatprep.subr.bf16.mxu0 0
        %1443 = vmatpush1.bf16.msra.mxu0 0
        %1444 = vmatprep.subr.bf16.mxu0 0
        %1445 = vmatpush1.bf16.msra.mxu0 0
        %1446 = vmatprep.subr.bf16.mxu0 0
        %1447 = vmatpush1.bf16.msra.mxu0 %v1430
        %1448 = vmatprep.subr.bf16.mxu0 0
        %1449 = vmatpush2.bf16.msra.mxu0 0
        %1450 = vmatprep.subr.bf16.mxu0 0
        %1451 = vmatpush2.bf16.msra.mxu0 0
        %1452 = vmatprep.subr.bf16.mxu0 0
        %1453 = vmatpush2.bf16.msra.mxu0 0
        %1454 = vmatprep.subr.bf16.mxu0 0
        %1455 = vmatpush2.bf16.msra.mxu0 0
        %1456 = vmatprep.subr.bf16.mxu0 0
        %1457 = vmatpush2.bf16.msra.mxu0 0
        %1458 = vmatprep.subr.bf16.mxu0 0
        %1459 = vmatpush2.bf16.msra.mxu0 0
        %1460 = vmatprep.subr.bf16.mxu0 0
        %1461 = vmatpush2.bf16.msra.mxu0 0
        %1462 = vmatprep.subr.bf16.mxu0 0
        %1463 = vmatpush2.bf16.msra.mxu0 0
        %1464 = vmatprep.mubr.bf16.mxu0 0
        %1465 = vmatmul.mubr.bf16.gmra.mxu0 %v1427
        %v1466 = vpop.f32.mrf.mxu0
        %v1467 = vadd.f32 %v1421, %v1466
        %v1468 = vpop.f32.mrf.mxu0
        %v1469 = vpop.f32.mrf.mxu0
        %v1470 = vpop.f32.mrf.mxu0
        %1471 = vdwg.mxu0
        %s1472 = scalar_lea.vmem %s1, 32
        %v1473 = vld [vmem:[%s1472] sm:$0xf]
        %v1474 = vld [vmem:[%s1472 + $0x4] sm:$0xf]
        %v1475 = vld [vmem:[%s1472 + $0x8] sm:$0xf]
        %v1476 = vld [vmem:[%s1472 + $0xc] sm:$0xf]
        %s1477 = scalar_lea.vmem %s4, 2
        %v1478 = vld [vmem:[%s1477] sm:$0x1]
        %v1480 = vlaneseq
        %v1481 = vshrl.u32 %v1480, 7
        %v1482 = vsub.s32 0, %v1481
        %v1483 = vrot.slane %v1478, %v1482
        %v1489 = vunpack.c.l.b16 %v1473
        %v1490 = vunpack.c.l.b16 %v1474
        %v1491 = vunpack.c.l.b16 %v1475
        %v1492 = vunpack.c.l.b16 %v1476
        %v1493 = vpack.c.b16 %v1490, %v1489
        %v1494 = vpack.c.b16 %v1492, %v1491
        %1497 = vmatprep.subr.bf16.mxu0 0
        %1498 = vmatpush1.bf16.msra.mxu0 0
        %1499 = vmatprep.subr.bf16.mxu0 0
        %1500 = vmatpush1.bf16.msra.mxu0 0
        %1501 = vmatprep.subr.bf16.mxu0 0
        %1502 = vmatpush1.bf16.msra.mxu0 0
        %1503 = vmatprep.subr.bf16.mxu0 0
        %1504 = vmatpush1.bf16.msra.mxu0 0
        %1505 = vmatprep.subr.bf16.mxu0 0
        %1506 = vmatpush1.bf16.msra.mxu0 0
        %1507 = vmatprep.subr.bf16.mxu0 0
        %1508 = vmatpush1.bf16.msra.mxu0 0
        %1509 = vmatprep.subr.bf16.mxu0 0
        %1510 = vmatpush1.bf16.msra.mxu0 %v1494
        %1511 = vmatprep.subr.bf16.mxu0 0
        %1512 = vmatpush1.bf16.msra.mxu0 %v1493
        %1513 = vmatprep.subr.bf16.mxu0 0
        %1514 = vmatpush2.bf16.msra.mxu0 0
        %1515 = vmatprep.subr.bf16.mxu0 0
        %1516 = vmatpush2.bf16.msra.mxu0 0
        %1517 = vmatprep.subr.bf16.mxu0 0
        %1518 = vmatpush2.bf16.msra.mxu0 0
        %1519 = vmatprep.subr.bf16.mxu0 0
        %1520 = vmatpush2.bf16.msra.mxu0 0
        %1521 = vmatprep.subr.bf16.mxu0 0
        %1522 = vmatpush2.bf16.msra.mxu0 0
        %1523 = vmatprep.subr.bf16.mxu0 0
        %1524 = vmatpush2.bf16.msra.mxu0 0
        %1525 = vmatprep.subr.bf16.mxu0 0
        %1526 = vmatpush2.bf16.msra.mxu0 0
        %1527 = vmatprep.subr.bf16.mxu0 0
        %1528 = vmatpush2.bf16.msra.mxu0 0
        %1529 = vmatprep.mubr.bf16.mxu0 0
        %1530 = vmatmul.mubr.bf16.gmra.mxu0 %v1050
        %v1531 = vpop.f32.mrf.mxu0
        %v1532 = vadd.f32 %v1483, %v1531
        %v1533 = vpop.f32.mrf.mxu0
        %v1534 = vpop.f32.mrf.mxu0
        %v1535 = vpop.f32.mrf.mxu0
        %1536 = vdwg.mxu0
        %v1537 = vpack.c.bf16 %v1532, %v1532
        %s1538 = scalar_lea.vmem [#allocation2], 8
        %v1539 = vld [vmem:[%s1538] sm:$0xf]
        %v1541 = vsel %vm1094, %v1537, 0
        %v1544 = vsel %vm1098, %v1539, 0
        %1546 = vmatprep.subr.bf16.mxu0 0
        %1547 = vmatpush1.bf16.msra.mxu0 0
        %1548 = vmatprep.subr.bf16.mxu0 0
        %1549 = vmatpush1.bf16.msra.mxu0 0
        %1550 = vmatprep.subr.bf16.mxu0 0
        %1551 = vmatpush1.bf16.msra.mxu0 0
        %1552 = vmatprep.subr.bf16.mxu0 0
        %1553 = vmatpush1.bf16.msra.mxu0 0
        %1554 = vmatprep.subr.bf16.mxu0 0
        %1555 = vmatpush1.bf16.msra.mxu0 0
        %1556 = vmatprep.subr.bf16.mxu0 0
        %1557 = vmatpush1.bf16.msra.mxu0 0
        %1558 = vmatprep.subr.bf16.mxu0 0
        %1559 = vmatpush1.bf16.msra.mxu0 0
        %1560 = vmatprep.subr.bf16.mxu0 0
        %1561 = vmatpush1.bf16.msra.mxu0 %v1544
        %1562 = vmatprep.subr.bf16.mxu0 0
        %1563 = vmatpush2.bf16.msra.mxu0 0
        %1564 = vmatprep.subr.bf16.mxu0 0
        %1565 = vmatpush2.bf16.msra.mxu0 0
        %1566 = vmatprep.subr.bf16.mxu0 0
        %1567 = vmatpush2.bf16.msra.mxu0 0
        %1568 = vmatprep.subr.bf16.mxu0 0
        %1569 = vmatpush2.bf16.msra.mxu0 0
        %1570 = vmatprep.subr.bf16.mxu0 0
        %1571 = vmatpush2.bf16.msra.mxu0 0
        %1572 = vmatprep.subr.bf16.mxu0 0
        %1573 = vmatpush2.bf16.msra.mxu0 0
        %1574 = vmatprep.subr.bf16.mxu0 0
        %1575 = vmatpush2.bf16.msra.mxu0 0
        %1576 = vmatprep.subr.bf16.mxu0 0
        %1577 = vmatpush2.bf16.msra.mxu0 0
        %1578 = vmatprep.mubr.bf16.mxu0 0
        %1579 = vmatmul.mubr.bf16.gmra.mxu0 %v1541
        %v1580 = vpop.f32.mrf.mxu0
        %v1581 = vadd.f32 0.0, %v1580
        %v1582 = vpop.f32.mrf.mxu0
        %v1583 = vpop.f32.mrf.mxu0
        %v1584 = vpop.f32.mrf.mxu0
        %1585 = vdwg.mxu0
        %v1586 = vsel %vm1094, %v1581, -inf
        %1587 = vmax.xlane.f32.xlu0 %v1586
        %v1588 = vpop.xlane.xlu0 %1587
        %v1589 = vsub.f32 %v1581, %v1588
        %v1590 = vmul.f32 %v1589, 1.442695
        %v1591 = vpow.pop %v1590
        %v1592 = vsel %vm1094, %v1591, 0.0
        %1593 = vadd.xlane.f32.xlu0 %v1592
        %v1594 = vpop.xlane.xlu0 %1593
        %v1595 = vrcp.pop %v1594
        %v1596 = vpack.c.bf16 %v1591, %v1591
        %s1597 = scalar_lea.vmem [#allocation3], 8
        %v1598 = vld [vmem:[%s1597] sm:$0xf]
        %v1600 = vsel %vm1094, %v1596, 0
        %v1603 = vsel %vm1098, %v1598, 0
        %1605 = vmatprep.subr.bf16.mxu0 0
        %1606 = vmatpush1.bf16.msra.mxu0 0
        %1607 = vmatprep.subr.bf16.mxu0 0
        %1608 = vmatpush1.bf16.msra.mxu0 0
        %1609 = vmatprep.subr.bf16.mxu0 0
        %1610 = vmatpush1.bf16.msra.mxu0 0
        %1611 = vmatprep.subr.bf16.mxu0 0
        %1612 = vmatpush1.bf16.msra.mxu0 0
        %1613 = vmatprep.subr.bf16.mxu0 0
        %1614 = vmatpush1.bf16.msra.mxu0 0
        %1615 = vmatprep.subr.bf16.mxu0 0
        %1616 = vmatpush1.bf16.msra.mxu0 0
        %1617 = vmatprep.subr.bf16.mxu0 0
        %1618 = vmatpush1.bf16.msra.mxu0 0
        %1619 = vmatprep.subr.bf16.mxu0 0
        %1620 = vmatpush1.bf16.msra.mxu0 %v1603
        %1621 = vmatprep.subr.bf16.mxu0 0
        %1622 = vmatpush2.bf16.msra.mxu0 0
        %1623 = vmatprep.subr.bf16.mxu0 0
        %1624 = vmatpush2.bf16.msra.mxu0 0
        %1625 = vmatprep.subr.bf16.mxu0 0
        %1626 = vmatpush2.bf16.msra.mxu0 0
        %1627 = vmatprep.subr.bf16.mxu0 0
        %1628 = vmatpush2.bf16.msra.mxu0 0
        %1629 = vmatprep.subr.bf16.mxu0 0
        %1630 = vmatpush2.bf16.msra.mxu0 0
        %1631 = vmatprep.subr.bf16.mxu0 0
        %1632 = vmatpush2.bf16.msra.mxu0 0
        %1633 = vmatprep.subr.bf16.mxu0 0
        %1634 = vmatpush2.bf16.msra.mxu0 0
        %1635 = vmatprep.subr.bf16.mxu0 0
        %1636 = vmatpush2.bf16.msra.mxu0 0
        %1637 = vmatprep.mubr.bf16.mxu0 0
        %1638 = vmatmul.mubr.bf16.gmra.mxu0 %v1600
        %v1639 = vpop.f32.mrf.mxu0
        %v1640 = vadd.f32 0.0, %v1639
        %v1641 = vpop.f32.mrf.mxu0
        %v1642 = vpop.f32.mrf.mxu0
        %v1643 = vpop.f32.mrf.mxu0
        %1644 = vdwg.mxu0
        %v1645 = vmul.f32 %v1640, %v1595
        %v1646 = vpack.c.bf16 %v1645, %v1645
        %s1647 = scalar_lea.vmem %s7, 8
        %v1648 = vld [vmem:[%s1647] sm:$0xf]
        %v1650 = vsel %vm1094, %v1646, 0
        %v1653 = vsel %vm1098, %v1648, 0
        %1655 = vmatprep.subr.bf16.mxu0 0
        %1656 = vmatpush1.bf16.msra.mxu0 0
        %1657 = vmatprep.subr.bf16.mxu0 0
        %1658 = vmatpush1.bf16.msra.mxu0 0
        %1659 = vmatprep.subr.bf16.mxu0 0
        %1660 = vmatpush1.bf16.msra.mxu0 0
        %1661 = vmatprep.subr.bf16.mxu0 0
        %1662 = vmatpush1.bf16.msra.mxu0 0
        %1663 = vmatprep.subr.bf16.mxu0 0
        %1664 = vmatpush1.bf16.msra.mxu0 0
        %1665 = vmatprep.subr.bf16.mxu0 0
        %1666 = vmatpush1.bf16.msra.mxu0 0
        %1667 = vmatprep.subr.bf16.mxu0 0
        %1668 = vmatpush1.bf16.msra.mxu0 0
        %1669 = vmatprep.subr.bf16.mxu0 0
        %1670 = vmatpush1.bf16.msra.mxu0 %v1653
        %1671 = vmatprep.subr.bf16.mxu0 0
        %1672 = vmatpush2.bf16.msra.mxu0 0
        %1673 = vmatprep.subr.bf16.mxu0 0
        %1674 = vmatpush2.bf16.msra.mxu0 0
        %1675 = vmatprep.subr.bf16.mxu0 0
        %1676 = vmatpush2.bf16.msra.mxu0 0
        %1677 = vmatprep.subr.bf16.mxu0 0
        %1678 = vmatpush2.bf16.msra.mxu0 0
        %1679 = vmatprep.subr.bf16.mxu0 0
        %1680 = vmatpush2.bf16.msra.mxu0 0
        %1681 = vmatprep.subr.bf16.mxu0 0
        %1682 = vmatpush2.bf16.msra.mxu0 0
        %1683 = vmatprep.subr.bf16.mxu0 0
        %1684 = vmatpush2.bf16.msra.mxu0 0
        %1685 = vmatprep.subr.bf16.mxu0 0
        %1686 = vmatpush2.bf16.msra.mxu0 0
        %1687 = vmatprep.mubr.bf16.mxu0 0
        %1688 = vmatmul.mubr.bf16.gmra.mxu0 %v1650
        %v1689 = vpop.f32.mrf.mxu0
        %v1690 = vadd.f32 0.0, %v1689
        %v1691 = vpop.f32.mrf.mxu0
        %v1692 = vpop.f32.mrf.mxu0
        %v1693 = vpop.f32.mrf.mxu0
        %1694 = vdwg.mxu0
        %v1695 = vadd.f32 %v1467, %v1690
        %s1696 = scalar_lea.vmem %s1, 48
        %v1697 = vld [vmem:[%s1696] sm:$0xf]
        %v1698 = vld [vmem:[%s1696 + $0x4] sm:$0xf]
        %v1699 = vld [vmem:[%s1696 + $0x8] sm:$0xf]
        %v1700 = vld [vmem:[%s1696 + $0xc] sm:$0xf]
        %s1701 = scalar_lea.vmem %s4, 3
        %v1702 = vld [vmem:[%s1701] sm:$0x1]
        %v1704 = vlaneseq
        %v1705 = vshrl.u32 %v1704, 7
        %v1706 = vsub.s32 0, %v1705
        %v1707 = vrot.slane %v1702, %v1706
        %v1713 = vunpack.c.l.b16 %v1697
        %v1714 = vunpack.c.l.b16 %v1698
        %v1715 = vunpack.c.l.b16 %v1699
        %v1716 = vunpack.c.l.b16 %v1700
        %v1717 = vpack.c.b16 %v1714, %v1713
        %v1718 = vpack.c.b16 %v1716, %v1715
        %1721 = vmatprep.subr.bf16.mxu0 0
        %1722 = vmatpush1.bf16.msra.mxu0 0
        %1723 = vmatprep.subr.bf16.mxu0 0
        %1724 = vmatpush1.bf16.msra.mxu0 0
        %1725 = vmatprep.subr.bf16.mxu0 0
        %1726 = vmatpush1.bf16.msra.mxu0 0
        %1727 = vmatprep.subr.bf16.mxu0 0
        %1728 = vmatpush1.bf16.msra.mxu0 0
        %1729 = vmatprep.subr.bf16.mxu0 0
        %1730 = vmatpush1.bf16.msra.mxu0 0
        %1731 = vmatprep.subr.bf16.mxu0 0
        %1732 = vmatpush1.bf16.msra.mxu0 0
        %1733 = vmatprep.subr.bf16.mxu0 0
        %1734 = vmatpush1.bf16.msra.mxu0 %v1718
        %1735 = vmatprep.subr.bf16.mxu0 0
        %1736 = vmatpush1.bf16.msra.mxu0 %v1717
        %1737 = vmatprep.subr.bf16.mxu0 0
        %1738 = vmatpush2.bf16.msra.mxu0 0
        %1739 = vmatprep.subr.bf16.mxu0 0
        %1740 = vmatpush2.bf16.msra.mxu0 0
        %1741 = vmatprep.subr.bf16.mxu0 0
        %1742 = vmatpush2.bf16.msra.mxu0 0
        %1743 = vmatprep.subr.bf16.mxu0 0
        %1744 = vmatpush2.bf16.msra.mxu0 0
        %1745 = vmatprep.subr.bf16.mxu0 0
        %1746 = vmatpush2.bf16.msra.mxu0 0
        %1747 = vmatprep.subr.bf16.mxu0 0
        %1748 = vmatpush2.bf16.msra.mxu0 0
        %1749 = vmatprep.subr.bf16.mxu0 0
        %1750 = vmatpush2.bf16.msra.mxu0 0
        %1751 = vmatprep.subr.bf16.mxu0 0
        %1752 = vmatpush2.bf16.msra.mxu0 0
        %1753 = vmatprep.mubr.bf16.mxu0 0
        %1754 = vmatmul.mubr.bf16.gmra.mxu0 %v1050
        %v1755 = vpop.f32.mrf.mxu0
        %v1756 = vadd.f32 %v1707, %v1755
        %v1757 = vpop.f32.mrf.mxu0
        %v1758 = vpop.f32.mrf.mxu0
        %v1759 = vpop.f32.mrf.mxu0
        %1760 = vdwg.mxu0
        %v1761 = vpack.c.bf16 %v1756, %v1756
        %s1762 = scalar_lea.vmem [#allocation2], 12
        %v1763 = vld [vmem:[%s1762] sm:$0xf]
        %v1765 = vsel %vm1094, %v1761, 0
        %v1768 = vsel %vm1098, %v1763, 0
        %1770 = vmatprep.subr.bf16.mxu0 0
        %1771 = vmatpush1.bf16.msra.mxu0 0
        %1772 = vmatprep.subr.bf16.mxu0 0
        %1773 = vmatpush1.bf16.msra.mxu0 0
        %1774 = vmatprep.subr.bf16.mxu0 0
        %1775 = vmatpush1.bf16.msra.mxu0 0
        %1776 = vmatprep.subr.bf16.mxu0 0
        %1777 = vmatpush1.bf16.msra.mxu0 0
        %1778 = vmatprep.subr.bf16.mxu0 0
        %1779 = vmatpush1.bf16.msra.mxu0 0
        %1780 = vmatprep.subr.bf16.mxu0 0
        %1781 = vmatpush1.bf16.msra.mxu0 0
        %1782 = vmatprep.subr.bf16.mxu0 0
        %1783 = vmatpush1.bf16.msra.mxu0 0
        %1784 = vmatprep.subr.bf16.mxu0 0
        %1785 = vmatpush1.bf16.msra.mxu0 %v1768
        %1786 = vmatprep.subr.bf16.mxu0 0
        %1787 = vmatpush2.bf16.msra.mxu0 0
        %1788 = vmatprep.subr.bf16.mxu0 0
        %1789 = vmatpush2.bf16.msra.mxu0 0
        %1790 = vmatprep.subr.bf16.mxu0 0
        %1791 = vmatpush2.bf16.msra.mxu0 0
        %1792 = vmatprep.subr.bf16.mxu0 0
        %1793 = vmatpush2.bf16.msra.mxu0 0
        %1794 = vmatprep.subr.bf16.mxu0 0
        %1795 = vmatpush2.bf16.msra.mxu0 0
        %1796 = vmatprep.subr.bf16.mxu0 0
        %1797 = vmatpush2.bf16.msra.mxu0 0
        %1798 = vmatprep.subr.bf16.mxu0 0
        %1799 = vmatpush2.bf16.msra.mxu0 0
        %1800 = vmatprep.subr.bf16.mxu0 0
        %1801 = vmatpush2.bf16.msra.mxu0 0
        %1802 = vmatprep.mubr.bf16.mxu0 0
        %1803 = vmatmul.mubr.bf16.gmra.mxu0 %v1765
        %v1804 = vpop.f32.mrf.mxu0
        %v1805 = vadd.f32 0.0, %v1804
        %v1806 = vpop.f32.mrf.mxu0
        %v1807 = vpop.f32.mrf.mxu0
        %v1808 = vpop.f32.mrf.mxu0
        %1809 = vdwg.mxu0
        %v1810 = vsel %vm1094, %v1805, -inf
        %1811 = vmax.xlane.f32.xlu0 %v1810
        %v1812 = vpop.xlane.xlu0 %1811
        %v1813 = vsub.f32 %v1805, %v1812
        %v1814 = vmul.f32 %v1813, 1.442695
        %v1815 = vpow.pop %v1814
        %v1816 = vsel %vm1094, %v1815, 0.0
        %1817 = vadd.xlane.f32.xlu0 %v1816
        %v1818 = vpop.xlane.xlu0 %1817
        %v1819 = vrcp.pop %v1818
        %v1820 = vpack.c.bf16 %v1815, %v1815
        %s1821 = scalar_lea.vmem [#allocation3], 12
        %v1822 = vld [vmem:[%s1821] sm:$0xf]
        %v1824 = vsel %vm1094, %v1820, 0
        %v1827 = vsel %vm1098, %v1822, 0
        %1829 = vmatprep.subr.bf16.mxu0 0
        %1830 = vmatpush1.bf16.msra.mxu0 0
        %1831 = vmatprep.subr.bf16.mxu0 0
        %1832 = vmatpush1.bf16.msra.mxu0 0
        %1833 = vmatprep.subr.bf16.mxu0 0
        %1834 = vmatpush1.bf16.msra.mxu0 0
        %1835 = vmatprep.subr.bf16.mxu0 0
        %1836 = vmatpush1.bf16.msra.mxu0 0
        %1837 = vmatprep.subr.bf16.mxu0 0
        %1838 = vmatpush1.bf16.msra.mxu0 0
        %1839 = vmatprep.subr.bf16.mxu0 0
        %1840 = vmatpush1.bf16.msra.mxu0 0
        %1841 = vmatprep.subr.bf16.mxu0 0
        %1842 = vmatpush1.bf16.msra.mxu0 0
        %1843 = vmatprep.subr.bf16.mxu0 0
        %1844 = vmatpush1.bf16.msra.mxu0 %v1827
        %1845 = vmatprep.subr.bf16.mxu0 0
        %1846 = vmatpush2.bf16.msra.mxu0 0
        %1847 = vmatprep.subr.bf16.mxu0 0
        %1848 = vmatpush2.bf16.msra.mxu0 0
        %1849 = vmatprep.subr.bf16.mxu0 0
        %1850 = vmatpush2.bf16.msra.mxu0 0
        %1851 = vmatprep.subr.bf16.mxu0 0
        %1852 = vmatpush2.bf16.msra.mxu0 0
        %1853 = vmatprep.subr.bf16.mxu0 0
        %1854 = vmatpush2.bf16.msra.mxu0 0
        %1855 = vmatprep.subr.bf16.mxu0 0
        %1856 = vmatpush2.bf16.msra.mxu0 0
        %1857 = vmatprep.subr.bf16.mxu0 0
        %1858 = vmatpush2.bf16.msra.mxu0 0
        %1859 = vmatprep.subr.bf16.mxu0 0
        %1860 = vmatpush2.bf16.msra.mxu0 0
        %1861 = vmatprep.mubr.bf16.mxu0 0
        %1862 = vmatmul.mubr.bf16.gmra.mxu0 %v1824
        %v1863 = vpop.f32.mrf.mxu0
        %v1864 = vadd.f32 0.0, %v1863
        %v1865 = vpop.f32.mrf.mxu0
        %v1866 = vpop.f32.mrf.mxu0
        %v1867 = vpop.f32.mrf.mxu0
        %1868 = vdwg.mxu0
        %v1869 = vmul.f32 %v1864, %v1819
        %v1870 = vpack.c.bf16 %v1869, %v1869
        %s1871 = scalar_lea.vmem %s7, 12
        %v1872 = vld [vmem:[%s1871] sm:$0xf]
        %v1874 = vsel %vm1094, %v1870, 0
        %v1877 = vsel %vm1098, %v1872, 0
        %1879 = vmatprep.subr.bf16.mxu0 0
        %1880 = vmatpush1.bf16.msra.mxu0 0
        %1881 = vmatprep.subr.bf16.mxu0 0
        %1882 = vmatpush1.bf16.msra.mxu0 0
        %1883 = vmatprep.subr.bf16.mxu0 0
        %1884 = vmatpush1.bf16.msra.mxu0 0
        %1885 = vmatprep.subr.bf16.mxu0 0
        %1886 = vmatpush1.bf16.msra.mxu0 0
        %1887 = vmatprep.subr.bf16.mxu0 0
        %1888 = vmatpush1.bf16.msra.mxu0 0
        %1889 = vmatprep.subr.bf16.mxu0 0
        %1890 = vmatpush1.bf16.msra.mxu0 0
        %1891 = vmatprep.subr.bf16.mxu0 0
        %1892 = vmatpush1.bf16.msra.mxu0 0
        %1893 = vmatprep.subr.bf16.mxu0 0
        %1894 = vmatpush1.bf16.msra.mxu0 %v1877
        %1895 = vmatprep.subr.bf16.mxu0 0
        %1896 = vmatpush2.bf16.msra.mxu0 0
        %1897 = vmatprep.subr.bf16.mxu0 0
        %1898 = vmatpush2.bf16.msra.mxu0 0
        %1899 = vmatprep.subr.bf16.mxu0 0
        %1900 = vmatpush2.bf16.msra.mxu0 0
        %1901 = vmatprep.subr.bf16.mxu0 0
        %1902 = vmatpush2.bf16.msra.mxu0 0
        %1903 = vmatprep.subr.bf16.mxu0 0
        %1904 = vmatpush2.bf16.msra.mxu0 0
        %1905 = vmatprep.subr.bf16.mxu0 0
        %1906 = vmatpush2.bf16.msra.mxu0 0
        %1907 = vmatprep.subr.bf16.mxu0 0
        %1908 = vmatpush2.bf16.msra.mxu0 0
        %1909 = vmatprep.subr.bf16.mxu0 0
        %1910 = vmatpush2.bf16.msra.mxu0 0
        %1911 = vmatprep.mubr.bf16.mxu0 0
        %1912 = vmatmul.mubr.bf16.gmra.mxu0 %v1874
        %v1913 = vpop.f32.mrf.mxu0
        %v1914 = vadd.f32 0.0, %v1913
        %v1915 = vpop.f32.mrf.mxu0
        %v1916 = vpop.f32.mrf.mxu0
        %v1917 = vpop.f32.mrf.mxu0
        %1918 = vdwg.mxu0
        %v1919 = vadd.f32 %v1695, %v1914
        %v1920 = vld [vmem:[%s8] sm:$0x1]
        %v1922 = vlaneseq
        %v1923 = vshrl.u32 %v1922, 7
        %v1924 = vsub.s32 0, %v1923
        %v1925 = vrot.slane %v1920, %v1924
        %v1927 = vadd.f32 %v1919, %v1925
        %1928 = vst [vmem:[%s337] sm:$0xff] %v1927
        %s1929 = sand.u32 %s239, 1
        %s1930 = scalar_lea.sflag [#allocation5], %s1929
        %s1931 = sand.u32 %s239, 1
        %s1932 = smul.addr %s1931, 8
        %s1933 = scalar_lea.vmem [#allocation4], %s1932
        // Predicated region
        $region61: #{tpu_custom_call.1} parent=55 // pred_check
          %p1934 = pneg %p249
        $region62: #{tpu_custom_call.1} parent=55 // pred_check_branch
          %1936 = sbr.rel (%p1934) target = $region64
        $region63: #{tpu_custom_call.1} parent=55 // pred_region
          %s1938 = ssub.s32 128, 128
          %1939 = vsyncadd %s1930, %s1938
          %s1940 = sadd.s32 %s28, %s27
          %s1941 = smul.addr %s1940, 128
          %s1942 = scalar_lea.hbm %s9, %s1941
          %s1944 = sshll.u32 %s1933, 4
          %s1945 = int_to_ptr.vmem [resolvable:$true] %s1944
          %1947 = dma.vmem_to_hbm [thread:$0]  %s1945, 128, %s1942, %s1930
        $region64: #{tpu_custom_call.1} parent=55 // pred_fallthru
          _
      $region56: #{tpu_custom_call.1} parent=5 // pred_fallthru
        _
      %p1948 = scmp.le.s32.totalorder 2, %s18
      // Predicated region
      $region65: #{tpu_custom_call.1} parent=5 // pred_check
        %p1949 = pneg %p1948
      $region66: #{tpu_custom_call.1} parent=5 // pred_check_branch
        %1951 = sbr.rel (%p1949) target = $region68
      $region67: #{tpu_custom_call.1} parent=5 // pred_region
        %s1952 = ssub.s32 %s18, 2
        // Predicated region
        $region69: #{tpu_custom_call.1} parent=67 // pred_check
          %p1953 = pneg %p255
        $region70: #{tpu_custom_call.1} parent=67 // pred_check_branch
          %1955 = sbr.rel (%p1953) target = $region72
        $region71: #{tpu_custom_call.1} parent=67 // pred_region
          %s1956 = sand.u32 %s240, 1
          %s1957 = scalar_lea.sflag [#allocation5], %s1956
          %s1958 = sand.u32 %s240, 1
          %s1959 = smul.addr %s1958, 8
          %s1960 = scalar_lea.vmem [#allocation4], %s1959
          %1961 = dma.done %s1957, 128
        $region72: #{tpu_custom_call.1} parent=67 // pred_fallthru
          _
      $region68: #{tpu_custom_call.1} parent=5 // pred_fallthru
        _
    $region6: #{tpu_custom_call.1} parent=1 // loop_footer
      %s22 = sadd.s32 1, %s18
    $region7: #{tpu_custom_call.1} parent=1 // loop_footer_branch
      %17 = sbr.rel target = $region3
    $region8: #{tpu_custom_call.1} parent=1 // loop_exit
      _
    %1962 = vsyncpa [#allocation5], 1
    %s1963 = scalar_lea.sflag [#allocation5], 1
    %1964 = vsyncpa %s1963, 1

</llo_original>
